<compile_context>
chip_gen: v6e
topology: v6e:2x2x1
jax: 0.10.0
libtpu: 0.0.40
codegen_flags: <defaults>
</compile_context>

<pallas_src>
import functools

import jax
import jax.numpy as jnp
from jax.experimental import pallas as pl
from jax.experimental.pallas import tpu as pltpu


# --------------------------------------------------------------------------
# helpers
# --------------------------------------------------------------------------
def _act(x, act):
    if act == "leaky":
        return jnp.where(x > 0, x, 0.2 * x)
    if act == "relu":
        return jnp.maximum(x, 0.0)
    if act == "tanh":
        return jnp.tanh(x)
    return x


def _row_tile(m, cap=512):
    """Largest tile in {512..8} dividing m, else the full extent (always legal)."""
    for t in (512, 256, 128, 64, 32, 16, 8):
        if t <= cap and m % t == 0:
            return t
    return m


def _default_vmem_limit():
    # Chip-aware scoped-VMEM budget (64 MiB physical on v7x, 128 MiB elsewhere).
    try:
        cap = pltpu.get_tpu_info().vmem_capacity_bytes
    except Exception:
        cap = 64 * 1024 * 1024
    return int(min(cap // 2, 64 * 1024 * 1024))


_VMEM_LIMIT = _default_vmem_limit()


# --------------------------------------------------------------------------
# Pallas kernels
# --------------------------------------------------------------------------
def _conv_row_kernel(x_ref, w_ref, b_ref, y_ref, *stats_refs,
                     kh, kw, wo, act, collect_stats):
    """Implicit-GEMM conv for one output row of one batch element.

    x_ref:  (Hp, Wp, Cin)  padded input image (resident across the row grid), bf16
    w_ref:  (kh*kw, Cin, Cout) per-tap weights, bf16
    b_ref:  (1, Cout) f32
    y_ref:  (Wo, Cout) output row
    stats_refs[0] (optional): (2, Cout) f32 running [sum; sumsq] over the whole
        output (pre-activation), accumulated across the sequential grid.
    """
    r = pl.program_id(1)
    cout = y_ref.shape[-1]

    acc = jnp.zeros((wo, cout), jnp.float32)
    for di in range(kh):
        row = x_ref[r + di]                                   # (Wp, Cin) bf16
        for dj in range(kw):
            part = jnp.dot(row, w_ref[di * kw + dj],
                           preferred_element_type=jnp.float32)  # (Wp, Cout) f32
            acc = acc + part[dj:dj + wo, :]                     # shift-and-add tap

    y = acc + b_ref[...]                                        # pre-activation

    if collect_stats:
        stats_ref = stats_refs[0]

        @pl.when((pl.program_id(0) == 0) & (r == 0))
        def _():
            stats_ref[...] = jnp.zeros_like(stats_ref)

        stats_ref[0:1, :] = stats_ref[0:1, :] + jnp.sum(y, axis=0, keepdims=True)
        stats_ref[1:2, :] = stats_ref[1:2, :] + jnp.sum(y * y, axis=0,
                                                        keepdims=True)

    y_ref[...] = _act(y, act).astype(y_ref.dtype)


def _bn_act_kernel(x_ref, stats_ref, g_ref, b_ref, o_ref, *, act, eps, inv_m):
    mean = stats_ref[0:1, :] * inv_m
    var = jnp.maximum(stats_ref[1:2, :] * inv_m - mean * mean, 0.0)
    scale = g_ref[...] * jax.lax.rsqrt(var + eps)
    shift = b_ref[...] - mean * scale
    y = x_ref[...].astype(jnp.float32) * scale + shift
    o_ref[...] = _act(y, act).astype(o_ref.dtype)


# --------------------------------------------------------------------------
# pallas_call wrappers
# --------------------------------------------------------------------------
def _conv_rows_call(xp, wt, b, *, kh, kw, act, collect_stats, out_dtype):
    """xp: (N, Hp, Wp, Cin) padded NHWC; wt: (kh*kw, Cin, Cout); b: (Cout,)."""
    n, hp, wp, cin = xp.shape
    nt, _, cout = wt.shape
    assert nt == kh * kw
    ho = hp - kh + 1
    wo = wp - kw + 1

    # Keep the lane dim at least sublane-friendly (e.g. final Cout=1).
    cout_p = ((cout + 7) // 8) * 8
    if cout_p != cout:
        wt = jnp.pad(wt, ((0, 0), (0, 0), (0, cout_p - cout)))
        b = jnp.pad(b, (0, cout_p - cout))

    xp = xp.astype(jnp.bfloat16)
    wt = wt.astype(jnp.bfloat16)
    b2 = b.reshape(1, cout_p).astype(jnp.float32)

    out_shape = [jax.ShapeDtypeStruct((n, ho, wo, cout_p), out_dtype)]
    out_specs = [pl.BlockSpec((None, None, wo, cout_p),
                              lambda i, r: (i, r, 0, 0))]
    if collect_stats:
        out_shape.append(jax.ShapeDtypeStruct((2, cout_p), jnp.float32))
        out_specs.append(pl.BlockSpec((2, cout_p), lambda i, r: (0, 0)))
        dims = ("arbitrary", "arbitrary")       # stats accumulator => sequential
    else:
        dims = ("parallel", "arbitrary")

    kernel = functools.partial(_conv_row_kernel, kh=kh, kw=kw, wo=wo, act=act,
                               collect_stats=collect_stats)
    flops = 2 * n * ho * wp * cin * cout_p * kh * kw
    bytes_accessed = int(xp.size * 2 + wt.size * 2
                         + n * ho * wo * cout_p * jnp.dtype(out_dtype).itemsize)

    outs = pl.pallas_call(
        kernel,
        out_shape=tuple(out_shape),
        grid=(n, ho),
        in_specs=[
            # whole padded image of batch element i stays resident across r
            pl.BlockSpec((None, hp, wp, cin), lambda i, r: (i, 0, 0, 0)),
            pl.BlockSpec((nt, cin, cout_p), lambda i, r: (0, 0, 0)),
            pl.BlockSpec((1, cout_p), lambda i, r: (0, 0)),
        ],
        out_specs=tuple(out_specs),
        compiler_params=pltpu.CompilerParams(
            dimension_semantics=dims, vmem_limit_bytes=_VMEM_LIMIT),
        cost_estimate=pl.CostEstimate(flops=flops, transcendentals=0,
                                      bytes_accessed=bytes_accessed),
    )(xp, wt, b2)

    y = outs[0][..., :cout] if cout_p != cout else outs[0]
    if collect_stats:
        stats = outs[1][:, :cout] if cout_p != cout else outs[1]
        return y, stats
    return y


def conv4x4_s2(x, w, b, *, act="none", collect_stats=False,
               out_dtype=jnp.bfloat16):
    """Conv2d(k=4, s=2, p=1) via space-to-depth -> 2x2 stride-1 implicit GEMM."""
    n, h, wdim, cin = x.shape
    assert h % 2 == 0 and wdim % 2 == 0
    xp = jnp.pad(x, ((0, 0), (1, 1), (1, 1), (0, 0)))
    hs, ws = (h + 2) // 2, (wdim + 2) // 2
    xs = (xp.reshape(n, hs, 2, ws, 2, cin)
            .transpose(0, 1, 3, 2, 4, 5)
            .reshape(n, hs, ws, 4 * cin))
    cout = w.shape[-1]
    wt = (w.reshape(2, 2, 2, 2, cin, cout)      # (p, a, q, b, c, o): di=2p+a, dj=2q+b
            .transpose(0, 2, 1, 3, 4, 5)        # (p, q, a, b, c, o)
            .reshape(4, 4 * cin, cout))
    return _conv_rows_call(xs, wt, b, kh=2, kw=2, act=act,
                           collect_stats=collect_stats, out_dtype=out_dtype)


def conv3x3_s1(x, w, b, *, act="none", collect_stats=False,
               out_dtype=jnp.bfloat16):
    """Conv2d(k=3, s=1, p=1) as implicit GEMM on the padded NHWC input."""
    xp = jnp.pad(x, ((0, 0), (1, 1), (1, 1), (0, 0)))
    cin, cout = w.shape[2], w.shape[3]
    wt = w.reshape(9, cin, cout)
    return _conv_rows_call(xp, wt, b, kh=3, kw=3, act=act,
                           collect_stats=collect_stats, out_dtype=out_dtype)


def batchnorm_act(y, stats, gamma, beta, act, eps=1e-5, out_dtype=jnp.bfloat16):
    """Normalize with batch stats (from the fused conv kernel) + activation."""
    n, h, w, c = y.shape
    m = n * h * w
    x2 = y.reshape(m, c)
    tm = _row_tile(m)
    out = pl.pallas_call(
        functools.partial(_bn_act_kernel, act=act, eps=eps, inv_m=1.0 / m),
        out_shape=jax.ShapeDtypeStruct((m, c), out_dtype),
        grid=(m // tm,),
        in_specs=[
            pl.BlockSpec((tm, c), lambda i: (i, 0)),
            pl.BlockSpec((2, c), lambda i: (0, 0)),
            pl.BlockSpec((1, c), lambda i: (0, 0)),
            pl.BlockSpec((1, c), lambda i: (0, 0)),
        ],
        out_specs=pl.BlockSpec((tm, c), lambda i: (i, 0)),
        compiler_params=pltpu.CompilerParams(
            dimension_semantics=("parallel",), vmem_limit_bytes=_VMEM_LIMIT),
    )(x2, stats,
      gamma.reshape(1, c).astype(jnp.float32),
      beta.reshape(1, c).astype(jnp.float32))
    return out.reshape(n, h, w, c)


def upsample2x(x):
    # TODO(synk): fuse into the decoder conv kernel's row fetch.
    return jnp.repeat(jnp.repeat(x, 2, axis=1), 2, axis=2)


# --------------------------------------------------------------------------
# parameters + model
# --------------------------------------------------------------------------
def init_params(in_channel, ngf, key):
    def conv_p(k, kh, kw, cin, cout):
        kw_, kb_ = jax.random.split(k)
        w = jax.random.normal(kw_, (kh, kw, cin, cout), jnp.float32) * 0.05
        b = jax.random.normal(kb_, (cout,), jnp.float32) * 0.01
        return w, b

    def norm_p(c):
        return jnp.ones((c,), jnp.float32), jnp.zeros((c,), jnp.float32)

    keys = jax.random.split(key, 6)
    p = {}
    p["e1"] = conv_p(keys[0], 4, 4, in_channel, ngf)
    p["e2"] = conv_p(keys[1], 4, 4, ngf, ngf * 2)
    p["n2"] = norm_p(ngf * 2)
    p["e3"] = conv_p(keys[2], 4, 4, ngf * 2, ngf * 4)
    p["n3"] = norm_p(ngf * 4)
    p["d3"] = conv_p(keys[3], 3, 3, ngf * 4, ngf * 2)
    p["nd3"] = norm_p(ngf * 2)
    p["d2"] = conv_p(keys[4], 3, 3, ngf * 4, ngf)
    p["nd2"] = norm_p(ngf)
    p["d1"] = conv_p(keys[5], 3, 3, ngf * 2, 1)   # out_channel = 1 (depth)
    return p


def sunet_forward(x_nhwc, p):
    # encoder
    e1 = conv4x4_s2(x_nhwc, *p["e1"], act="leaky")                  # H/2, ngf
    e2, s2 = conv4x4_s2(e1, *p["e2"], collect_stats=True)           # H/4, 2ngf
    e2 = batchnorm_act(e2, s2, *p["n2"], act="leaky")
    e3, s3 = conv4x4_s2(e2, *p["e3"], collect_stats=True)           # H/8, 4ngf
    e3 = batchnorm_act(e3, s3, *p["n3"], act="leaky")
    # decoder (upconv=False -> nearest upsample + conv)
    d3, sd3 = conv3x3_s1(upsample2x(e3), *p["d3"], collect_stats=True)   # H/4
    d3 = batchnorm_act(d3, sd3, *p["nd3"], act="relu")
    d3 = jnp.concatenate([d3, e2], axis=-1)                          # 4ngf
    d2, sd2 = conv3x3_s1(upsample2x(d3), *p["d2"], collect_stats=True)   # H/2
    d2 = batchnorm_act(d2, sd2, *p["nd2"], act="relu")
    d2 = jnp.concatenate([d2, e1], axis=-1)                          # 2ngf
    d1 = conv3x3_s1(upsample2x(d2), *p["d1"], act="tanh",
                    out_dtype=jnp.float32)                           # H, 1
    return d1


def depth_model_forward(color_img, depth_img, uv_img, params):
    """Inputs NCHW (PyTorch convention); output NCHW (N, 1, H, W)."""
    x = jnp.concatenate([color_img, depth_img, uv_img], axis=1)   # cat on dim=1
    x = jnp.transpose(x, (0, 2, 3, 1)).astype(jnp.bfloat16)       # -> NHWC bf16
    y = sunet_forward(x, params)                                  # (N, H, W, 1)
    return jnp.transpose(y, (0, 3, 1, 2))                         # -> NCHW


# --------------------------------------------------------------------------
if __name__ == "__main__":
    key = jax.random.PRNGKey(0)
    k_col, k_dep, k_uv, k_par = jax.random.split(key, 4)

    N, H, W = 2, 16, 16
    color_img = jax.random.normal(k_col, (N, 3, H, W), jnp.float32)
    depth_img = jax.random.normal(k_dep, (N, 1, H, W), jnp.float32)
    uv_img = jax.random.normal(k_uv, (N, 2, H, W), jnp.float32)

    in_channel = 3 + 1 + 2   # concatenated channels
    ngf = 8
    params = init_params(in_channel, ngf, k_par)

    fwd = jax.jit(depth_model_forward)
    out = jax.block_until_ready(fwd(color_img, depth_img, uv_img, params))

    assert out.shape == (N, 1, H, W), out.shape
    assert bool(jnp.all(jnp.isfinite(out)))
    print("KERNEL_OK")
</pallas_src>

<mosaic_0001>
module attributes {stable_mosaic.version = 11 : i64} {
  func.func @_conv_row_kernel(%arg0: i32, %arg1: i32, %arg2: memref<1x9x9x24xbf16, #tpu.memory_space<vmem>>, %arg3: memref<4x24x8xbf16, #tpu.memory_space<vmem>>, %arg4: memref<1x8xf32, #tpu.memory_space<vmem>>, %arg5: memref<1x1x8x8xbf16, #tpu.memory_space<vmem>>) attributes {dimension_semantics = [#tpu.dimension_semantics<parallel>, #tpu.dimension_semantics<arbitrary>], iteration_bounds = array<i64: 2, 8>, scalar_prefetch = 0 : i64, scratch_operands = 0 : i64, tpu.core_type = #tpu.core_type<tc>, window_params = [{transform_indices = @transform_0, window_bounds = array<i64: 1, 9, 9, 24>}, {pipeline_mode = #tpu.pipeline_mode<synchronous>, transform_indices = @transform_1, window_bounds = array<i64: 4, 24, 8>}, {pipeline_mode = #tpu.pipeline_mode<synchronous>, transform_indices = @transform_2, window_bounds = array<i64: 1, 8>}, {transform_indices = @transform_3, window_bounds = array<i64: 1, 1, 8, 8>}]} {
    %cst = arith.constant 0.000000e+00 : f32
    %0 = vector.broadcast %cst : f32 to vector<8x8xf32>
    %c0_i32 = arith.constant 0 : i32
    %1 = arith.addi %arg1, %c0_i32 : i32
    %c0 = arith.constant 0 : index
    %2 = arith.index_cast %1 : i32 to index
    %c0_0 = arith.constant 0 : index
    %c0_1 = arith.constant 0 : index
    %3 = vector.load %arg2[%c0, %2, %c0_0, %c0_1] : memref<1x9x9x24xbf16, #tpu.memory_space<vmem>>, vector<1x1x9x24xbf16>
    %4 = vector.shape_cast %3 : vector<1x1x9x24xbf16> to vector<9x24xbf16>
    %c0_2 = arith.constant 0 : index
    %c0_3 = arith.constant 0 : index
    %c0_4 = arith.constant 0 : index
    %5 = vector.load %arg3[%c0_2, %c0_3, %c0_4] : memref<4x24x8xbf16, #tpu.memory_space<vmem>>, vector<1x24x8xbf16>
    %6 = vector.shape_cast %5 : vector<1x24x8xbf16> to vector<24x8xbf16>
    %cst_5 = arith.constant dense<0.000000e+00> : vector<9x8xf32>
    %7 = tpu.matmul %4, %6, %cst_5 {dimension_numbers = #tpu.dot_dimension_numbers<[1], [0], [0], [1], [0, 0, 1, 1], [], []>} : vector<9x24xbf16>, vector<24x8xbf16>, vector<9x8xf32> -> vector<9x8xf32>
    %8 = vector.extract_strided_slice %7 {offsets = [0, 0], sizes = [8, 8], strides = [1, 1]} : vector<9x8xf32> to vector<8x8xf32>
    %9 = arith.addf %0, %8 : vector<8x8xf32>
    %c1 = arith.constant 1 : index
    %c0_6 = arith.constant 0 : index
    %c0_7 = arith.constant 0 : index
    %10 = vector.load %arg3[%c1, %c0_6, %c0_7] : memref<4x24x8xbf16, #tpu.memory_space<vmem>>, vector<1x24x8xbf16>
    %11 = vector.shape_cast %10 : vector<1x24x8xbf16> to vector<24x8xbf16>
    %cst_8 = arith.constant dense<0.000000e+00> : vector<9x8xf32>
    %12 = tpu.matmul %4, %11, %cst_8 {dimension_numbers = #tpu.dot_dimension_numbers<[1], [0], [0], [1], [0, 0, 1, 1], [], []>} : vector<9x24xbf16>, vector<24x8xbf16>, vector<9x8xf32> -> vector<9x8xf32>
    %13 = vector.extract_strided_slice %12 {offsets = [1, 0], sizes = [8, 8], strides = [1, 1]} : vector<9x8xf32> to vector<8x8xf32>
    %14 = arith.addf %9, %13 : vector<8x8xf32>
    %c1_i32 = arith.constant 1 : i32
    %15 = arith.addi %arg1, %c1_i32 : i32
    %c0_9 = arith.constant 0 : index
    %16 = arith.index_cast %15 : i32 to index
    %c0_10 = arith.constant 0 : index
    %c0_11 = arith.constant 0 : index
    %17 = vector.load %arg2[%c0_9, %16, %c0_10, %c0_11] : memref<1x9x9x24xbf16, #tpu.memory_space<vmem>>, vector<1x1x9x24xbf16>
    %18 = vector.shape_cast %17 : vector<1x1x9x24xbf16> to vector<9x24xbf16>
    %c2 = arith.constant 2 : index
    %c0_12 = arith.constant 0 : index
    %c0_13 = arith.constant 0 : index
    %19 = vector.load %arg3[%c2, %c0_12, %c0_13] : memref<4x24x8xbf16, #tpu.memory_space<vmem>>, vector<1x24x8xbf16>
    %20 = vector.shape_cast %19 : vector<1x24x8xbf16> to vector<24x8xbf16>
    %cst_14 = arith.constant dense<0.000000e+00> : vector<9x8xf32>
    %21 = tpu.matmul %18, %20, %cst_14 {dimension_numbers = #tpu.dot_dimension_numbers<[1], [0], [0], [1], [0, 0, 1, 1], [], []>} : vector<9x24xbf16>, vector<24x8xbf16>, vector<9x8xf32> -> vector<9x8xf32>
    %22 = vector.extract_strided_slice %21 {offsets = [0, 0], sizes = [8, 8], strides = [1, 1]} : vector<9x8xf32> to vector<8x8xf32>
    %23 = arith.addf %14, %22 : vector<8x8xf32>
    %c3 = arith.constant 3 : index
    %c0_15 = arith.constant 0 : index
    %c0_16 = arith.constant 0 : index
    %24 = vector.load %arg3[%c3, %c0_15, %c0_16] : memref<4x24x8xbf16, #tpu.memory_space<vmem>>, vector<1x24x8xbf16>
    %25 = vector.shape_cast %24 : vector<1x24x8xbf16> to vector<24x8xbf16>
    %cst_17 = arith.constant dense<0.000000e+00> : vector<9x8xf32>
    %26 = tpu.matmul %18, %25, %cst_17 {dimension_numbers = #tpu.dot_dimension_numbers<[1], [0], [0], [1], [0, 0, 1, 1], [], []>} : vector<9x24xbf16>, vector<24x8xbf16>, vector<9x8xf32> -> vector<9x8xf32>
    %27 = vector.extract_strided_slice %26 {offsets = [1, 0], sizes = [8, 8], strides = [1, 1]} : vector<9x8xf32> to vector<8x8xf32>
    %28 = arith.addf %23, %27 : vector<8x8xf32>
    %c0_18 = arith.constant 0 : index
    %c0_19 = arith.constant 0 : index
    %29 = vector.load %arg4[%c0_18, %c0_19] : memref<1x8xf32, #tpu.memory_space<vmem>>, vector<1x8xf32>
    %30 = vector.broadcast %29 : vector<1x8xf32> to vector<8x8xf32>
    %31 = arith.addf %28, %30 : vector<8x8xf32>
    %cst_20 = arith.constant 0.000000e+00 : f32
    %32 = vector.broadcast %cst_20 : f32 to vector<8x8xf32>
    %33 = arith.cmpf ogt, %31, %32 : vector<8x8xf32>
    %cst_21 = arith.constant 2.000000e-01 : f32
    %34 = vector.broadcast %cst_21 : f32 to vector<8x8xf32>
    %35 = arith.mulf %34, %31 : vector<8x8xf32>
    %36 = arith.select %33, %31, %35 : vector<8x8xi1>, vector<8x8xf32>
    %37 = arith.truncf %36 : vector<8x8xf32> to vector<8x8xbf16>
    %c0_22 = arith.constant 0 : index
    %c0_23 = arith.constant 0 : index
    %c0_24 = arith.constant 0 : index
    %c0_25 = arith.constant 0 : index
    %38 = vector.load %arg5[%c0_22, %c0_23, %c0_24, %c0_25] : memref<1x1x8x8xbf16, #tpu.memory_space<vmem>>, vector<1x1x8x8xbf16>
    %39 = vector.shape_cast %38 : vector<1x1x8x8xbf16> to vector<8x8xbf16>
    %40 = vector.shape_cast %37 : vector<8x8xbf16> to vector<1x1x8x8xbf16>
    tpu.vector_store %arg5[%c0_22, %c0_23, %c0_24, %c0_25], %40 {strides = array<i32>} : memref<1x1x8x8xbf16, #tpu.memory_space<vmem>>, vector<1x1x8x8xbf16>,
    return
  }
  func.func @transform_0(%arg0: i32, %arg1: i32) -> (i32, i32, i32, i32) {
    %c0_i32 = arith.constant 0 : i32
    %c0_i32_0 = arith.constant 0 : i32
    %c0_i32_1 = arith.constant 0 : i32
    %c0_i32_2 = arith.constant 0 : i32
    return %arg0, %c0_i32, %c0_i32_0, %c0_i32_1 : i32, i32, i32, i32
  }
  func.func @transform_1(%arg0: i32, %arg1: i32) -> (i32, i32, i32) {
    %c0_i32 = arith.constant 0 : i32
    %c0_i32_0 = arith.constant 0 : i32
    %c0_i32_1 = arith.constant 0 : i32
    %c0_i32_2 = arith.constant 0 : i32
    return %c0_i32, %c0_i32_0, %c0_i32_1 : i32, i32, i32
  }
  func.func @transform_2(%arg0: i32, %arg1: i32) -> (i32, i32) {
    %c0_i32 = arith.constant 0 : i32
    %c0_i32_0 = arith.constant 0 : i32
    %c0_i32_1 = arith.constant 0 : i32
    return %c0_i32, %c0_i32_0 : i32, i32
  }
  func.func @transform_3(%arg0: i32, %arg1: i32) -> (i32, i32, i32, i32) {
    %c0_i32 = arith.constant 0 : i32
    %c0_i32_0 = arith.constant 0 : i32
    %c0_i32_1 = arith.constant 0 : i32
    return %arg0, %arg1, %c0_i32, %c0_i32_0 : i32, i32, i32, i32
  }
}

module attributes {stable_mosaic.version = 11 : i64} {
  func.func @_conv_row_kernel(%arg0: i32, %arg1: i32, %arg2: memref<1x5x5x32xbf16, #tpu.memory_space<vmem>>, %arg3: memref<4x32x16xbf16, #tpu.memory_space<vmem>>, %arg4: memref<1x16xf32, #tpu.memory_space<vmem>>, %arg5: memref<1x1x4x16xbf16, #tpu.memory_space<vmem>>, %arg6: memref<2x16xf32, #tpu.memory_space<vmem>>) attributes {dimension_semantics = [#tpu.dimension_semantics<arbitrary>, #tpu.dimension_semantics<arbitrary>], iteration_bounds = array<i64: 2, 4>, scalar_prefetch = 0 : i64, scratch_operands = 0 : i64, tpu.core_type = #tpu.core_type<tc>, window_params = [{transform_indices = @transform_0, window_bounds = array<i64: 1, 5, 5, 32>}, {pipeline_mode = #tpu.pipeline_mode<synchronous>, transform_indices = @transform_1, window_bounds = array<i64: 4, 32, 16>}, {pipeline_mode = #tpu.pipeline_mode<synchronous>, transform_indices = @transform_2, window_bounds = array<i64: 1, 16>}, {transform_indices = @transform_3, window_bounds = array<i64: 1, 1, 4, 16>}, {pipeline_mode = #tpu.pipeline_mode<synchronous>, transform_indices = @transform_4, window_bounds = array<i64: 2, 16>}]} {
    %cst = arith.constant 0.000000e+00 : f32
    %0 = vector.broadcast %cst : f32 to vector<4x16xf32>
    %c0_i32 = arith.constant 0 : i32
    %1 = arith.addi %arg1, %c0_i32 : i32
    %c0 = arith.constant 0 : index
    %2 = arith.index_cast %1 : i32 to index
    %c0_0 = arith.constant 0 : index
    %c0_1 = arith.constant 0 : index
    %3 = vector.load %arg2[%c0, %2, %c0_0, %c0_1] : memref<1x5x5x32xbf16, #tpu.memory_space<vmem>>, vector<1x1x5x32xbf16>
    %4 = vector.shape_cast %3 : vector<1x1x5x32xbf16> to vector<5x32xbf16>
    %c0_2 = arith.constant 0 : index
    %c0_3 = arith.constant 0 : index
    %c0_4 = arith.constant 0 : index
    %5 = vector.load %arg3[%c0_2, %c0_3, %c0_4] : memref<4x32x16xbf16, #tpu.memory_space<vmem>>, vector<1x32x16xbf16>
    %6 = vector.shape_cast %5 : vector<1x32x16xbf16> to vector<32x16xbf16>
    %cst_5 = arith.constant dense<0.000000e+00> : vector<5x16xf32>
    %7 = tpu.matmul %4, %6, %cst_5 {dimension_numbers = #tpu.dot_dimension_numbers<[1], [0], [0], [1], [0, 0, 1, 1], [], []>} : vector<5x32xbf16>, vector<32x16xbf16>, vector<5x16xf32> -> vector<5x16xf32>
    %8 = vector.extract_strided_slice %7 {offsets = [0, 0], sizes = [4, 16], strides = [1, 1]} : vector<5x16xf32> to vector<4x16xf32>
    %9 = arith.addf %0, %8 : vector<4x16xf32>
    %c1 = arith.constant 1 : index
    %c0_6 = arith.constant 0 : index
    %c0_7 = arith.constant 0 : index
    %10 = vector.load %arg3[%c1, %c0_6, %c0_7] : memref<4x32x16xbf16, #tpu.memory_space<vmem>>, vector<1x32x16xbf16>
    %11 = vector.shape_cast %10 : vector<1x32x16xbf16> to vector<32x16xbf16>
    %cst_8 = arith.constant dense<0.000000e+00> : vector<5x16xf32>
    %12 = tpu.matmul %4, %11, %cst_8 {dimension_numbers = #tpu.dot_dimension_numbers<[1], [0], [0], [1], [0, 0, 1, 1], [], []>} : vector<5x32xbf16>, vector<32x16xbf16>, vector<5x16xf32> -> vector<5x16xf32>
    %13 = vector.extract_strided_slice %12 {offsets = [1, 0], sizes = [4, 16], strides = [1, 1]} : vector<5x16xf32> to vector<4x16xf32>
    %14 = arith.addf %9, %13 : vector<4x16xf32>
    %c1_i32 = arith.constant 1 : i32
    %15 = arith.addi %arg1, %c1_i32 : i32
    %c0_9 = arith.constant 0 : index
    %16 = arith.index_cast %15 : i32 to index
    %c0_10 = arith.constant 0 : index
    %c0_11 = arith.constant 0 : index
    %17 = vector.load %arg2[%c0_9, %16, %c0_10, %c0_11] : memref<1x5x5x32xbf16, #tpu.memory_space<vmem>>, vector<1x1x5x32xbf16>
    %18 = vector.shape_cast %17 : vector<1x1x5x32xbf16> to vector<5x32xbf16>
    %c2 = arith.constant 2 : index
    %c0_12 = arith.constant 0 : index
    %c0_13 = arith.constant 0 : index
    %19 = vector.load %arg3[%c2, %c0_12, %c0_13] : memref<4x32x16xbf16, #tpu.memory_space<vmem>>, vector<1x32x16xbf16>
    %20 = vector.shape_cast %19 : vector<1x32x16xbf16> to vector<32x16xbf16>
    %cst_14 = arith.constant dense<0.000000e+00> : vector<5x16xf32>
    %21 = tpu.matmul %18, %20, %cst_14 {dimension_numbers = #tpu.dot_dimension_numbers<[1], [0], [0], [1], [0, 0, 1, 1], [], []>} : vector<5x32xbf16>, vector<32x16xbf16>, vector<5x16xf32> -> vector<5x16xf32>
    %22 = vector.extract_strided_slice %21 {offsets = [0, 0], sizes = [4, 16], strides = [1, 1]} : vector<5x16xf32> to vector<4x16xf32>
    %23 = arith.addf %14, %22 : vector<4x16xf32>
    %c3 = arith.constant 3 : index
    %c0_15 = arith.constant 0 : index
    %c0_16 = arith.constant 0 : index
    %24 = vector.load %arg3[%c3, %c0_15, %c0_16] : memref<4x32x16xbf16, #tpu.memory_space<vmem>>, vector<1x32x16xbf16>
    %25 = vector.shape_cast %24 : vector<1x32x16xbf16> to vector<32x16xbf16>
    %cst_17 = arith.constant dense<0.000000e+00> : vector<5x16xf32>
    %26 = tpu.matmul %18, %25, %cst_17 {dimension_numbers = #tpu.dot_dimension_numbers<[1], [0], [0], [1], [0, 0, 1, 1], [], []>} : vector<5x32xbf16>, vector<32x16xbf16>, vector<5x16xf32> -> vector<5x16xf32>
    %27 = vector.extract_strided_slice %26 {offsets = [1, 0], sizes = [4, 16], strides = [1, 1]} : vector<5x16xf32> to vector<4x16xf32>
    %28 = arith.addf %23, %27 : vector<4x16xf32>
    %c0_18 = arith.constant 0 : index
    %c0_19 = arith.constant 0 : index
    %29 = vector.load %arg4[%c0_18, %c0_19] : memref<1x16xf32, #tpu.memory_space<vmem>>, vector<1x16xf32>
    %30 = vector.broadcast %29 : vector<1x16xf32> to vector<4x16xf32>
    %31 = arith.addf %28, %30 : vector<4x16xf32>
    %c0_i32_20 = arith.constant 0 : i32
    %32 = arith.cmpi eq, %arg0, %c0_i32_20 : i32
    %c0_i32_21 = arith.constant 0 : i32
    %33 = arith.cmpi eq, %arg1, %c0_i32_21 : i32
    %34 = arith.andi %32, %33 : i1
    %35 = arith.extui %34 : i1 to i32
    %c0_i32_22 = arith.constant 0 : i32
    %36 = arith.cmpi ne, %35, %c0_i32_22 : i32
    scf.if %36 {
      %cst_37 = arith.constant 0.000000e+00 : f32
      %52 = vector.broadcast %cst_37 : f32 to vector<2x16xf32>
      %c0_38 = arith.constant 0 : index
      %c0_39 = arith.constant 0 : index
      %53 = vector.load %arg6[%c0_38, %c0_39] : memref<2x16xf32, #tpu.memory_space<vmem>>, vector<2x16xf32>
      tpu.vector_store %arg6[%c0_38, %c0_39], %52 {strides = array<i32>} : memref<2x16xf32, #tpu.memory_space<vmem>>, vector<2x16xf32>,
    } else {
    }
    %c0_23 = arith.constant 0 : index
    %c0_24 = arith.constant 0 : index
    %37 = vector.load %arg6[%c0_23, %c0_24] : memref<2x16xf32, #tpu.memory_space<vmem>>, vector<1x16xf32>
    %cst_25 = arith.constant dense<0.000000e+00> : vector<16xf32>
    %38 = vector.multi_reduction <add>, %31, %cst_25 [0] : vector<4x16xf32> to vector<16xf32>
    %39 = vector.shape_cast %38 : vector<16xf32> to vector<1x16xf32>
    %40 = arith.addf %37, %39 : vector<1x16xf32>
    %c0_26 = arith.constant 0 : index
    %c0_27 = arith.constant 0 : index
    %41 = vector.load %arg6[%c0_26, %c0_27] : memref<2x16xf32, #tpu.memory_space<vmem>>, vector<1x16xf32>
    tpu.vector_store %arg6[%c0_26, %c0_27], %40 {strides = array<i32>} : memref<2x16xf32, #tpu.memory_space<vmem>>, vector<1x16xf32>,
    %c1_28 = arith.constant 1 : index
    %c0_29 = arith.constant 0 : index
    %42 = vector.load %arg6[%c1_28, %c0_29] : memref<2x16xf32, #tpu.memory_space<vmem>>, vector<1x16xf32>
    %43 = arith.mulf %31, %31 : vector<4x16xf32>
    %cst_30 = arith.constant dense<0.000000e+00> : vector<16xf32>
    %44 = vector.multi_reduction <add>, %43, %cst_30 [0] : vector<4x16xf32> to vector<16xf32>
    %45 = vector.shape_cast %44 : vector<16xf32> to vector<1x16xf32>
    %46 = arith.addf %42, %45 : vector<1x16xf32>
    %c1_31 = arith.constant 1 : index
    %c0_32 = arith.constant 0 : index
    %47 = vector.load %arg6[%c1_31, %c0_32] : memref<2x16xf32, #tpu.memory_space<vmem>>, vector<1x16xf32>
    tpu.vector_store %arg6[%c1_31, %c0_32], %46 {strides = array<i32>} : memref<2x16xf32, #tpu.memory_space<vmem>>, vector<1x16xf32>,
    %48 = arith.truncf %31 : vector<4x16xf32> to vector<4x16xbf16>
    %c0_33 = arith.constant 0 : index
    %c0_34 = arith.constant 0 : index
    %c0_35 = arith.constant 0 : index
    %c0_36 = arith.constant 0 : index
    %49 = vector.load %arg5[%c0_33, %c0_34, %c0_35, %c0_36] : memref<1x1x4x16xbf16, #tpu.memory_space<vmem>>, vector<1x1x4x16xbf16>
    %50 = vector.shape_cast %49 : vector<1x1x4x16xbf16> to vector<4x16xbf16>
    %51 = vector.shape_cast %48 : vector<4x16xbf16> to vector<1x1x4x16xbf16>
    tpu.vector_store %arg5[%c0_33, %c0_34, %c0_35, %c0_36], %51 {strides = array<i32>} : memref<1x1x4x16xbf16, #tpu.memory_space<vmem>>, vector<1x1x4x16xbf16>,
    return
  }
  func.func @transform_0(%arg0: i32, %arg1: i32) -> (i32, i32, i32, i32) {
    %c0_i32 = arith.constant 0 : i32
    %c0_i32_0 = arith.constant 0 : i32
    %c0_i32_1 = arith.constant 0 : i32
    %c0_i32_2 = arith.constant 0 : i32
    return %arg0, %c0_i32, %c0_i32_0, %c0_i32_1 : i32, i32, i32, i32
  }
  func.func @transform_1(%arg0: i32, %arg1: i32) -> (i32, i32, i32) {
    %c0_i32 = arith.constant 0 : i32
    %c0_i32_0 = arith.constant 0 : i32
    %c0_i32_1 = arith.constant 0 : i32
    %c0_i32_2 = arith.constant 0 : i32
    return %c0_i32, %c0_i32_0, %c0_i32_1 : i32, i32, i32
  }
  func.func @transform_2(%arg0: i32, %arg1: i32) -> (i32, i32) {
    %c0_i32 = arith.constant 0 : i32
    %c0_i32_0 = arith.constant 0 : i32
    %c0_i32_1 = arith.constant 0 : i32
    return %c0_i32, %c0_i32_0 : i32, i32
  }
  func.func @transform_3(%arg0: i32, %arg1: i32) -> (i32, i32, i32, i32) {
    %c0_i32 = arith.constant 0 : i32
    %c0_i32_0 = arith.constant 0 : i32
    %c0_i32_1 = arith.constant 0 : i32
    return %arg0, %arg1, %c0_i32, %c0_i32_0 : i32, i32, i32, i32
  }
  func.func @transform_4(%arg0: i32, %arg1: i32) -> (i32, i32) {
    %c0_i32 = arith.constant 0 : i32
    %c0_i32_0 = arith.constant 0 : i32
    %c0_i32_1 = arith.constant 0 : i32
    return %c0_i32, %c0_i32_0 : i32, i32
  }
}

module attributes {stable_mosaic.version = 11 : i64} {
  func.func @_bn_act_kernel(%arg0: i32, %arg1: memref<32x16xbf16, #tpu.memory_space<vmem>>, %arg2: memref<2x16xf32, #tpu.memory_space<vmem>>, %arg3: memref<1x16xf32, #tpu.memory_space<vmem>>, %arg4: memref<1x16xf32, #tpu.memory_space<vmem>>, %arg5: memref<32x16xbf16, #tpu.memory_space<vmem>>) attributes {dimension_semantics = [#tpu.dimension_semantics<parallel>], iteration_bounds = array<i64: 1>, scalar_prefetch = 0 : i64, scratch_operands = 0 : i64, tpu.core_type = #tpu.core_type<tc>, window_params = [{transform_indices = @transform_0, window_bounds = array<i64: 32, 16>}, {pipeline_mode = #tpu.pipeline_mode<synchronous>, transform_indices = @transform_1, window_bounds = array<i64: 2, 16>}, {pipeline_mode = #tpu.pipeline_mode<synchronous>, transform_indices = @transform_2, window_bounds = array<i64: 1, 16>}, {pipeline_mode = #tpu.pipeline_mode<synchronous>, transform_indices = @transform_3, window_bounds = array<i64: 1, 16>}, {transform_indices = @transform_4, window_bounds = array<i64: 32, 16>}]} {
    %c0 = arith.constant 0 : index
    %c0_0 = arith.constant 0 : index
    %0 = vector.load %arg2[%c0, %c0_0] : memref<2x16xf32, #tpu.memory_space<vmem>>, vector<1x16xf32>
    %cst = arith.constant 3.125000e-02 : f32
    %1 = vector.broadcast %cst : f32 to vector<1x16xf32>
    %2 = arith.mulf %0, %1 : vector<1x16xf32>
    %c1 = arith.constant 1 : index
    %c0_1 = arith.constant 0 : index
    %3 = vector.load %arg2[%c1, %c0_1] : memref<2x16xf32, #tpu.memory_space<vmem>>, vector<1x16xf32>
    %cst_2 = arith.constant 3.125000e-02 : f32
    %4 = vector.broadcast %cst_2 : f32 to vector<1x16xf32>
    %5 = arith.mulf %3, %4 : vector<1x16xf32>
    %6 = arith.mulf %2, %2 : vector<1x16xf32>
    %7 = arith.subf %5, %6 : vector<1x16xf32>
    %cst_3 = arith.constant 0.000000e+00 : f32
    %8 = vector.broadcast %cst_3 : f32 to vector<1x16xf32>
    %9 = arith.maximumf %7, %8 : vector<1x16xf32>
    %c0_4 = arith.constant 0 : index
    %c0_5 = arith.constant 0 : index
    %10 = vector.load %arg3[%c0_4, %c0_5] : memref<1x16xf32, #tpu.memory_space<vmem>>, vector<1x16xf32>
    %cst_6 = arith.constant 9.99999974E-6 : f32
    %11 = vector.broadcast %cst_6 : f32 to vector<1x16xf32>
    %12 = arith.addf %9, %11 : vector<1x16xf32>
    %13 = math.rsqrt %12 : vector<1x16xf32>
    %14 = arith.mulf %10, %13 : vector<1x16xf32>
    %c0_7 = arith.constant 0 : index
    %c0_8 = arith.constant 0 : index
    %15 = vector.load %arg4[%c0_7, %c0_8] : memref<1x16xf32, #tpu.memory_space<vmem>>, vector<1x16xf32>
    %16 = arith.mulf %2, %14 : vector<1x16xf32>
    %17 = arith.subf %15, %16 : vector<1x16xf32>
    %c0_9 = arith.constant 0 : index
    %c0_10 = arith.constant 0 : index
    %18 = vector.load %arg1[%c0_9, %c0_10] : memref<32x16xbf16, #tpu.memory_space<vmem>>, vector<32x16xbf16>
    %19 = arith.extf %18 : vector<32x16xbf16> to vector<32x16xf32>
    %20 = vector.broadcast %14 : vector<1x16xf32> to vector<32x16xf32>
    %21 = arith.mulf %19, %20 : vector<32x16xf32>
    %22 = vector.broadcast %17 : vector<1x16xf32> to vector<32x16xf32>
    %23 = arith.addf %21, %22 : vector<32x16xf32>
    %cst_11 = arith.constant 0.000000e+00 : f32
    %24 = vector.broadcast %cst_11 : f32 to vector<32x16xf32>
    %25 = arith.cmpf ogt, %23, %24 : vector<32x16xf32>
    %cst_12 = arith.constant 2.000000e-01 : f32
    %26 = vector.broadcast %cst_12 : f32 to vector<32x16xf32>
    %27 = arith.mulf %26, %23 : vector<32x16xf32>
    %28 = arith.select %25, %23, %27 : vector<32x16xi1>, vector<32x16xf32>
    %29 = arith.truncf %28 : vector<32x16xf32> to vector<32x16xbf16>
    %c0_13 = arith.constant 0 : index
    %c0_14 = arith.constant 0 : index
    %30 = vector.load %arg5[%c0_13, %c0_14] : memref<32x16xbf16, #tpu.memory_space<vmem>>, vector<32x16xbf16>
    tpu.vector_store %arg5[%c0_13, %c0_14], %29 {strides = array<i32>} : memref<32x16xbf16, #tpu.memory_space<vmem>>, vector<32x16xbf16>,
    return
  }
  func.func @transform_0(%arg0: i32) -> (i32, i32) {
    %c0_i32 = arith.constant 0 : i32
    %c0_i32_0 = arith.constant 0 : i32
    return %arg0, %c0_i32 : i32, i32
  }
  func.func @transform_1(%arg0: i32) -> (i32, i32) {
    %c0_i32 = arith.constant 0 : i32
    %c0_i32_0 = arith.constant 0 : i32
    %c0_i32_1 = arith.constant 0 : i32
    return %c0_i32, %c0_i32_0 : i32, i32
  }
  func.func @transform_2(%arg0: i32) -> (i32, i32) {
    %c0_i32 = arith.constant 0 : i32
    %c0_i32_0 = arith.constant 0 : i32
    %c0_i32_1 = arith.constant 0 : i32
    return %c0_i32, %c0_i32_0 : i32, i32
  }
  func.func @transform_3(%arg0: i32) -> (i32, i32) {
    %c0_i32 = arith.constant 0 : i32
    %c0_i32_0 = arith.constant 0 : i32
    %c0_i32_1 = arith.constant 0 : i32
    return %c0_i32, %c0_i32_0 : i32, i32
  }
  func.func @transform_4(%arg0: i32) -> (i32, i32) {
    %c0_i32 = arith.constant 0 : i32
    %c0_i32_0 = arith.constant 0 : i32
    return %arg0, %c0_i32 : i32, i32
  }
}

module attributes {stable_mosaic.version = 11 : i64} {
  func.func @_conv_row_kernel(%arg0: i32, %arg1: i32, %arg2: memref<1x3x3x64xbf16, #tpu.memory_space<vmem>>, %arg3: memref<4x64x32xbf16, #tpu.memory_space<vmem>>, %arg4: memref<1x32xf32, #tpu.memory_space<vmem>>, %arg5: memref<1x1x2x32xbf16, #tpu.memory_space<vmem>>, %arg6: memref<2x32xf32, #tpu.memory_space<vmem>>) attributes {dimension_semantics = [#tpu.dimension_semantics<arbitrary>, #tpu.dimension_semantics<arbitrary>], iteration_bounds = array<i64: 2, 2>, scalar_prefetch = 0 : i64, scratch_operands = 0 : i64, tpu.core_type = #tpu.core_type<tc>, window_params = [{transform_indices = @transform_0, window_bounds = array<i64: 1, 3, 3, 64>}, {pipeline_mode = #tpu.pipeline_mode<synchronous>, transform_indices = @transform_1, window_bounds = array<i64: 4, 64, 32>}, {pipeline_mode = #tpu.pipeline_mode<synchronous>, transform_indices = @transform_2, window_bounds = array<i64: 1, 32>}, {transform_indices = @transform_3, window_bounds = array<i64: 1, 1, 2, 32>}, {pipeline_mode = #tpu.pipeline_mode<synchronous>, transform_indices = @transform_4, window_bounds = array<i64: 2, 32>}]} {
    %cst = arith.constant 0.000000e+00 : f32
    %0 = vector.broadcast %cst : f32 to vector<2x32xf32>
    %c0_i32 = arith.constant 0 : i32
    %1 = arith.addi %arg1, %c0_i32 : i32
    %c0 = arith.constant 0 : index
    %2 = arith.index_cast %1 : i32 to index
    %c0_0 = arith.constant 0 : index
    %c0_1 = arith.constant 0 : index
    %3 = vector.load %arg2[%c0, %2, %c0_0, %c0_1] : memref<1x3x3x64xbf16, #tpu.memory_space<vmem>>, vector<1x1x3x64xbf16>
    %4 = vector.shape_cast %3 : vector<1x1x3x64xbf16> to vector<3x64xbf16>
    %c0_2 = arith.constant 0 : index
    %c0_3 = arith.constant 0 : index
    %c0_4 = arith.constant 0 : index
    %5 = vector.load %arg3[%c0_2, %c0_3, %c0_4] : memref<4x64x32xbf16, #tpu.memory_space<vmem>>, vector<1x64x32xbf16>
    %6 = vector.shape_cast %5 : vector<1x64x32xbf16> to vector<64x32xbf16>
    %cst_5 = arith.constant dense<0.000000e+00> : vector<3x32xf32>
    %7 = tpu.matmul %4, %6, %cst_5 {dimension_numbers = #tpu.dot_dimension_numbers<[1], [0], [0], [1], [0, 0, 1, 1], [], []>} : vector<3x64xbf16>, vector<64x32xbf16>, vector<3x32xf32> -> vector<3x32xf32>
    %8 = vector.extract_strided_slice %7 {offsets = [0, 0], sizes = [2, 32], strides = [1, 1]} : vector<3x32xf32> to vector<2x32xf32>
    %9 = arith.addf %0, %8 : vector<2x32xf32>
    %c1 = arith.constant 1 : index
    %c0_6 = arith.constant 0 : index
    %c0_7 = arith.constant 0 : index
    %10 = vector.load %arg3[%c1, %c0_6, %c0_7] : memref<4x64x32xbf16, #tpu.memory_space<vmem>>, vector<1x64x32xbf16>
    %11 = vector.shape_cast %10 : vector<1x64x32xbf16> to vector<64x32xbf16>
    %cst_8 = arith.constant dense<0.000000e+00> : vector<3x32xf32>
    %12 = tpu.matmul %4, %11, %cst_8 {dimension_numbers = #tpu.dot_dimension_numbers<[1], [0], [0], [1], [0, 0, 1, 1], [], []>} : vector<3x64xbf16>, vector<64x32xbf16>, vector<3x32xf32> -> vector<3x32xf32>
    %13 = vector.extract_strided_slice %12 {offsets = [1, 0], sizes = [2, 32], strides = [1, 1]} : vector<3x32xf32> to vector<2x32xf32>
    %14 = arith.addf %9, %13 : vector<2x32xf32>
    %c1_i32 = arith.constant 1 : i32
    %15 = arith.addi %arg1, %c1_i32 : i32
    %c0_9 = arith.constant 0 : index
    %16 = arith.index_cast %15 : i32 to index
    %c0_10 = arith.constant 0 : index
    %c0_11 = arith.constant 0 : index
    %17 = vector.load %arg2[%c0_9, %16, %c0_10, %c0_11] : memref<1x3x3x64xbf16, #tpu.memory_space<vmem>>, vector<1x1x3x64xbf16>
    %18 = vector.shape_cast %17 : vector<1x1x3x64xbf16> to vector<3x64xbf16>
    %c2 = arith.constant 2 : index
    %c0_12 = arith.constant 0 : index
    %c0_13 = arith.constant 0 : index
    %19 = vector.load %arg3[%c2, %c0_12, %c0_13] : memref<4x64x32xbf16, #tpu.memory_space<vmem>>, vector<1x64x32xbf16>
    %20 = vector.shape_cast %19 : vector<1x64x32xbf16> to vector<64x32xbf16>
    %cst_14 = arith.constant dense<0.000000e+00> : vector<3x32xf32>
    %21 = tpu.matmul %18, %20, %cst_14 {dimension_numbers = #tpu.dot_dimension_numbers<[1], [0], [0], [1], [0, 0, 1, 1], [], []>} : vector<3x64xbf16>, vector<64x32xbf16>, vector<3x32xf32> -> vector<3x32xf32>
    %22 = vector.extract_strided_slice %21 {offsets = [0, 0], sizes = [2, 32], strides = [1, 1]} : vector<3x32xf32> to vector<2x32xf32>
    %23 = arith.addf %14, %22 : vector<2x32xf32>
    %c3 = arith.constant 3 : index
    %c0_15 = arith.constant 0 : index
    %c0_16 = arith.constant 0 : index
    %24 = vector.load %arg3[%c3, %c0_15, %c0_16] : memref<4x64x32xbf16, #tpu.memory_space<vmem>>, vector<1x64x32xbf16>
    %25 = vector.shape_cast %24 : vector<1x64x32xbf16> to vector<64x32xbf16>
    %cst_17 = arith.constant dense<0.000000e+00> : vector<3x32xf32>
    %26 = tpu.matmul %18, %25, %cst_17 {dimension_numbers = #tpu.dot_dimension_numbers<[1], [0], [0], [1], [0, 0, 1, 1], [], []>} : vector<3x64xbf16>, vector<64x32xbf16>, vector<3x32xf32> -> vector<3x32xf32>
    %27 = vector.extract_strided_slice %26 {offsets = [1, 0], sizes = [2, 32], strides = [1, 1]} : vector<3x32xf32> to vector<2x32xf32>
    %28 = arith.addf %23, %27 : vector<2x32xf32>
    %c0_18 = arith.constant 0 : index
    %c0_19 = arith.constant 0 : index
    %29 = vector.load %arg4[%c0_18, %c0_19] : memref<1x32xf32, #tpu.memory_space<vmem>>, vector<1x32xf32>
    %30 = vector.broadcast %29 : vector<1x32xf32> to vector<2x32xf32>
    %31 = arith.addf %28, %30 : vector<2x32xf32>
    %c0_i32_20 = arith.constant 0 : i32
    %32 = arith.cmpi eq, %arg0, %c0_i32_20 : i32
    %c0_i32_21 = arith.constant 0 : i32
    %33 = arith.cmpi eq, %arg1, %c0_i32_21 : i32
    %34 = arith.andi %32, %33 : i1
    %35 = arith.extui %34 : i1 to i32
    %c0_i32_22 = arith.constant 0 : i32
    %36 = arith.cmpi ne, %35, %c0_i32_22 : i32
    scf.if %36 {
      %cst_37 = arith.constant 0.000000e+00 : f32
      %52 = vector.broadcast %cst_37 : f32 to vector<2x32xf32>
      %c0_38 = arith.constant 0 : index
      %c0_39 = arith.constant 0 : index
      %53 = vector.load %arg6[%c0_38, %c0_39] : memref<2x32xf32, #tpu.memory_space<vmem>>, vector<2x32xf32>
      tpu.vector_store %arg6[%c0_38, %c0_39], %52 {strides = array<i32>} : memref<2x32xf32, #tpu.memory_space<vmem>>, vector<2x32xf32>,
    } else {
    }
    %c0_23 = arith.constant 0 : index
    %c0_24 = arith.constant 0 : index
    %37 = vector.load %arg6[%c0_23, %c0_24] : memref<2x32xf32, #tpu.memory_space<vmem>>, vector<1x32xf32>
    %cst_25 = arith.constant dense<0.000000e+00> : vector<32xf32>
    %38 = vector.multi_reduction <add>, %31, %cst_25 [0] : vector<2x32xf32> to vector<32xf32>
    %39 = vector.shape_cast %38 : vector<32xf32> to vector<1x32xf32>
    %40 = arith.addf %37, %39 : vector<1x32xf32>
    %c0_26 = arith.constant 0 : index
    %c0_27 = arith.constant 0 : index
    %41 = vector.load %arg6[%c0_26, %c0_27] : memref<2x32xf32, #tpu.memory_space<vmem>>, vector<1x32xf32>
    tpu.vector_store %arg6[%c0_26, %c0_27], %40 {strides = array<i32>} : memref<2x32xf32, #tpu.memory_space<vmem>>, vector<1x32xf32>,
    %c1_28 = arith.constant 1 : index
    %c0_29 = arith.constant 0 : index
    %42 = vector.load %arg6[%c1_28, %c0_29] : memref<2x32xf32, #tpu.memory_space<vmem>>, vector<1x32xf32>
    %43 = arith.mulf %31, %31 : vector<2x32xf32>
    %cst_30 = arith.constant dense<0.000000e+00> : vector<32xf32>
    %44 = vector.multi_reduction <add>, %43, %cst_30 [0] : vector<2x32xf32> to vector<32xf32>
    %45 = vector.shape_cast %44 : vector<32xf32> to vector<1x32xf32>
    %46 = arith.addf %42, %45 : vector<1x32xf32>
    %c1_31 = arith.constant 1 : index
    %c0_32 = arith.constant 0 : index
    %47 = vector.load %arg6[%c1_31, %c0_32] : memref<2x32xf32, #tpu.memory_space<vmem>>, vector<1x32xf32>
    tpu.vector_store %arg6[%c1_31, %c0_32], %46 {strides = array<i32>} : memref<2x32xf32, #tpu.memory_space<vmem>>, vector<1x32xf32>,
    %48 = arith.truncf %31 : vector<2x32xf32> to vector<2x32xbf16>
    %c0_33 = arith.constant 0 : index
    %c0_34 = arith.constant 0 : index
    %c0_35 = arith.constant 0 : index
    %c0_36 = arith.constant 0 : index
    %49 = vector.load %arg5[%c0_33, %c0_34, %c0_35, %c0_36] : memref<1x1x2x32xbf16, #tpu.memory_space<vmem>>, vector<1x1x2x32xbf16>
    %50 = vector.shape_cast %49 : vector<1x1x2x32xbf16> to vector<2x32xbf16>
    %51 = vector.shape_cast %48 : vector<2x32xbf16> to vector<1x1x2x32xbf16>
    tpu.vector_store %arg5[%c0_33, %c0_34, %c0_35, %c0_36], %51 {strides = array<i32>} : memref<1x1x2x32xbf16, #tpu.memory_space<vmem>>, vector<1x1x2x32xbf16>,
    return
  }
  func.func @transform_0(%arg0: i32, %arg1: i32) -> (i32, i32, i32, i32) {
    %c0_i32 = arith.constant 0 : i32
    %c0_i32_0 = arith.constant 0 : i32
    %c0_i32_1 = arith.constant 0 : i32
    %c0_i32_2 = arith.constant 0 : i32
    return %arg0, %c0_i32, %c0_i32_0, %c0_i32_1 : i32, i32, i32, i32
  }
  func.func @transform_1(%arg0: i32, %arg1: i32) -> (i32, i32, i32) {
    %c0_i32 = arith.constant 0 : i32
    %c0_i32_0 = arith.constant 0 : i32
    %c0_i32_1 = arith.constant 0 : i32
    %c0_i32_2 = arith.constant 0 : i32
    return %c0_i32, %c0_i32_0, %c0_i32_1 : i32, i32, i32
  }
  func.func @transform_2(%arg0: i32, %arg1: i32) -> (i32, i32) {
    %c0_i32 = arith.constant 0 : i32
    %c0_i32_0 = arith.constant 0 : i32
    %c0_i32_1 = arith.constant 0 : i32
    return %c0_i32, %c0_i32_0 : i32, i32
  }
  func.func @transform_3(%arg0: i32, %arg1: i32) -> (i32, i32, i32, i32) {
    %c0_i32 = arith.constant 0 : i32
    %c0_i32_0 = arith.constant 0 : i32
    %c0_i32_1 = arith.constant 0 : i32
    return %arg0, %arg1, %c0_i32, %c0_i32_0 : i32, i32, i32, i32
  }
  func.func @transform_4(%arg0: i32, %arg1: i32) -> (i32, i32) {
    %c0_i32 = arith.constant 0 : i32
    %c0_i32_0 = arith.constant 0 : i32
    %c0_i32_1 = arith.constant 0 : i32
    return %c0_i32, %c0_i32_0 : i32, i32
  }
}

module attributes {stable_mosaic.version = 11 : i64} {
  func.func @_bn_act_kernel(%arg0: i32, %arg1: memref<8x32xbf16, #tpu.memory_space<vmem>>, %arg2: memref<2x32xf32, #tpu.memory_space<vmem>>, %arg3: memref<1x32xf32, #tpu.memory_space<vmem>>, %arg4: memref<1x32xf32, #tpu.memory_space<vmem>>, %arg5: memref<8x32xbf16, #tpu.memory_space<vmem>>) attributes {dimension_semantics = [#tpu.dimension_semantics<parallel>], iteration_bounds = array<i64: 1>, scalar_prefetch = 0 : i64, scratch_operands = 0 : i64, tpu.core_type = #tpu.core_type<tc>, window_params = [{transform_indices = @transform_0, window_bounds = array<i64: 8, 32>}, {pipeline_mode = #tpu.pipeline_mode<synchronous>, transform_indices = @transform_1, window_bounds = array<i64: 2, 32>}, {pipeline_mode = #tpu.pipeline_mode<synchronous>, transform_indices = @transform_2, window_bounds = array<i64: 1, 32>}, {pipeline_mode = #tpu.pipeline_mode<synchronous>, transform_indices = @transform_3, window_bounds = array<i64: 1, 32>}, {transform_indices = @transform_4, window_bounds = array<i64: 8, 32>}]} {
    %c0 = arith.constant 0 : index
    %c0_0 = arith.constant 0 : index
    %0 = vector.load %arg2[%c0, %c0_0] : memref<2x32xf32, #tpu.memory_space<vmem>>, vector<1x32xf32>
    %cst = arith.constant 1.250000e-01 : f32
    %1 = vector.broadcast %cst : f32 to vector<1x32xf32>
    %2 = arith.mulf %0, %1 : vector<1x32xf32>
    %c1 = arith.constant 1 : index
    %c0_1 = arith.constant 0 : index
    %3 = vector.load %arg2[%c1, %c0_1] : memref<2x32xf32, #tpu.memory_space<vmem>>, vector<1x32xf32>
    %cst_2 = arith.constant 1.250000e-01 : f32
    %4 = vector.broadcast %cst_2 : f32 to vector<1x32xf32>
    %5 = arith.mulf %3, %4 : vector<1x32xf32>
    %6 = arith.mulf %2, %2 : vector<1x32xf32>
    %7 = arith.subf %5, %6 : vector<1x32xf32>
    %cst_3 = arith.constant 0.000000e+00 : f32
    %8 = vector.broadcast %cst_3 : f32 to vector<1x32xf32>
    %9 = arith.maximumf %7, %8 : vector<1x32xf32>
    %c0_4 = arith.constant 0 : index
    %c0_5 = arith.constant 0 : index
    %10 = vector.load %arg3[%c0_4, %c0_5] : memref<1x32xf32, #tpu.memory_space<vmem>>, vector<1x32xf32>
    %cst_6 = arith.constant 9.99999974E-6 : f32
    %11 = vector.broadcast %cst_6 : f32 to vector<1x32xf32>
    %12 = arith.addf %9, %11 : vector<1x32xf32>
    %13 = math.rsqrt %12 : vector<1x32xf32>
    %14 = arith.mulf %10, %13 : vector<1x32xf32>
    %c0_7 = arith.constant 0 : index
    %c0_8 = arith.constant 0 : index
    %15 = vector.load %arg4[%c0_7, %c0_8] : memref<1x32xf32, #tpu.memory_space<vmem>>, vector<1x32xf32>
    %16 = arith.mulf %2, %14 : vector<1x32xf32>
    %17 = arith.subf %15, %16 : vector<1x32xf32>
    %c0_9 = arith.constant 0 : index
    %c0_10 = arith.constant 0 : index
    %18 = vector.load %arg1[%c0_9, %c0_10] : memref<8x32xbf16, #tpu.memory_space<vmem>>, vector<8x32xbf16>
    %19 = arith.extf %18 : vector<8x32xbf16> to vector<8x32xf32>
    %20 = vector.broadcast %14 : vector<1x32xf32> to vector<8x32xf32>
    %21 = arith.mulf %19, %20 : vector<8x32xf32>
    %22 = vector.broadcast %17 : vector<1x32xf32> to vector<8x32xf32>
    %23 = arith.addf %21, %22 : vector<8x32xf32>
    %cst_11 = arith.constant 0.000000e+00 : f32
    %24 = vector.broadcast %cst_11 : f32 to vector<8x32xf32>
    %25 = arith.cmpf ogt, %23, %24 : vector<8x32xf32>
    %cst_12 = arith.constant 2.000000e-01 : f32
    %26 = vector.broadcast %cst_12 : f32 to vector<8x32xf32>
    %27 = arith.mulf %26, %23 : vector<8x32xf32>
    %28 = arith.select %25, %23, %27 : vector<8x32xi1>, vector<8x32xf32>
    %29 = arith.truncf %28 : vector<8x32xf32> to vector<8x32xbf16>
    %c0_13 = arith.constant 0 : index
    %c0_14 = arith.constant 0 : index
    %30 = vector.load %arg5[%c0_13, %c0_14] : memref<8x32xbf16, #tpu.memory_space<vmem>>, vector<8x32xbf16>
    tpu.vector_store %arg5[%c0_13, %c0_14], %29 {strides = array<i32>} : memref<8x32xbf16, #tpu.memory_space<vmem>>, vector<8x32xbf16>,
    return
  }
  func.func @transform_0(%arg0: i32) -> (i32, i32) {
    %c0_i32 = arith.constant 0 : i32
    %c0_i32_0 = arith.constant 0 : i32
    return %arg0, %c0_i32 : i32, i32
  }
  func.func @transform_1(%arg0: i32) -> (i32, i32) {
    %c0_i32 = arith.constant 0 : i32
    %c0_i32_0 = arith.constant 0 : i32
    %c0_i32_1 = arith.constant 0 : i32
    return %c0_i32, %c0_i32_0 : i32, i32
  }
  func.func @transform_2(%arg0: i32) -> (i32, i32) {
    %c0_i32 = arith.constant 0 : i32
    %c0_i32_0 = arith.constant 0 : i32
    %c0_i32_1 = arith.constant 0 : i32
    return %c0_i32, %c0_i32_0 : i32, i32
  }
  func.func @transform_3(%arg0: i32) -> (i32, i32) {
    %c0_i32 = arith.constant 0 : i32
    %c0_i32_0 = arith.constant 0 : i32
    %c0_i32_1 = arith.constant 0 : i32
    return %c0_i32, %c0_i32_0 : i32, i32
  }
  func.func @transform_4(%arg0: i32) -> (i32, i32) {
    %c0_i32 = arith.constant 0 : i32
    %c0_i32_0 = arith.constant 0 : i32
    return %arg0, %c0_i32 : i32, i32
  }
}

module attributes {stable_mosaic.version = 11 : i64} {
  func.func @_conv_row_kernel(%arg0: i32, %arg1: i32, %arg2: memref<1x6x6x32xbf16, #tpu.memory_space<vmem>>, %arg3: memref<9x32x16xbf16, #tpu.memory_space<vmem>>, %arg4: memref<1x16xf32, #tpu.memory_space<vmem>>, %arg5: memref<1x1x4x16xbf16, #tpu.memory_space<vmem>>, %arg6: memref<2x16xf32, #tpu.memory_space<vmem>>) attributes {dimension_semantics = [#tpu.dimension_semantics<arbitrary>, #tpu.dimension_semantics<arbitrary>], iteration_bounds = array<i64: 2, 4>, scalar_prefetch = 0 : i64, scratch_operands = 0 : i64, tpu.core_type = #tpu.core_type<tc>, window_params = [{transform_indices = @transform_0, window_bounds = array<i64: 1, 6, 6, 32>}, {pipeline_mode = #tpu.pipeline_mode<synchronous>, transform_indices = @transform_1, window_bounds = array<i64: 9, 32, 16>}, {pipeline_mode = #tpu.pipeline_mode<synchronous>, transform_indices = @transform_2, window_bounds = array<i64: 1, 16>}, {transform_indices = @transform_3, window_bounds = array<i64: 1, 1, 4, 16>}, {pipeline_mode = #tpu.pipeline_mode<synchronous>, transform_indices = @transform_4, window_bounds = array<i64: 2, 16>}]} {
    %cst = arith.constant 0.000000e+00 : f32
    %0 = vector.broadcast %cst : f32 to vector<4x16xf32>
    %c0_i32 = arith.constant 0 : i32
    %1 = arith.addi %arg1, %c0_i32 : i32
    %c0 = arith.constant 0 : index
    %2 = arith.index_cast %1 : i32 to index
    %c0_0 = arith.constant 0 : index
    %c0_1 = arith.constant 0 : index
    %3 = vector.load %arg2[%c0, %2, %c0_0, %c0_1] : memref<1x6x6x32xbf16, #tpu.memory_space<vmem>>, vector<1x1x6x32xbf16>
    %4 = vector.shape_cast %3 : vector<1x1x6x32xbf16> to vector<6x32xbf16>
    %c0_2 = arith.constant 0 : index
    %c0_3 = arith.constant 0 : index
    %c0_4 = arith.constant 0 : index
    %5 = vector.load %arg3[%c0_2, %c0_3, %c0_4] : memref<9x32x16xbf16, #tpu.memory_space<vmem>>, vector<1x32x16xbf16>
    %6 = vector.shape_cast %5 : vector<1x32x16xbf16> to vector<32x16xbf16>
    %cst_5 = arith.constant dense<0.000000e+00> : vector<6x16xf32>
    %7 = tpu.matmul %4, %6, %cst_5 {dimension_numbers = #tpu.dot_dimension_numbers<[1], [0], [0], [1], [0, 0, 1, 1], [], []>} : vector<6x32xbf16>, vector<32x16xbf16>, vector<6x16xf32> -> vector<6x16xf32>
    %8 = vector.extract_strided_slice %7 {offsets = [0, 0], sizes = [4, 16], strides = [1, 1]} : vector<6x16xf32> to vector<4x16xf32>
    %9 = arith.addf %0, %8 : vector<4x16xf32>
    %c1 = arith.constant 1 : index
    %c0_6 = arith.constant 0 : index
    %c0_7 = arith.constant 0 : index
    %10 = vector.load %arg3[%c1, %c0_6, %c0_7] : memref<9x32x16xbf16, #tpu.memory_space<vmem>>, vector<1x32x16xbf16>
    %11 = vector.shape_cast %10 : vector<1x32x16xbf16> to vector<32x16xbf16>
    %cst_8 = arith.constant dense<0.000000e+00> : vector<6x16xf32>
    %12 = tpu.matmul %4, %11, %cst_8 {dimension_numbers = #tpu.dot_dimension_numbers<[1], [0], [0], [1], [0, 0, 1, 1], [], []>} : vector<6x32xbf16>, vector<32x16xbf16>, vector<6x16xf32> -> vector<6x16xf32>
    %13 = vector.extract_strided_slice %12 {offsets = [1, 0], sizes = [4, 16], strides = [1, 1]} : vector<6x16xf32> to vector<4x16xf32>
    %14 = arith.addf %9, %13 : vector<4x16xf32>
    %c2 = arith.constant 2 : index
    %c0_9 = arith.constant 0 : index
    %c0_10 = arith.constant 0 : index
    %15 = vector.load %arg3[%c2, %c0_9, %c0_10] : memref<9x32x16xbf16, #tpu.memory_space<vmem>>, vector<1x32x16xbf16>
    %16 = vector.shape_cast %15 : vector<1x32x16xbf16> to vector<32x16xbf16>
    %cst_11 = arith.constant dense<0.000000e+00> : vector<6x16xf32>
    %17 = tpu.matmul %4, %16, %cst_11 {dimension_numbers = #tpu.dot_dimension_numbers<[1], [0], [0], [1], [0, 0, 1, 1], [], []>} : vector<6x32xbf16>, vector<32x16xbf16>, vector<6x16xf32> -> vector<6x16xf32>
    %18 = vector.extract_strided_slice %17 {offsets = [2, 0], sizes = [4, 16], strides = [1, 1]} : vector<6x16xf32> to vector<4x16xf32>
    %19 = arith.addf %14, %18 : vector<4x16xf32>
    %c1_i32 = arith.constant 1 : i32
    %20 = arith.addi %arg1, %c1_i32 : i32
    %c0_12 = arith.constant 0 : index
    %21 = arith.index_cast %20 : i32 to index
    %c0_13 = arith.constant 0 : index
    %c0_14 = arith.constant 0 : index
    %22 = vector.load %arg2[%c0_12, %21, %c0_13, %c0_14] : memref<1x6x6x32xbf16, #tpu.memory_space<vmem>>, vector<1x1x6x32xbf16>
    %23 = vector.shape_cast %22 : vector<1x1x6x32xbf16> to vector<6x32xbf16>
    %c3 = arith.constant 3 : index
    %c0_15 = arith.constant 0 : index
    %c0_16 = arith.constant 0 : index
    %24 = vector.load %arg3[%c3, %c0_15, %c0_16] : memref<9x32x16xbf16, #tpu.memory_space<vmem>>, vector<1x32x16xbf16>
    %25 = vector.shape_cast %24 : vector<1x32x16xbf16> to vector<32x16xbf16>
    %cst_17 = arith.constant dense<0.000000e+00> : vector<6x16xf32>
    %26 = tpu.matmul %23, %25, %cst_17 {dimension_numbers = #tpu.dot_dimension_numbers<[1], [0], [0], [1], [0, 0, 1, 1], [], []>} : vector<6x32xbf16>, vector<32x16xbf16>, vector<6x16xf32> -> vector<6x16xf32>
    %27 = vector.extract_strided_slice %26 {offsets = [0, 0], sizes = [4, 16], strides = [1, 1]} : vector<6x16xf32> to vector<4x16xf32>
    %28 = arith.addf %19, %27 : vector<4x16xf32>
    %c4 = arith.constant 4 : index
    %c0_18 = arith.constant 0 : index
    %c0_19 = arith.constant 0 : index
    %29 = vector.load %arg3[%c4, %c0_18, %c0_19] : memref<9x32x16xbf16, #tpu.memory_space<vmem>>, vector<1x32x16xbf16>
    %30 = vector.shape_cast %29 : vector<1x32x16xbf16> to vector<32x16xbf16>
    %cst_20 = arith.constant dense<0.000000e+00> : vector<6x16xf32>
    %31 = tpu.matmul %23, %30, %cst_20 {dimension_numbers = #tpu.dot_dimension_numbers<[1], [0], [0], [1], [0, 0, 1, 1], [], []>} : vector<6x32xbf16>, vector<32x16xbf16>, vector<6x16xf32> -> vector<6x16xf32>
    %32 = vector.extract_strided_slice %31 {offsets = [1, 0], sizes = [4, 16], strides = [1, 1]} : vector<6x16xf32> to vector<4x16xf32>
    %33 = arith.addf %28, %32 : vector<4x16xf32>
    %c5 = arith.constant 5 : index
    %c0_21 = arith.constant 0 : index
    %c0_22 = arith.constant 0 : index
    %34 = vector.load %arg3[%c5, %c0_21, %c0_22] : memref<9x32x16xbf16, #tpu.memory_space<vmem>>, vector<1x32x16xbf16>
    %35 = vector.shape_cast %34 : vector<1x32x16xbf16> to vector<32x16xbf16>
    %cst_23 = arith.constant dense<0.000000e+00> : vector<6x16xf32>
    %36 = tpu.matmul %23, %35, %cst_23 {dimension_numbers = #tpu.dot_dimension_numbers<[1], [0], [0], [1], [0, 0, 1, 1], [], []>} : vector<6x32xbf16>, vector<32x16xbf16>, vector<6x16xf32> -> vector<6x16xf32>
    %37 = vector.extract_strided_slice %36 {offsets = [2, 0], sizes = [4, 16], strides = [1, 1]} : vector<6x16xf32> to vector<4x16xf32>
    %38 = arith.addf %33, %37 : vector<4x16xf32>
    %c2_i32 = arith.constant 2 : i32
    %39 = arith.addi %arg1, %c2_i32 : i32
    %c0_24 = arith.constant 0 : index
    %40 = arith.index_cast %39 : i32 to index
    %c0_25 = arith.constant 0 : index
    %c0_26 = arith.constant 0 : index
    %41 = vector.load %arg2[%c0_24, %40, %c0_25, %c0_26] : memref<1x6x6x32xbf16, #tpu.memory_space<vmem>>, vector<1x1x6x32xbf16>
    %42 = vector.shape_cast %41 : vector<1x1x6x32xbf16> to vector<6x32xbf16>
    %c6 = arith.constant 6 : index
    %c0_27 = arith.constant 0 : index
    %c0_28 = arith.constant 0 : index
    %43 = vector.load %arg3[%c6, %c0_27, %c0_28] : memref<9x32x16xbf16, #tpu.memory_space<vmem>>, vector<1x32x16xbf16>
    %44 = vector.shape_cast %43 : vector<1x32x16xbf16> to vector<32x16xbf16>
    %cst_29 = arith.constant dense<0.000000e+00> : vector<6x16xf32>
    %45 = tpu.matmul %42, %44, %cst_29 {dimension_numbers = #tpu.dot_dimension_numbers<[1], [0], [0], [1], [0, 0, 1, 1], [], []>} : vector<6x32xbf16>, vector<32x16xbf16>, vector<6x16xf32> -> vector<6x16xf32>
    %46 = vector.extract_strided_slice %45 {offsets = [0, 0], sizes = [4, 16], strides = [1, 1]} : vector<6x16xf32> to vector<4x16xf32>
    %47 = arith.addf %38, %46 : vector<4x16xf32>
    %c7 = arith.constant 7 : index
    %c0_30 = arith.constant 0 : index
    %c0_31 = arith.constant 0 : index
    %48 = vector.load %arg3[%c7, %c0_30, %c0_31] : memref<9x32x16xbf16, #tpu.memory_space<vmem>>, vector<1x32x16xbf16>
    %49 = vector.shape_cast %48 : vector<1x32x16xbf16> to vector<32x16xbf16>
    %cst_32 = arith.constant dense<0.000000e+00> : vector<6x16xf32>
    %50 = tpu.matmul %42, %49, %cst_32 {dimension_numbers = #tpu.dot_dimension_numbers<[1], [0], [0], [1], [0, 0, 1, 1], [], []>} : vector<6x32xbf16>, vector<32x16xbf16>, vector<6x16xf32> -> vector<6x16xf32>
    %51 = vector.extract_strided_slice %50 {offsets = [1, 0], sizes = [4, 16], strides = [1, 1]} : vector<6x16xf32> to vector<4x16xf32>
    %52 = arith.addf %47, %51 : vector<4x16xf32>
    %c8 = arith.constant 8 : index
    %c0_33 = arith.constant 0 : index
    %c0_34 = arith.constant 0 : index
    %53 = vector.load %arg3[%c8, %c0_33, %c0_34] : memref<9x32x16xbf16, #tpu.memory_space<vmem>>, vector<1x32x16xbf16>
    %54 = vector.shape_cast %53 : vector<1x32x16xbf16> to vector<32x16xbf16>
    %cst_35 = arith.constant dense<0.000000e+00> : vector<6x16xf32>
    %55 = tpu.matmul %42, %54, %cst_35 {dimension_numbers = #tpu.dot_dimension_numbers<[1], [0], [0], [1], [0, 0, 1, 1], [], []>} : vector<6x32xbf16>, vector<32x16xbf16>, vector<6x16xf32> -> vector<6x16xf32>
    %56 = vector.extract_strided_slice %55 {offsets = [2, 0], sizes = [4, 16], strides = [1, 1]} : vector<6x16xf32> to vector<4x16xf32>
    %57 = arith.addf %52, %56 : vector<4x16xf32>
    %c0_36 = arith.constant 0 : index
    %c0_37 = arith.constant 0 : index
    %58 = vector.load %arg4[%c0_36, %c0_37] : memref<1x16xf32, #tpu.memory_space<vmem>>, vector<1x16xf32>
    %59 = vector.broadcast %58 : vector<1x16xf32> to vector<4x16xf32>
    %60 = arith.addf %57, %59 : vector<4x16xf32>
    %c0_i32_38 = arith.constant 0 : i32
    %61 = arith.cmpi eq, %arg0, %c0_i32_38 : i32
    %c0_i32_39 = arith.constant 0 : i32
    %62 = arith.cmpi eq, %arg1, %c0_i32_39 : i32
    %63 = arith.andi %61, %62 : i1
    %64 = arith.extui %63 : i1 to i32
    %c0_i32_40 = arith.constant 0 : i32
    %65 = arith.cmpi ne, %64, %c0_i32_40 : i32
    scf.if %65 {
      %cst_55 = arith.constant 0.000000e+00 : f32
      %81 = vector.broadcast %cst_55 : f32 to vector<2x16xf32>
      %c0_56 = arith.constant 0 : index
      %c0_57 = arith.constant 0 : index
      %82 = vector.load %arg6[%c0_56, %c0_57] : memref<2x16xf32, #tpu.memory_space<vmem>>, vector<2x16xf32>
      tpu.vector_store %arg6[%c0_56, %c0_57], %81 {strides = array<i32>} : memref<2x16xf32, #tpu.memory_space<vmem>>, vector<2x16xf32>,
    } else {
    }
    %c0_41 = arith.constant 0 : index
    %c0_42 = arith.constant 0 : index
    %66 = vector.load %arg6[%c0_41, %c0_42] : memref<2x16xf32, #tpu.memory_space<vmem>>, vector<1x16xf32>
    %cst_43 = arith.constant dense<0.000000e+00> : vector<16xf32>
    %67 = vector.multi_reduction <add>, %60, %cst_43 [0] : vector<4x16xf32> to vector<16xf32>
    %68 = vector.shape_cast %67 : vector<16xf32> to vector<1x16xf32>
    %69 = arith.addf %66, %68 : vector<1x16xf32>
    %c0_44 = arith.constant 0 : index
    %c0_45 = arith.constant 0 : index
    %70 = vector.load %arg6[%c0_44, %c0_45] : memref<2x16xf32, #tpu.memory_space<vmem>>, vector<1x16xf32>
    tpu.vector_store %arg6[%c0_44, %c0_45], %69 {strides = array<i32>} : memref<2x16xf32, #tpu.memory_space<vmem>>, vector<1x16xf32>,
    %c1_46 = arith.constant 1 : index
    %c0_47 = arith.constant 0 : index
    %71 = vector.load %arg6[%c1_46, %c0_47] : memref<2x16xf32, #tpu.memory_space<vmem>>, vector<1x16xf32>
    %72 = arith.mulf %60, %60 : vector<4x16xf32>
    %cst_48 = arith.constant dense<0.000000e+00> : vector<16xf32>
    %73 = vector.multi_reduction <add>, %72, %cst_48 [0] : vector<4x16xf32> to vector<16xf32>
    %74 = vector.shape_cast %73 : vector<16xf32> to vector<1x16xf32>
    %75 = arith.addf %71, %74 : vector<1x16xf32>
    %c1_49 = arith.constant 1 : index
    %c0_50 = arith.constant 0 : index
    %76 = vector.load %arg6[%c1_49, %c0_50] : memref<2x16xf32, #tpu.memory_space<vmem>>, vector<1x16xf32>
    tpu.vector_store %arg6[%c1_49, %c0_50], %75 {strides = array<i32>} : memref<2x16xf32, #tpu.memory_space<vmem>>, vector<1x16xf32>,
    %77 = arith.truncf %60 : vector<4x16xf32> to vector<4x16xbf16>
    %c0_51 = arith.constant 0 : index
    %c0_52 = arith.constant 0 : index
    %c0_53 = arith.constant 0 : index
    %c0_54 = arith.constant 0 : index
    %78 = vector.load %arg5[%c0_51, %c0_52, %c0_53, %c0_54] : memref<1x1x4x16xbf16, #tpu.memory_space<vmem>>, vector<1x1x4x16xbf16>
    %79 = vector.shape_cast %78 : vector<1x1x4x16xbf16> to vector<4x16xbf16>
    %80 = vector.shape_cast %77 : vector<4x16xbf16> to vector<1x1x4x16xbf16>
    tpu.vector_store %arg5[%c0_51, %c0_52, %c0_53, %c0_54], %80 {strides = array<i32>} : memref<1x1x4x16xbf16, #tpu.memory_space<vmem>>, vector<1x1x4x16xbf16>,
    return
  }
  func.func @transform_0(%arg0: i32, %arg1: i32) -> (i32, i32, i32, i32) {
    %c0_i32 = arith.constant 0 : i32
    %c0_i32_0 = arith.constant 0 : i32
    %c0_i32_1 = arith.constant 0 : i32
    %c0_i32_2 = arith.constant 0 : i32
    return %arg0, %c0_i32, %c0_i32_0, %c0_i32_1 : i32, i32, i32, i32
  }
  func.func @transform_1(%arg0: i32, %arg1: i32) -> (i32, i32, i32) {
    %c0_i32 = arith.constant 0 : i32
    %c0_i32_0 = arith.constant 0 : i32
    %c0_i32_1 = arith.constant 0 : i32
    %c0_i32_2 = arith.constant 0 : i32
    return %c0_i32, %c0_i32_0, %c0_i32_1 : i32, i32, i32
  }
  func.func @transform_2(%arg0: i32, %arg1: i32) -> (i32, i32) {
    %c0_i32 = arith.constant 0 : i32
    %c0_i32_0 = arith.constant 0 : i32
    %c0_i32_1 = arith.constant 0 : i32
    return %c0_i32, %c0_i32_0 : i32, i32
  }
  func.func @transform_3(%arg0: i32, %arg1: i32) -> (i32, i32, i32, i32) {
    %c0_i32 = arith.constant 0 : i32
    %c0_i32_0 = arith.constant 0 : i32
    %c0_i32_1 = arith.constant 0 : i32
    return %arg0, %arg1, %c0_i32, %c0_i32_0 : i32, i32, i32, i32
  }
  func.func @transform_4(%arg0: i32, %arg1: i32) -> (i32, i32) {
    %c0_i32 = arith.constant 0 : i32
    %c0_i32_0 = arith.constant 0 : i32
    %c0_i32_1 = arith.constant 0 : i32
    return %c0_i32, %c0_i32_0 : i32, i32
  }
}

module attributes {stable_mosaic.version = 11 : i64} {
  func.func @_bn_act_kernel(%arg0: i32, %arg1: memref<32x16xbf16, #tpu.memory_space<vmem>>, %arg2: memref<2x16xf32, #tpu.memory_space<vmem>>, %arg3: memref<1x16xf32, #tpu.memory_space<vmem>>, %arg4: memref<1x16xf32, #tpu.memory_space<vmem>>, %arg5: memref<32x16xbf16, #tpu.memory_space<vmem>>) attributes {dimension_semantics = [#tpu.dimension_semantics<parallel>], iteration_bounds = array<i64: 1>, scalar_prefetch = 0 : i64, scratch_operands = 0 : i64, tpu.core_type = #tpu.core_type<tc>, window_params = [{transform_indices = @transform_0, window_bounds = array<i64: 32, 16>}, {pipeline_mode = #tpu.pipeline_mode<synchronous>, transform_indices = @transform_1, window_bounds = array<i64: 2, 16>}, {pipeline_mode = #tpu.pipeline_mode<synchronous>, transform_indices = @transform_2, window_bounds = array<i64: 1, 16>}, {pipeline_mode = #tpu.pipeline_mode<synchronous>, transform_indices = @transform_3, window_bounds = array<i64: 1, 16>}, {transform_indices = @transform_4, window_bounds = array<i64: 32, 16>}]} {
    %c0 = arith.constant 0 : index
    %c0_0 = arith.constant 0 : index
    %0 = vector.load %arg2[%c0, %c0_0] : memref<2x16xf32, #tpu.memory_space<vmem>>, vector<1x16xf32>
    %cst = arith.constant 3.125000e-02 : f32
    %1 = vector.broadcast %cst : f32 to vector<1x16xf32>
    %2 = arith.mulf %0, %1 : vector<1x16xf32>
    %c1 = arith.constant 1 : index
    %c0_1 = arith.constant 0 : index
    %3 = vector.load %arg2[%c1, %c0_1] : memref<2x16xf32, #tpu.memory_space<vmem>>, vector<1x16xf32>
    %cst_2 = arith.constant 3.125000e-02 : f32
    %4 = vector.broadcast %cst_2 : f32 to vector<1x16xf32>
    %5 = arith.mulf %3, %4 : vector<1x16xf32>
    %6 = arith.mulf %2, %2 : vector<1x16xf32>
    %7 = arith.subf %5, %6 : vector<1x16xf32>
    %cst_3 = arith.constant 0.000000e+00 : f32
    %8 = vector.broadcast %cst_3 : f32 to vector<1x16xf32>
    %9 = arith.maximumf %7, %8 : vector<1x16xf32>
    %c0_4 = arith.constant 0 : index
    %c0_5 = arith.constant 0 : index
    %10 = vector.load %arg3[%c0_4, %c0_5] : memref<1x16xf32, #tpu.memory_space<vmem>>, vector<1x16xf32>
    %cst_6 = arith.constant 9.99999974E-6 : f32
    %11 = vector.broadcast %cst_6 : f32 to vector<1x16xf32>
    %12 = arith.addf %9, %11 : vector<1x16xf32>
    %13 = math.rsqrt %12 : vector<1x16xf32>
    %14 = arith.mulf %10, %13 : vector<1x16xf32>
    %c0_7 = arith.constant 0 : index
    %c0_8 = arith.constant 0 : index
    %15 = vector.load %arg4[%c0_7, %c0_8] : memref<1x16xf32, #tpu.memory_space<vmem>>, vector<1x16xf32>
    %16 = arith.mulf %2, %14 : vector<1x16xf32>
    %17 = arith.subf %15, %16 : vector<1x16xf32>
    %c0_9 = arith.constant 0 : index
    %c0_10 = arith.constant 0 : index
    %18 = vector.load %arg1[%c0_9, %c0_10] : memref<32x16xbf16, #tpu.memory_space<vmem>>, vector<32x16xbf16>
    %19 = arith.extf %18 : vector<32x16xbf16> to vector<32x16xf32>
    %20 = vector.broadcast %14 : vector<1x16xf32> to vector<32x16xf32>
    %21 = arith.mulf %19, %20 : vector<32x16xf32>
    %22 = vector.broadcast %17 : vector<1x16xf32> to vector<32x16xf32>
    %23 = arith.addf %21, %22 : vector<32x16xf32>
    %cst_11 = arith.constant 0.000000e+00 : f32
    %24 = vector.broadcast %cst_11 : f32 to vector<32x16xf32>
    %25 = arith.maximumf %23, %24 : vector<32x16xf32>
    %26 = arith.truncf %25 : vector<32x16xf32> to vector<32x16xbf16>
    %c0_12 = arith.constant 0 : index
    %c0_13 = arith.constant 0 : index
    %27 = vector.load %arg5[%c0_12, %c0_13] : memref<32x16xbf16, #tpu.memory_space<vmem>>, vector<32x16xbf16>
    tpu.vector_store %arg5[%c0_12, %c0_13], %26 {strides = array<i32>} : memref<32x16xbf16, #tpu.memory_space<vmem>>, vector<32x16xbf16>,
    return
  }
  func.func @transform_0(%arg0: i32) -> (i32, i32) {
    %c0_i32 = arith.constant 0 : i32
    %c0_i32_0 = arith.constant 0 : i32
    return %arg0, %c0_i32 : i32, i32
  }
  func.func @transform_1(%arg0: i32) -> (i32, i32) {
    %c0_i32 = arith.constant 0 : i32
    %c0_i32_0 = arith.constant 0 : i32
    %c0_i32_1 = arith.constant 0 : i32
    return %c0_i32, %c0_i32_0 : i32, i32
  }
  func.func @transform_2(%arg0: i32) -> (i32, i32) {
    %c0_i32 = arith.constant 0 : i32
    %c0_i32_0 = arith.constant 0 : i32
    %c0_i32_1 = arith.constant 0 : i32
    return %c0_i32, %c0_i32_0 : i32, i32
  }
  func.func @transform_3(%arg0: i32) -> (i32, i32) {
    %c0_i32 = arith.constant 0 : i32
    %c0_i32_0 = arith.constant 0 : i32
    %c0_i32_1 = arith.constant 0 : i32
    return %c0_i32, %c0_i32_0 : i32, i32
  }
  func.func @transform_4(%arg0: i32) -> (i32, i32) {
    %c0_i32 = arith.constant 0 : i32
    %c0_i32_0 = arith.constant 0 : i32
    return %arg0, %c0_i32 : i32, i32
  }
}

module attributes {stable_mosaic.version = 11 : i64} {
  func.func @_conv_row_kernel(%arg0: i32, %arg1: i32, %arg2: memref<1x10x10x32xbf16, #tpu.memory_space<vmem>>, %arg3: memref<9x32x8xbf16, #tpu.memory_space<vmem>>, %arg4: memref<1x8xf32, #tpu.memory_space<vmem>>, %arg5: memref<1x1x8x8xbf16, #tpu.memory_space<vmem>>, %arg6: memref<2x8xf32, #tpu.memory_space<vmem>>) attributes {dimension_semantics = [#tpu.dimension_semantics<arbitrary>, #tpu.dimension_semantics<arbitrary>], iteration_bounds = array<i64: 2, 8>, scalar_prefetch = 0 : i64, scratch_operands = 0 : i64, tpu.core_type = #tpu.core_type<tc>, window_params = [{transform_indices = @transform_0, window_bounds = array<i64: 1, 10, 10, 32>}, {pipeline_mode = #tpu.pipeline_mode<synchronous>, transform_indices = @transform_1, window_bounds = array<i64: 9, 32, 8>}, {pipeline_mode = #tpu.pipeline_mode<synchronous>, transform_indices = @transform_2, window_bounds = array<i64: 1, 8>}, {transform_indices = @transform_3, window_bounds = array<i64: 1, 1, 8, 8>}, {pipeline_mode = #tpu.pipeline_mode<synchronous>, transform_indices = @transform_4, window_bounds = array<i64: 2, 8>}]} {
    %cst = arith.constant 0.000000e+00 : f32
    %0 = vector.broadcast %cst : f32 to vector<8x8xf32>
    %c0_i32 = arith.constant 0 : i32
    %1 = arith.addi %arg1, %c0_i32 : i32
    %c0 = arith.constant 0 : index
    %2 = arith.index_cast %1 : i32 to index
    %c0_0 = arith.constant 0 : index
    %c0_1 = arith.constant 0 : index
    %3 = vector.load %arg2[%c0, %2, %c0_0, %c0_1] : memref<1x10x10x32xbf16, #tpu.memory_space<vmem>>, vector<1x1x10x32xbf16>
    %4 = vector.shape_cast %3 : vector<1x1x10x32xbf16> to vector<10x32xbf16>
    %c0_2 = arith.constant 0 : index
    %c0_3 = arith.constant 0 : index
    %c0_4 = arith.constant 0 : index
    %5 = vector.load %arg3[%c0_2, %c0_3, %c0_4] : memref<9x32x8xbf16, #tpu.memory_space<vmem>>, vector<1x32x8xbf16>
    %6 = vector.shape_cast %5 : vector<1x32x8xbf16> to vector<32x8xbf16>
    %cst_5 = arith.constant dense<0.000000e+00> : vector<10x8xf32>
    %7 = tpu.matmul %4, %6, %cst_5 {dimension_numbers = #tpu.dot_dimension_numbers<[1], [0], [0], [1], [0, 0, 1, 1], [], []>} : vector<10x32xbf16>, vector<32x8xbf16>, vector<10x8xf32> -> vector<10x8xf32>
    %8 = vector.extract_strided_slice %7 {offsets = [0, 0], sizes = [8, 8], strides = [1, 1]} : vector<10x8xf32> to vector<8x8xf32>
    %9 = arith.addf %0, %8 : vector<8x8xf32>
    %c1 = arith.constant 1 : index
    %c0_6 = arith.constant 0 : index
    %c0_7 = arith.constant 0 : index
    %10 = vector.load %arg3[%c1, %c0_6, %c0_7] : memref<9x32x8xbf16, #tpu.memory_space<vmem>>, vector<1x32x8xbf16>
    %11 = vector.shape_cast %10 : vector<1x32x8xbf16> to vector<32x8xbf16>
    %cst_8 = arith.constant dense<0.000000e+00> : vector<10x8xf32>
    %12 = tpu.matmul %4, %11, %cst_8 {dimension_numbers = #tpu.dot_dimension_numbers<[1], [0], [0], [1], [0, 0, 1, 1], [], []>} : vector<10x32xbf16>, vector<32x8xbf16>, vector<10x8xf32> -> vector<10x8xf32>
    %13 = vector.extract_strided_slice %12 {offsets = [1, 0], sizes = [8, 8], strides = [1, 1]} : vector<10x8xf32> to vector<8x8xf32>
    %14 = arith.addf %9, %13 : vector<8x8xf32>
    %c2 = arith.constant 2 : index
    %c0_9 = arith.constant 0 : index
    %c0_10 = arith.constant 0 : index
    %15 = vector.load %arg3[%c2, %c0_9, %c0_10] : memref<9x32x8xbf16, #tpu.memory_space<vmem>>, vector<1x32x8xbf16>
    %16 = vector.shape_cast %15 : vector<1x32x8xbf16> to vector<32x8xbf16>
    %cst_11 = arith.constant dense<0.000000e+00> : vector<10x8xf32>
    %17 = tpu.matmul %4, %16, %cst_11 {dimension_numbers = #tpu.dot_dimension_numbers<[1], [0], [0], [1], [0, 0, 1, 1], [], []>} : vector<10x32xbf16>, vector<32x8xbf16>, vector<10x8xf32> -> vector<10x8xf32>
    %18 = vector.extract_strided_slice %17 {offsets = [2, 0], sizes = [8, 8], strides = [1, 1]} : vector<10x8xf32> to vector<8x8xf32>
    %19 = arith.addf %14, %18 : vector<8x8xf32>
    %c1_i32 = arith.constant 1 : i32
    %20 = arith.addi %arg1, %c1_i32 : i32
    %c0_12 = arith.constant 0 : index
    %21 = arith.index_cast %20 : i32 to index
    %c0_13 = arith.constant 0 : index
    %c0_14 = arith.constant 0 : index
    %22 = vector.load %arg2[%c0_12, %21, %c0_13, %c0_14] : memref<1x10x10x32xbf16, #tpu.memory_space<vmem>>, vector<1x1x10x32xbf16>
    %23 = vector.shape_cast %22 : vector<1x1x10x32xbf16> to vector<10x32xbf16>
    %c3 = arith.constant 3 : index
    %c0_15 = arith.constant 0 : index
    %c0_16 = arith.constant 0 : index
    %24 = vector.load %arg3[%c3, %c0_15, %c0_16] : memref<9x32x8xbf16, #tpu.memory_space<vmem>>, vector<1x32x8xbf16>
    %25 = vector.shape_cast %24 : vector<1x32x8xbf16> to vector<32x8xbf16>
    %cst_17 = arith.constant dense<0.000000e+00> : vector<10x8xf32>
    %26 = tpu.matmul %23, %25, %cst_17 {dimension_numbers = #tpu.dot_dimension_numbers<[1], [0], [0], [1], [0, 0, 1, 1], [], []>} : vector<10x32xbf16>, vector<32x8xbf16>, vector<10x8xf32> -> vector<10x8xf32>
    %27 = vector.extract_strided_slice %26 {offsets = [0, 0], sizes = [8, 8], strides = [1, 1]} : vector<10x8xf32> to vector<8x8xf32>
    %28 = arith.addf %19, %27 : vector<8x8xf32>
    %c4 = arith.constant 4 : index
    %c0_18 = arith.constant 0 : index
    %c0_19 = arith.constant 0 : index
    %29 = vector.load %arg3[%c4, %c0_18, %c0_19] : memref<9x32x8xbf16, #tpu.memory_space<vmem>>, vector<1x32x8xbf16>
    %30 = vector.shape_cast %29 : vector<1x32x8xbf16> to vector<32x8xbf16>
    %cst_20 = arith.constant dense<0.000000e+00> : vector<10x8xf32>
    %31 = tpu.matmul %23, %30, %cst_20 {dimension_numbers = #tpu.dot_dimension_numbers<[1], [0], [0], [1], [0, 0, 1, 1], [], []>} : vector<10x32xbf16>, vector<32x8xbf16>, vector<10x8xf32> -> vector<10x8xf32>
    %32 = vector.extract_strided_slice %31 {offsets = [1, 0], sizes = [8, 8], strides = [1, 1]} : vector<10x8xf32> to vector<8x8xf32>
    %33 = arith.addf %28, %32 : vector<8x8xf32>
    %c5 = arith.constant 5 : index
    %c0_21 = arith.constant 0 : index
    %c0_22 = arith.constant 0 : index
    %34 = vector.load %arg3[%c5, %c0_21, %c0_22] : memref<9x32x8xbf16, #tpu.memory_space<vmem>>, vector<1x32x8xbf16>
    %35 = vector.shape_cast %34 : vector<1x32x8xbf16> to vector<32x8xbf16>
    %cst_23 = arith.constant dense<0.000000e+00> : vector<10x8xf32>
    %36 = tpu.matmul %23, %35, %cst_23 {dimension_numbers = #tpu.dot_dimension_numbers<[1], [0], [0], [1], [0, 0, 1, 1], [], []>} : vector<10x32xbf16>, vector<32x8xbf16>, vector<10x8xf32> -> vector<10x8xf32>
    %37 = vector.extract_strided_slice %36 {offsets = [2, 0], sizes = [8, 8], strides = [1, 1]} : vector<10x8xf32> to vector<8x8xf32>
    %38 = arith.addf %33, %37 : vector<8x8xf32>
    %c2_i32 = arith.constant 2 : i32
    %39 = arith.addi %arg1, %c2_i32 : i32
    %c0_24 = arith.constant 0 : index
    %40 = arith.index_cast %39 : i32 to index
    %c0_25 = arith.constant 0 : index
    %c0_26 = arith.constant 0 : index
    %41 = vector.load %arg2[%c0_24, %40, %c0_25, %c0_26] : memref<1x10x10x32xbf16, #tpu.memory_space<vmem>>, vector<1x1x10x32xbf16>
    %42 = vector.shape_cast %41 : vector<1x1x10x32xbf16> to vector<10x32xbf16>
    %c6 = arith.constant 6 : index
    %c0_27 = arith.constant 0 : index
    %c0_28 = arith.constant 0 : index
    %43 = vector.load %arg3[%c6, %c0_27, %c0_28] : memref<9x32x8xbf16, #tpu.memory_space<vmem>>, vector<1x32x8xbf16>
    %44 = vector.shape_cast %43 : vector<1x32x8xbf16> to vector<32x8xbf16>
    %cst_29 = arith.constant dense<0.000000e+00> : vector<10x8xf32>
    %45 = tpu.matmul %42, %44, %cst_29 {dimension_numbers = #tpu.dot_dimension_numbers<[1], [0], [0], [1], [0, 0, 1, 1], [], []>} : vector<10x32xbf16>, vector<32x8xbf16>, vector<10x8xf32> -> vector<10x8xf32>
    %46 = vector.extract_strided_slice %45 {offsets = [0, 0], sizes = [8, 8], strides = [1, 1]} : vector<10x8xf32> to vector<8x8xf32>
    %47 = arith.addf %38, %46 : vector<8x8xf32>
    %c7 = arith.constant 7 : index
    %c0_30 = arith.constant 0 : index
    %c0_31 = arith.constant 0 : index
    %48 = vector.load %arg3[%c7, %c0_30, %c0_31] : memref<9x32x8xbf16, #tpu.memory_space<vmem>>, vector<1x32x8xbf16>
    %49 = vector.shape_cast %48 : vector<1x32x8xbf16> to vector<32x8xbf16>
    %cst_32 = arith.constant dense<0.000000e+00> : vector<10x8xf32>
    %50 = tpu.matmul %42, %49, %cst_32 {dimension_numbers = #tpu.dot_dimension_numbers<[1], [0], [0], [1], [0, 0, 1, 1], [], []>} : vector<10x32xbf16>, vector<32x8xbf16>, vector<10x8xf32> -> vector<10x8xf32>
    %51 = vector.extract_strided_slice %50 {offsets = [1, 0], sizes = [8, 8], strides = [1, 1]} : vector<10x8xf32> to vector<8x8xf32>
    %52 = arith.addf %47, %51 : vector<8x8xf32>
    %c8 = arith.constant 8 : index
    %c0_33 = arith.constant 0 : index
    %c0_34 = arith.constant 0 : index
    %53 = vector.load %arg3[%c8, %c0_33, %c0_34] : memref<9x32x8xbf16, #tpu.memory_space<vmem>>, vector<1x32x8xbf16>
    %54 = vector.shape_cast %53 : vector<1x32x8xbf16> to vector<32x8xbf16>
    %cst_35 = arith.constant dense<0.000000e+00> : vector<10x8xf32>
    %55 = tpu.matmul %42, %54, %cst_35 {dimension_numbers = #tpu.dot_dimension_numbers<[1], [0], [0], [1], [0, 0, 1, 1], [], []>} : vector<10x32xbf16>, vector<32x8xbf16>, vector<10x8xf32> -> vector<10x8xf32>
    %56 = vector.extract_strided_slice %55 {offsets = [2, 0], sizes = [8, 8], strides = [1, 1]} : vector<10x8xf32> to vector<8x8xf32>
    %57 = arith.addf %52, %56 : vector<8x8xf32>
    %c0_36 = arith.constant 0 : index
    %c0_37 = arith.constant 0 : index
    %58 = vector.load %arg4[%c0_36, %c0_37] : memref<1x8xf32, #tpu.memory_space<vmem>>, vector<1x8xf32>
    %59 = vector.broadcast %58 : vector<1x8xf32> to vector<8x8xf32>
    %60 = arith.addf %57, %59 : vector<8x8xf32>
    %c0_i32_38 = arith.constant 0 : i32
    %61 = arith.cmpi eq, %arg0, %c0_i32_38 : i32
    %c0_i32_39 = arith.constant 0 : i32
    %62 = arith.cmpi eq, %arg1, %c0_i32_39 : i32
    %63 = arith.andi %61, %62 : i1
    %64 = arith.extui %63 : i1 to i32
    %c0_i32_40 = arith.constant 0 : i32
    %65 = arith.cmpi ne, %64, %c0_i32_40 : i32
    scf.if %65 {
      %cst_55 = arith.constant 0.000000e+00 : f32
      %81 = vector.broadcast %cst_55 : f32 to vector<2x8xf32>
      %c0_56 = arith.constant 0 : index
      %c0_57 = arith.constant 0 : index
      %82 = vector.load %arg6[%c0_56, %c0_57] : memref<2x8xf32, #tpu.memory_space<vmem>>, vector<2x8xf32>
      tpu.vector_store %arg6[%c0_56, %c0_57], %81 {strides = array<i32>} : memref<2x8xf32, #tpu.memory_space<vmem>>, vector<2x8xf32>,
    } else {
    }
    %c0_41 = arith.constant 0 : index
    %c0_42 = arith.constant 0 : index
    %66 = vector.load %arg6[%c0_41, %c0_42] : memref<2x8xf32, #tpu.memory_space<vmem>>, vector<1x8xf32>
    %cst_43 = arith.constant dense<0.000000e+00> : vector<8xf32>
    %67 = vector.multi_reduction <add>, %60, %cst_43 [0] : vector<8x8xf32> to vector<8xf32>
    %68 = vector.shape_cast %67 : vector<8xf32> to vector<1x8xf32>
    %69 = arith.addf %66, %68 : vector<1x8xf32>
    %c0_44 = arith.constant 0 : index
    %c0_45 = arith.constant 0 : index
    %70 = vector.load %arg6[%c0_44, %c0_45] : memref<2x8xf32, #tpu.memory_space<vmem>>, vector<1x8xf32>
    tpu.vector_store %arg6[%c0_44, %c0_45], %69 {strides = array<i32>} : memref<2x8xf32, #tpu.memory_space<vmem>>, vector<1x8xf32>,
    %c1_46 = arith.constant 1 : index
    %c0_47 = arith.constant 0 : index
    %71 = vector.load %arg6[%c1_46, %c0_47] : memref<2x8xf32, #tpu.memory_space<vmem>>, vector<1x8xf32>
    %72 = arith.mulf %60, %60 : vector<8x8xf32>
    %cst_48 = arith.constant dense<0.000000e+00> : vector<8xf32>
    %73 = vector.multi_reduction <add>, %72, %cst_48 [0] : vector<8x8xf32> to vector<8xf32>
    %74 = vector.shape_cast %73 : vector<8xf32> to vector<1x8xf32>
    %75 = arith.addf %71, %74 : vector<1x8xf32>
    %c1_49 = arith.constant 1 : index
    %c0_50 = arith.constant 0 : index
    %76 = vector.load %arg6[%c1_49, %c0_50] : memref<2x8xf32, #tpu.memory_space<vmem>>, vector<1x8xf32>
    tpu.vector_store %arg6[%c1_49, %c0_50], %75 {strides = array<i32>} : memref<2x8xf32, #tpu.memory_space<vmem>>, vector<1x8xf32>,
    %77 = arith.truncf %60 : vector<8x8xf32> to vector<8x8xbf16>
    %c0_51 = arith.constant 0 : index
    %c0_52 = arith.constant 0 : index
    %c0_53 = arith.constant 0 : index
    %c0_54 = arith.constant 0 : index
    %78 = vector.load %arg5[%c0_51, %c0_52, %c0_53, %c0_54] : memref<1x1x8x8xbf16, #tpu.memory_space<vmem>>, vector<1x1x8x8xbf16>
    %79 = vector.shape_cast %78 : vector<1x1x8x8xbf16> to vector<8x8xbf16>
    %80 = vector.shape_cast %77 : vector<8x8xbf16> to vector<1x1x8x8xbf16>
    tpu.vector_store %arg5[%c0_51, %c0_52, %c0_53, %c0_54], %80 {strides = array<i32>} : memref<1x1x8x8xbf16, #tpu.memory_space<vmem>>, vector<1x1x8x8xbf16>,
    return
  }
  func.func @transform_0(%arg0: i32, %arg1: i32) -> (i32, i32, i32, i32) {
    %c0_i32 = arith.constant 0 : i32
    %c0_i32_0 = arith.constant 0 : i32
    %c0_i32_1 = arith.constant 0 : i32
    %c0_i32_2 = arith.constant 0 : i32
    return %arg0, %c0_i32, %c0_i32_0, %c0_i32_1 : i32, i32, i32, i32
  }
  func.func @transform_1(%arg0: i32, %arg1: i32) -> (i32, i32, i32) {
    %c0_i32 = arith.constant 0 : i32
    %c0_i32_0 = arith.constant 0 : i32
    %c0_i32_1 = arith.constant 0 : i32
    %c0_i32_2 = arith.constant 0 : i32
    return %c0_i32, %c0_i32_0, %c0_i32_1 : i32, i32, i32
  }
  func.func @transform_2(%arg0: i32, %arg1: i32) -> (i32, i32) {
    %c0_i32 = arith.constant 0 : i32
    %c0_i32_0 = arith.constant 0 : i32
    %c0_i32_1 = arith.constant 0 : i32
    return %c0_i32, %c0_i32_0 : i32, i32
  }
  func.func @transform_3(%arg0: i32, %arg1: i32) -> (i32, i32, i32, i32) {
    %c0_i32 = arith.constant 0 : i32
    %c0_i32_0 = arith.constant 0 : i32
    %c0_i32_1 = arith.constant 0 : i32
    return %arg0, %arg1, %c0_i32, %c0_i32_0 : i32, i32, i32, i32
  }
  func.func @transform_4(%arg0: i32, %arg1: i32) -> (i32, i32) {
    %c0_i32 = arith.constant 0 : i32
    %c0_i32_0 = arith.constant 0 : i32
    %c0_i32_1 = arith.constant 0 : i32
    return %c0_i32, %c0_i32_0 : i32, i32
  }
}

module attributes {stable_mosaic.version = 11 : i64} {
  func.func @_bn_act_kernel(%arg0: i32, %arg1: memref<128x8xbf16, #tpu.memory_space<vmem>>, %arg2: memref<2x8xf32, #tpu.memory_space<vmem>>, %arg3: memref<1x8xf32, #tpu.memory_space<vmem>>, %arg4: memref<1x8xf32, #tpu.memory_space<vmem>>, %arg5: memref<128x8xbf16, #tpu.memory_space<vmem>>) attributes {dimension_semantics = [#tpu.dimension_semantics<parallel>], iteration_bounds = array<i64: 1>, scalar_prefetch = 0 : i64, scratch_operands = 0 : i64, tpu.core_type = #tpu.core_type<tc>, window_params = [{transform_indices = @transform_0, window_bounds = array<i64: 128, 8>}, {pipeline_mode = #tpu.pipeline_mode<synchronous>, transform_indices = @transform_1, window_bounds = array<i64: 2, 8>}, {pipeline_mode = #tpu.pipeline_mode<synchronous>, transform_indices = @transform_2, window_bounds = array<i64: 1, 8>}, {pipeline_mode = #tpu.pipeline_mode<synchronous>, transform_indices = @transform_3, window_bounds = array<i64: 1, 8>}, {transform_indices = @transform_4, window_bounds = array<i64: 128, 8>}]} {
    %c0 = arith.constant 0 : index
    %c0_0 = arith.constant 0 : index
    %0 = vector.load %arg2[%c0, %c0_0] : memref<2x8xf32, #tpu.memory_space<vmem>>, vector<1x8xf32>
    %cst = arith.constant 7.812500e-03 : f32
    %1 = vector.broadcast %cst : f32 to vector<1x8xf32>
    %2 = arith.mulf %0, %1 : vector<1x8xf32>
    %c1 = arith.constant 1 : index
    %c0_1 = arith.constant 0 : index
    %3 = vector.load %arg2[%c1, %c0_1] : memref<2x8xf32, #tpu.memory_space<vmem>>, vector<1x8xf32>
    %cst_2 = arith.constant 7.812500e-03 : f32
    %4 = vector.broadcast %cst_2 : f32 to vector<1x8xf32>
    %5 = arith.mulf %3, %4 : vector<1x8xf32>
    %6 = arith.mulf %2, %2 : vector<1x8xf32>
    %7 = arith.subf %5, %6 : vector<1x8xf32>
    %cst_3 = arith.constant 0.000000e+00 : f32
    %8 = vector.broadcast %cst_3 : f32 to vector<1x8xf32>
    %9 = arith.maximumf %7, %8 : vector<1x8xf32>
    %c0_4 = arith.constant 0 : index
    %c0_5 = arith.constant 0 : index
    %10 = vector.load %arg3[%c0_4, %c0_5] : memref<1x8xf32, #tpu.memory_space<vmem>>, vector<1x8xf32>
    %cst_6 = arith.constant 9.99999974E-6 : f32
    %11 = vector.broadcast %cst_6 : f32 to vector<1x8xf32>
    %12 = arith.addf %9, %11 : vector<1x8xf32>
    %13 = math.rsqrt %12 : vector<1x8xf32>
    %14 = arith.mulf %10, %13 : vector<1x8xf32>
    %c0_7 = arith.constant 0 : index
    %c0_8 = arith.constant 0 : index
    %15 = vector.load %arg4[%c0_7, %c0_8] : memref<1x8xf32, #tpu.memory_space<vmem>>, vector<1x8xf32>
    %16 = arith.mulf %2, %14 : vector<1x8xf32>
    %17 = arith.subf %15, %16 : vector<1x8xf32>
    %c0_9 = arith.constant 0 : index
    %c0_10 = arith.constant 0 : index
    %18 = vector.load %arg1[%c0_9, %c0_10] : memref<128x8xbf16, #tpu.memory_space<vmem>>, vector<128x8xbf16>
    %19 = arith.extf %18 : vector<128x8xbf16> to vector<128x8xf32>
    %20 = vector.broadcast %14 : vector<1x8xf32> to vector<128x8xf32>
    %21 = arith.mulf %19, %20 : vector<128x8xf32>
    %22 = vector.broadcast %17 : vector<1x8xf32> to vector<128x8xf32>
    %23 = arith.addf %21, %22 : vector<128x8xf32>
    %cst_11 = arith.constant 0.000000e+00 : f32
    %24 = vector.broadcast %cst_11 : f32 to vector<128x8xf32>
    %25 = arith.maximumf %23, %24 : vector<128x8xf32>
    %26 = arith.truncf %25 : vector<128x8xf32> to vector<128x8xbf16>
    %c0_12 = arith.constant 0 : index
    %c0_13 = arith.constant 0 : index
    %27 = vector.load %arg5[%c0_12, %c0_13] : memref<128x8xbf16, #tpu.memory_space<vmem>>, vector<128x8xbf16>
    tpu.vector_store %arg5[%c0_12, %c0_13], %26 {strides = array<i32>} : memref<128x8xbf16, #tpu.memory_space<vmem>>, vector<128x8xbf16>,
    return
  }
  func.func @transform_0(%arg0: i32) -> (i32, i32) {
    %c0_i32 = arith.constant 0 : i32
    %c0_i32_0 = arith.constant 0 : i32
    return %arg0, %c0_i32 : i32, i32
  }
  func.func @transform_1(%arg0: i32) -> (i32, i32) {
    %c0_i32 = arith.constant 0 : i32
    %c0_i32_0 = arith.constant 0 : i32
    %c0_i32_1 = arith.constant 0 : i32
    return %c0_i32, %c0_i32_0 : i32, i32
  }
  func.func @transform_2(%arg0: i32) -> (i32, i32) {
    %c0_i32 = arith.constant 0 : i32
    %c0_i32_0 = arith.constant 0 : i32
    %c0_i32_1 = arith.constant 0 : i32
    return %c0_i32, %c0_i32_0 : i32, i32
  }
  func.func @transform_3(%arg0: i32) -> (i32, i32) {
    %c0_i32 = arith.constant 0 : i32
    %c0_i32_0 = arith.constant 0 : i32
    %c0_i32_1 = arith.constant 0 : i32
    return %c0_i32, %c0_i32_0 : i32, i32
  }
  func.func @transform_4(%arg0: i32) -> (i32, i32) {
    %c0_i32 = arith.constant 0 : i32
    %c0_i32_0 = arith.constant 0 : i32
    return %arg0, %c0_i32 : i32, i32
  }
}

module attributes {stable_mosaic.version = 11 : i64} {
  func.func @_conv_row_kernel(%arg0: i32, %arg1: i32, %arg2: memref<1x18x18x16xbf16, #tpu.memory_space<vmem>>, %arg3: memref<9x16x8xbf16, #tpu.memory_space<vmem>>, %arg4: memref<1x8xf32, #tpu.memory_space<vmem>>, %arg5: memref<1x1x16x8xf32, #tpu.memory_space<vmem>>) attributes {dimension_semantics = [#tpu.dimension_semantics<parallel>, #tpu.dimension_semantics<arbitrary>], iteration_bounds = array<i64: 2, 16>, scalar_prefetch = 0 : i64, scratch_operands = 0 : i64, tpu.core_type = #tpu.core_type<tc>, window_params = [{transform_indices = @transform_0, window_bounds = array<i64: 1, 18, 18, 16>}, {pipeline_mode = #tpu.pipeline_mode<synchronous>, transform_indices = @transform_1, window_bounds = array<i64: 9, 16, 8>}, {pipeline_mode = #tpu.pipeline_mode<synchronous>, transform_indices = @transform_2, window_bounds = array<i64: 1, 8>}, {transform_indices = @transform_3, window_bounds = array<i64: 1, 1, 16, 8>}]} {
    %cst = arith.constant 0.000000e+00 : f32
    %0 = vector.broadcast %cst : f32 to vector<16x8xf32>
    %c0_i32 = arith.constant 0 : i32
    %1 = arith.addi %arg1, %c0_i32 : i32
    %c0 = arith.constant 0 : index
    %2 = arith.index_cast %1 : i32 to index
    %c0_0 = arith.constant 0 : index
    %c0_1 = arith.constant 0 : index
    %3 = vector.load %arg2[%c0, %2, %c0_0, %c0_1] : memref<1x18x18x16xbf16, #tpu.memory_space<vmem>>, vector<1x1x18x16xbf16>
    %4 = vector.shape_cast %3 : vector<1x1x18x16xbf16> to vector<18x16xbf16>
    %c0_2 = arith.constant 0 : index
    %c0_3 = arith.constant 0 : index
    %c0_4 = arith.constant 0 : index
    %5 = vector.load %arg3[%c0_2, %c0_3, %c0_4] : memref<9x16x8xbf16, #tpu.memory_space<vmem>>, vector<1x16x8xbf16>
    %6 = vector.shape_cast %5 : vector<1x16x8xbf16> to vector<16x8xbf16>
    %cst_5 = arith.constant dense<0.000000e+00> : vector<18x8xf32>
    %7 = tpu.matmul %4, %6, %cst_5 {dimension_numbers = #tpu.dot_dimension_numbers<[1], [0], [0], [1], [0, 0, 1, 1], [], []>} : vector<18x16xbf16>, vector<16x8xbf16>, vector<18x8xf32> -> vector<18x8xf32>
    %8 = vector.extract_strided_slice %7 {offsets = [0, 0], sizes = [16, 8], strides = [1, 1]} : vector<18x8xf32> to vector<16x8xf32>
    %9 = arith.addf %0, %8 : vector<16x8xf32>
    %c1 = arith.constant 1 : index
    %c0_6 = arith.constant 0 : index
    %c0_7 = arith.constant 0 : index
    %10 = vector.load %arg3[%c1, %c0_6, %c0_7] : memref<9x16x8xbf16, #tpu.memory_space<vmem>>, vector<1x16x8xbf16>
    %11 = vector.shape_cast %10 : vector<1x16x8xbf16> to vector<16x8xbf16>
    %cst_8 = arith.constant dense<0.000000e+00> : vector<18x8xf32>
    %12 = tpu.matmul %4, %11, %cst_8 {dimension_numbers = #tpu.dot_dimension_numbers<[1], [0], [0], [1], [0, 0, 1, 1], [], []>} : vector<18x16xbf16>, vector<16x8xbf16>, vector<18x8xf32> -> vector<18x8xf32>
    %13 = vector.extract_strided_slice %12 {offsets = [1, 0], sizes = [16, 8], strides = [1, 1]} : vector<18x8xf32> to vector<16x8xf32>
    %14 = arith.addf %9, %13 : vector<16x8xf32>
    %c2 = arith.constant 2 : index
    %c0_9 = arith.constant 0 : index
    %c0_10 = arith.constant 0 : index
    %15 = vector.load %arg3[%c2, %c0_9, %c0_10] : memref<9x16x8xbf16, #tpu.memory_space<vmem>>, vector<1x16x8xbf16>
    %16 = vector.shape_cast %15 : vector<1x16x8xbf16> to vector<16x8xbf16>
    %cst_11 = arith.constant dense<0.000000e+00> : vector<18x8xf32>
    %17 = tpu.matmul %4, %16, %cst_11 {dimension_numbers = #tpu.dot_dimension_numbers<[1], [0], [0], [1], [0, 0, 1, 1], [], []>} : vector<18x16xbf16>, vector<16x8xbf16>, vector<18x8xf32> -> vector<18x8xf32>
    %18 = vector.extract_strided_slice %17 {offsets = [2, 0], sizes = [16, 8], strides = [1, 1]} : vector<18x8xf32> to vector<16x8xf32>
    %19 = arith.addf %14, %18 : vector<16x8xf32>
    %c1_i32 = arith.constant 1 : i32
    %20 = arith.addi %arg1, %c1_i32 : i32
    %c0_12 = arith.constant 0 : index
    %21 = arith.index_cast %20 : i32 to index
    %c0_13 = arith.constant 0 : index
    %c0_14 = arith.constant 0 : index
    %22 = vector.load %arg2[%c0_12, %21, %c0_13, %c0_14] : memref<1x18x18x16xbf16, #tpu.memory_space<vmem>>, vector<1x1x18x16xbf16>
    %23 = vector.shape_cast %22 : vector<1x1x18x16xbf16> to vector<18x16xbf16>
    %c3 = arith.constant 3 : index
    %c0_15 = arith.constant 0 : index
    %c0_16 = arith.constant 0 : index
    %24 = vector.load %arg3[%c3, %c0_15, %c0_16] : memref<9x16x8xbf16, #tpu.memory_space<vmem>>, vector<1x16x8xbf16>
    %25 = vector.shape_cast %24 : vector<1x16x8xbf16> to vector<16x8xbf16>
    %cst_17 = arith.constant dense<0.000000e+00> : vector<18x8xf32>
    %26 = tpu.matmul %23, %25, %cst_17 {dimension_numbers = #tpu.dot_dimension_numbers<[1], [0], [0], [1], [0, 0, 1, 1], [], []>} : vector<18x16xbf16>, vector<16x8xbf16>, vector<18x8xf32> -> vector<18x8xf32>
    %27 = vector.extract_strided_slice %26 {offsets = [0, 0], sizes = [16, 8], strides = [1, 1]} : vector<18x8xf32> to vector<16x8xf32>
    %28 = arith.addf %19, %27 : vector<16x8xf32>
    %c4 = arith.constant 4 : index
    %c0_18 = arith.constant 0 : index
    %c0_19 = arith.constant 0 : index
    %29 = vector.load %arg3[%c4, %c0_18, %c0_19] : memref<9x16x8xbf16, #tpu.memory_space<vmem>>, vector<1x16x8xbf16>
    %30 = vector.shape_cast %29 : vector<1x16x8xbf16> to vector<16x8xbf16>
    %cst_20 = arith.constant dense<0.000000e+00> : vector<18x8xf32>
    %31 = tpu.matmul %23, %30, %cst_20 {dimension_numbers = #tpu.dot_dimension_numbers<[1], [0], [0], [1], [0, 0, 1, 1], [], []>} : vector<18x16xbf16>, vector<16x8xbf16>, vector<18x8xf32> -> vector<18x8xf32>
    %32 = vector.extract_strided_slice %31 {offsets = [1, 0], sizes = [16, 8], strides = [1, 1]} : vector<18x8xf32> to vector<16x8xf32>
    %33 = arith.addf %28, %32 : vector<16x8xf32>
    %c5 = arith.constant 5 : index
    %c0_21 = arith.constant 0 : index
    %c0_22 = arith.constant 0 : index
    %34 = vector.load %arg3[%c5, %c0_21, %c0_22] : memref<9x16x8xbf16, #tpu.memory_space<vmem>>, vector<1x16x8xbf16>
    %35 = vector.shape_cast %34 : vector<1x16x8xbf16> to vector<16x8xbf16>
    %cst_23 = arith.constant dense<0.000000e+00> : vector<18x8xf32>
    %36 = tpu.matmul %23, %35, %cst_23 {dimension_numbers = #tpu.dot_dimension_numbers<[1], [0], [0], [1], [0, 0, 1, 1], [], []>} : vector<18x16xbf16>, vector<16x8xbf16>, vector<18x8xf32> -> vector<18x8xf32>
    %37 = vector.extract_strided_slice %36 {offsets = [2, 0], sizes = [16, 8], strides = [1, 1]} : vector<18x8xf32> to vector<16x8xf32>
    %38 = arith.addf %33, %37 : vector<16x8xf32>
    %c2_i32 = arith.constant 2 : i32
    %39 = arith.addi %arg1, %c2_i32 : i32
    %c0_24 = arith.constant 0 : index
    %40 = arith.index_cast %39 : i32 to index
    %c0_25 = arith.constant 0 : index
    %c0_26 = arith.constant 0 : index
    %41 = vector.load %arg2[%c0_24, %40, %c0_25, %c0_26] : memref<1x18x18x16xbf16, #tpu.memory_space<vmem>>, vector<1x1x18x16xbf16>
    %42 = vector.shape_cast %41 : vector<1x1x18x16xbf16> to vector<18x16xbf16>
    %c6 = arith.constant 6 : index
    %c0_27 = arith.constant 0 : index
    %c0_28 = arith.constant 0 : index
    %43 = vector.load %arg3[%c6, %c0_27, %c0_28] : memref<9x16x8xbf16, #tpu.memory_space<vmem>>, vector<1x16x8xbf16>
    %44 = vector.shape_cast %43 : vector<1x16x8xbf16> to vector<16x8xbf16>
    %cst_29 = arith.constant dense<0.000000e+00> : vector<18x8xf32>
    %45 = tpu.matmul %42, %44, %cst_29 {dimension_numbers = #tpu.dot_dimension_numbers<[1], [0], [0], [1], [0, 0, 1, 1], [], []>} : vector<18x16xbf16>, vector<16x8xbf16>, vector<18x8xf32> -> vector<18x8xf32>
    %46 = vector.extract_strided_slice %45 {offsets = [0, 0], sizes = [16, 8], strides = [1, 1]} : vector<18x8xf32> to vector<16x8xf32>
    %47 = arith.addf %38, %46 : vector<16x8xf32>
    %c7 = arith.constant 7 : index
    %c0_30 = arith.constant 0 : index
    %c0_31 = arith.constant 0 : index
    %48 = vector.load %arg3[%c7, %c0_30, %c0_31] : memref<9x16x8xbf16, #tpu.memory_space<vmem>>, vector<1x16x8xbf16>
    %49 = vector.shape_cast %48 : vector<1x16x8xbf16> to vector<16x8xbf16>
    %cst_32 = arith.constant dense<0.000000e+00> : vector<18x8xf32>
    %50 = tpu.matmul %42, %49, %cst_32 {dimension_numbers = #tpu.dot_dimension_numbers<[1], [0], [0], [1], [0, 0, 1, 1], [], []>} : vector<18x16xbf16>, vector<16x8xbf16>, vector<18x8xf32> -> vector<18x8xf32>
    %51 = vector.extract_strided_slice %50 {offsets = [1, 0], sizes = [16, 8], strides = [1, 1]} : vector<18x8xf32> to vector<16x8xf32>
    %52 = arith.addf %47, %51 : vector<16x8xf32>
    %c8 = arith.constant 8 : index
    %c0_33 = arith.constant 0 : index
    %c0_34 = arith.constant 0 : index
    %53 = vector.load %arg3[%c8, %c0_33, %c0_34] : memref<9x16x8xbf16, #tpu.memory_space<vmem>>, vector<1x16x8xbf16>
    %54 = vector.shape_cast %53 : vector<1x16x8xbf16> to vector<16x8xbf16>
    %cst_35 = arith.constant dense<0.000000e+00> : vector<18x8xf32>
    %55 = tpu.matmul %42, %54, %cst_35 {dimension_numbers = #tpu.dot_dimension_numbers<[1], [0], [0], [1], [0, 0, 1, 1], [], []>} : vector<18x16xbf16>, vector<16x8xbf16>, vector<18x8xf32> -> vector<18x8xf32>
    %56 = vector.extract_strided_slice %55 {offsets = [2, 0], sizes = [16, 8], strides = [1, 1]} : vector<18x8xf32> to vector<16x8xf32>
    %57 = arith.addf %52, %56 : vector<16x8xf32>
    %c0_36 = arith.constant 0 : index
    %c0_37 = arith.constant 0 : index
    %58 = vector.load %arg4[%c0_36, %c0_37] : memref<1x8xf32, #tpu.memory_space<vmem>>, vector<1x8xf32>
    %59 = vector.broadcast %58 : vector<1x8xf32> to vector<16x8xf32>
    %60 = arith.addf %57, %59 : vector<16x8xf32>
    %61 = math.tanh %60 : vector<16x8xf32>
    %c0_38 = arith.constant 0 : index
    %c0_39 = arith.constant 0 : index
    %c0_40 = arith.constant 0 : index
    %c0_41 = arith.constant 0 : index
    %62 = vector.load %arg5[%c0_38, %c0_39, %c0_40, %c0_41] : memref<1x1x16x8xf32, #tpu.memory_space<vmem>>, vector<1x1x16x8xf32>
    %63 = vector.shape_cast %62 : vector<1x1x16x8xf32> to vector<16x8xf32>
    %64 = vector.shape_cast %61 : vector<16x8xf32> to vector<1x1x16x8xf32>
    tpu.vector_store %arg5[%c0_38, %c0_39, %c0_40, %c0_41], %64 {strides = array<i32>} : memref<1x1x16x8xf32, #tpu.memory_space<vmem>>, vector<1x1x16x8xf32>,
    return
  }
  func.func @transform_0(%arg0: i32, %arg1: i32) -> (i32, i32, i32, i32) {
    %c0_i32 = arith.constant 0 : i32
    %c0_i32_0 = arith.constant 0 : i32
    %c0_i32_1 = arith.constant 0 : i32
    %c0_i32_2 = arith.constant 0 : i32
    return %arg0, %c0_i32, %c0_i32_0, %c0_i32_1 : i32, i32, i32, i32
  }
  func.func @transform_1(%arg0: i32, %arg1: i32) -> (i32, i32, i32) {
    %c0_i32 = arith.constant 0 : i32
    %c0_i32_0 = arith.constant 0 : i32
    %c0_i32_1 = arith.constant 0 : i32
    %c0_i32_2 = arith.constant 0 : i32
    return %c0_i32, %c0_i32_0, %c0_i32_1 : i32, i32, i32
  }
  func.func @transform_2(%arg0: i32, %arg1: i32) -> (i32, i32) {
    %c0_i32 = arith.constant 0 : i32
    %c0_i32_0 = arith.constant 0 : i32
    %c0_i32_1 = arith.constant 0 : i32
    return %c0_i32, %c0_i32_0 : i32, i32
  }
  func.func @transform_3(%arg0: i32, %arg1: i32) -> (i32, i32, i32, i32) {
    %c0_i32 = arith.constant 0 : i32
    %c0_i32_0 = arith.constant 0 : i32
    %c0_i32_1 = arith.constant 0 : i32
    return %arg0, %arg1, %c0_i32, %c0_i32_0 : i32, i32, i32, i32
  }
}

</mosaic_0001>

<llo_original>
// kernel: depth_model_forward.10
$region0: #{depth_model_forward.10}
  #allocation0 [shape = 'u32[]', space=smem, size = 0x4, offset = 0x4, fixed_abs, tag = 'smem constant byte address 0x4 - core index']
  #allocation1 [shape = 'u32[144,128]{1,0:T(1,128)}', space=vmem, size = 0x12000, scoped, tag = 'internal scratch']
  %s0 = inlined_call_operand.vmem [shape: bf16[2,9,9,24], index: 0, kind: input, shape index: {}]
  %s1 = inlined_call_operand.vmem [shape: bf16[4,24,8], index: 1, kind: input, shape index: {}]
  %s2 = inlined_call_operand.vmem [shape: f32[1,8], index: 2, kind: input, shape index: {}]
  %s3 = inlined_call_operand.vmem [shape: bf16[2,8,8,8], index: 3, kind: output, shape index: {}]
  %s4 = sld [smem:[#allocation0]]
  $region45: #{depth_model_forward.10} parent=0
    _
  %s6 = ssub.s32 1, %s4
  %s7 = scalar_select 0, %s6, %s4
  loop: start=0, step=1, limit=18
  $region2: #{depth_model_forward.10} parent=0 // loop_pre_header
    _
  $region3: #{depth_model_forward.10} parent=0 // loop_header
    %s9 = sphi 0, %s13
    %p10 = scmp.ge.s32.totalorder %s9, 18
    %s16 = sphi 0, %s28
    %s17 = sphi 0, %s24
    %s18 = sphi 0, %s16
    %s19 = sphi 0, %s17
    %s20 = sphi 0, %s18
    %s21 = sphi 0, %s19
    %s31 = sphi 0, %s33
    %s34 = sphi 0, %s31
    %s35 = sphi 0, %s34
    %s51 = sphi 0, %s35
    %s55 = sphi 0, %s55
    %s57 = sphi 0, %s55
    %s58 = sphi 0, %s57
    %s72 = sphi 0, %s58
    %s76 = sphi 0, %s76
    %s78 = sphi 0, %s76
    %s79 = sphi 0, %s78
    %s93 = sphi 0, %s79
    %s101 = sphi 0, %s103
    %s104 = sphi 0, %s101
    %s105 = sphi 0, %s104
    %s121 = sphi 0, %s105
  $region4: #{depth_model_forward.10} parent=0 // loop_header_branch
    %12 = sbr.rel (%p10) target = $region8
  $region5: #{depth_model_forward.10} parent=0 // loop_body
    %s14 = ssub.s32 %s9, 1
    %s15 = ssub.s32 %s9, 2
    %s22 = sadd.s32 1, %s17
    %p23 = scmp.ge.s32.totalorder %s22, 8
    %s24 = scalar_select %p23, 0, %s22
    %s25 = sadd.s32 1, %s16
    %s26 = scalar_select %p23, %s25, %s16
    %p27 = scmp.ge.s32.totalorder %s26, 2
    %s28 = scalar_select %p27, 0, %s26
    %s29 = ssub.s32 %s16, %s28
    %p30 = scmp.eq.s32.totalorder %s29, 0
    %s32 = sadd.s32 %s31, 1
    %s33 = scalar_select %p30, %s31, %s32
    %p36 = pneg %p30
    %p37 = scmp.eq.s32.totalorder %s9, 15
    %p38 = por %p36, %p37
    %p39 = scmp.ne.s32.totalorder %s31, %s34
    %p40 = scmp.eq.s32.totalorder %s9, 0
    %p41 = por %p39, %p40
    %p42 = scmp.ne.s32.totalorder %s31, %s34
    %p43 = scmp.eq.s32.totalorder %s14, 15
    %p44 = por %p42, %p43
    %p45 = scmp.ne.s32.totalorder %s34, %s35
    %p46 = scmp.eq.s32.totalorder %s14, 0
    %p47 = por %p45, %p46
    %p48 = scmp.ne.s32.totalorder %s34, %s35
    %p49 = scmp.eq.s32.totalorder %s15, 15
    %p50 = por %p48, %p49
    %p52 = scmp.ne.s32.totalorder %s35, %s51
    %p53 = scmp.eq.s32.totalorder %s15, 0
    %p54 = por %p52, %p53
    %s56 = sadd.s32 %s55, 1
    %p59 = scmp.eq.s32.totalorder %s9, 15
    %p60 = scmp.ne.s32.totalorder %s55, %s57
    %p61 = scmp.eq.s32.totalorder %s9, 0
    %p62 = por %p60, %p61
    %p63 = scmp.ne.s32.totalorder %s55, %s57
    %p64 = scmp.eq.s32.totalorder %s14, 15
    %p65 = por %p63, %p64
    %p66 = scmp.ne.s32.totalorder %s57, %s58
    %p67 = scmp.eq.s32.totalorder %s14, 0
    %p68 = por %p66, %p67
    %p69 = scmp.ne.s32.totalorder %s57, %s58
    %p70 = scmp.eq.s32.totalorder %s15, 15
    %p71 = por %p69, %p70
    %p73 = scmp.ne.s32.totalorder %s58, %s72
    %p74 = scmp.eq.s32.totalorder %s15, 0
    %p75 = por %p73, %p74
    %s77 = sadd.s32 %s76, 1
    %p80 = scmp.eq.s32.totalorder %s9, 15
    %p81 = scmp.ne.s32.totalorder %s76, %s78
    %p82 = scmp.eq.s32.totalorder %s9, 0
    %p83 = por %p81, %p82
    %p84 = scmp.ne.s32.totalorder %s76, %s78
    %p85 = scmp.eq.s32.totalorder %s14, 15
    %p86 = por %p84, %p85
    %p87 = scmp.ne.s32.totalorder %s78, %s79
    %p88 = scmp.eq.s32.totalorder %s14, 0
    %p89 = por %p87, %p88
    %p90 = scmp.ne.s32.totalorder %s78, %s79
    %p91 = scmp.eq.s32.totalorder %s15, 15
    %p92 = por %p90, %p91
    %p94 = scmp.ne.s32.totalorder %s79, %s93
    %p95 = scmp.eq.s32.totalorder %s15, 0
    %p96 = por %p94, %p95
    %s97 = ssub.s32 %s16, %s28
    %s98 = ssub.s32 %s17, %s24
    %s99 = sor.u32 %s97, %s98
    %p100 = scmp.eq.s32.totalorder %s99, 0
    %s102 = sadd.s32 %s101, 1
    %s103 = scalar_select %p100, %s101, %s102
    %p106 = pneg %p100
    %p107 = scmp.eq.s32.totalorder %s9, 15
    %p108 = por %p106, %p107
    %p109 = scmp.ne.s32.totalorder %s101, %s104
    %p110 = scmp.eq.s32.totalorder %s9, 0
    %p111 = por %p109, %p110
    %p112 = scmp.ne.s32.totalorder %s101, %s104
    %p113 = scmp.eq.s32.totalorder %s14, 15
    %p114 = por %p112, %p113
    %p115 = scmp.ne.s32.totalorder %s104, %s105
    %p116 = scmp.eq.s32.totalorder %s14, 0
    %p117 = por %p115, %p116
    %p118 = scmp.ne.s32.totalorder %s104, %s105
    %p119 = scmp.eq.s32.totalorder %s15, 15
    %p120 = por %p118, %p119
    %p122 = scmp.ne.s32.totalorder %s105, %s121
    %p123 = scmp.eq.s32.totalorder %s15, 0
    %p124 = por %p122, %p123
    %p125 = scmp.le.s32.totalorder 1, %s9
    %p126 = scmp.lt.s32.totalorder %s9, 17
    %p127 = pnand %p125, %p126
    %p128 = pneg %p127
    // Predicated region
    $region9: #{depth_model_forward.10} parent=5 // pred_check
      _
    $region10: #{depth_model_forward.10} parent=5 // pred_check_branch
      %130 = sbr.rel (%p127) target = $region12
    $region11: #{depth_model_forward.10} parent=5 // pred_region
      %s131 = ssub.s32 %s9, 1
      // Predicated region
      $region13: #{depth_model_forward.10} parent=11 // pred_check
        %p132 = pneg %p68
      $region14: #{depth_model_forward.10} parent=11 // pred_check_branch
        %134 = sbr.rel (%p132) target = $region16
      $region15: #{depth_model_forward.10} parent=11 // pred_region
        _
      $region16: #{depth_model_forward.10} parent=11 // pred_fallthru
        _
      // Predicated region
      $region17: #{depth_model_forward.10} parent=11 // pred_check
        %p135 = pneg %p89
      $region18: #{depth_model_forward.10} parent=11 // pred_check_branch
        %137 = sbr.rel (%p135) target = $region20
      $region19: #{depth_model_forward.10} parent=11 // pred_region
        _
      $region20: #{depth_model_forward.10} parent=11 // pred_fallthru
        _
    $region12: #{depth_model_forward.10} parent=5 // pred_fallthru
      _
    %p138 = scmp.lt.s32.totalorder %s9, 16
    // Predicated region
    $region21: #{depth_model_forward.10} parent=5 // pred_check
      %p139 = pneg %p138
    $region22: #{depth_model_forward.10} parent=5 // pred_check_branch
      %141 = sbr.rel (%p139) target = $region24
    $region23: #{depth_model_forward.10} parent=5 // pred_region
      // Predicated region
      $region25: #{depth_model_forward.10} parent=23 // pred_check
        %p142 = pneg %p41
      $region26: #{depth_model_forward.10} parent=23 // pred_check_branch
        %144 = sbr.rel (%p142) target = $region28
      $region27: #{depth_model_forward.10} parent=23 // pred_region
        %p145 = scmp.lt.s32.totalorder %s16, 1
        %s146 = scalar_select %p145, %s16, 1
        %s147 = smul.addr %s146, 18
        %s148 = smul.addr %s147, 4
        %s149 = scalar_lea.vmem %s0, %s148
      $region28: #{depth_model_forward.10} parent=23 // pred_fallthru
        _
    $region24: #{depth_model_forward.10} parent=5 // pred_fallthru
      _
    %p150 = scmp.le.s32.totalorder 1, %s9
    %p151 = scmp.lt.s32.totalorder %s9, 17
    %p152 = pnand %p150, %p151
    %p153 = pneg %p152
    // Predicated region
    $region29: #{depth_model_forward.10} parent=5 // pred_check
      _
    $region30: #{depth_model_forward.10} parent=5 // pred_check_branch
      %155 = sbr.rel (%p152) target = $region32
    $region31: #{depth_model_forward.10} parent=5 // pred_region
      %s156 = ssub.s32 %s9, 1
      %p157 = scmp.lt.s32.totalorder %s18, 1
      %s158 = scalar_select %p157, %s18, 1
      %s159 = smul.addr %s158, 18
      %s160 = smul.addr %s159, 4
      %s161 = scalar_lea.vmem %s0, %s160
      %p162 = pneg %p47
      %p163 = pneg %p44
      %p164 = pneg %p68
      %p165 = pneg %p65
      %p166 = pneg %p89
      %p167 = pneg %p86
      %p168 = pneg %p117
      %p169 = pneg %p114
      %p170 = scmp.lt.s32.totalorder %s18, 1
      %s171 = scalar_select %p170, %s18, 1
      %p172 = scmp.lt.s32.totalorder %s19, 7
      %s173 = scalar_select %p172, %s19, 7
      %s174 = smul.addr %s171, 8
      %s175 = sadd.s32 %s173, %s174
      %s176 = smul.addr %s175, 4
      %s177 = scalar_lea.vmem %s3, %s176
      %p178 = scmp.lt.s32.totalorder %s18, 1
      %s179 = scalar_select %p178, %s18, 1
      %s180 = smul.addr %s179, 18
      %s181 = smul.addr %s180, 4
      %s182 = scalar_lea.vmem %s0, %s181
      %p183 = scmp.lt.s32.totalorder %s18, 1
      %s184 = scalar_select %p183, %s18, 1
      %p185 = scmp.lt.s32.totalorder %s19, 7
      %s186 = scalar_select %p185, %s19, 7
      %s187 = smul.addr %s184, 8
      %s188 = sadd.s32 %s186, %s187
      %s189 = smul.addr %s188, 4
      %s190 = scalar_lea.vmem %s3, %s189
      %s192 = smul.u32 %s19, 2
      %s193 = smul.addr %s192, 4
      %s194 = scalar_lea.vmem %s182, %s193
      %v195 = vld [vmem:[%s194] sm:$0xf]
      %v196 = vld [vmem:[%s194 + $0x4] sm:$0x1]
      %v197 = vld [vmem:[%s1] sm:$0xf]
      %v198 = vld [vmem:[%s1 + $0x4] sm:$0xf]
      %v199 = vld [vmem:[%s1 + $0x8] sm:$0xf]
      %v202 = vunpack.c.l.b16 %v195
      %v203 = vunpack.c.l.b16 %v196
      %v204 = vpack.c.b16 %v203, %v202
      %v208 = vunpack.c.l.b16 %v197
      %v209 = vunpack.c.l.b16 %v198
      %v210 = vunpack.c.l.b16 %v199
      %v211 = vpack.c.b16 %v209, %v208
      %v212 = vpack.c.b16 %v210, %v210
      %vm214 = vcmask 195584
      %v216 = vsel %vm214, %v204, 0
      %vm218 = vcmask 1043456
      %v220 = vsel %vm218, %v212, 0
      %222 = vmatprep.subr.bf16.mxu0 0
      %223 = vmatpush1.bf16.msra.mxu0 0
      %224 = vmatprep.subr.bf16.mxu0 0
      %225 = vmatpush1.bf16.msra.mxu0 0
      %226 = vmatprep.subr.bf16.mxu0 0
      %227 = vmatpush1.bf16.msra.mxu0 0
      %228 = vmatprep.subr.bf16.mxu0 0
      %229 = vmatpush1.bf16.msra.mxu0 0
      %230 = vmatprep.subr.bf16.mxu0 0
      %231 = vmatpush1.bf16.msra.mxu0 0
      %232 = vmatprep.subr.bf16.mxu0 0
      %233 = vmatpush1.bf16.msra.mxu0 0
      %234 = vmatprep.subr.bf16.mxu0 0
      %235 = vmatpush1.bf16.msra.mxu0 %v220
      %236 = vmatprep.subr.bf16.mxu0 0
      %237 = vmatpush1.bf16.msra.mxu0 %v211
      %238 = vmatprep.subr.bf16.mxu0 0
      %239 = vmatpush2.bf16.msra.mxu0 0
      %240 = vmatprep.subr.bf16.mxu0 0
      %241 = vmatpush2.bf16.msra.mxu0 0
      %242 = vmatprep.subr.bf16.mxu0 0
      %243 = vmatpush2.bf16.msra.mxu0 0
      %244 = vmatprep.subr.bf16.mxu0 0
      %245 = vmatpush2.bf16.msra.mxu0 0
      %246 = vmatprep.subr.bf16.mxu0 0
      %247 = vmatpush2.bf16.msra.mxu0 0
      %248 = vmatprep.subr.bf16.mxu0 0
      %249 = vmatpush2.bf16.msra.mxu0 0
      %250 = vmatprep.subr.bf16.mxu0 0
      %251 = vmatpush2.bf16.msra.mxu0 0
      %252 = vmatprep.subr.bf16.mxu0 0
      %253 = vmatpush2.bf16.msra.mxu0 0
      %254 = vmatprep.mubr.bf16.mxu0 0
      %255 = vmatmul.mubr.bf16.gmra.mxu0 %v216
      %v256 = vpop.f32.mrf.mxu0
      %v257 = vadd.f32 0.0, %v256
      %v258 = vpop.f32.mrf.mxu0
      %v259 = vpop.f32.mrf.mxu0
      %v260 = vpop.f32.mrf.mxu0
      %261 = vdwg.mxu0
      %v262 = vadd.f32 %v257, 0.0
      %s263 = scalar_lea.vmem %s1, 12
      %v264 = vld [vmem:[%s263] sm:$0xf]
      %v265 = vld [vmem:[%s263 + $0x4] sm:$0xf]
      %v266 = vld [vmem:[%s263 + $0x8] sm:$0xf]
      %v270 = vunpack.c.l.b16 %v264
      %v271 = vunpack.c.l.b16 %v265
      %v272 = vunpack.c.l.b16 %v266
      %v273 = vpack.c.b16 %v271, %v270
      %v274 = vpack.c.b16 %v272, %v272
      %v277 = vsel %vm218, %v274, 0
      %279 = vmatprep.subr.bf16.mxu0 0
      %280 = vmatpush1.bf16.msra.mxu0 0
      %281 = vmatprep.subr.bf16.mxu0 0
      %282 = vmatpush1.bf16.msra.mxu0 0
      %283 = vmatprep.subr.bf16.mxu0 0
      %284 = vmatpush1.bf16.msra.mxu0 0
      %285 = vmatprep.subr.bf16.mxu0 0
      %286 = vmatpush1.bf16.msra.mxu0 0
      %287 = vmatprep.subr.bf16.mxu0 0
      %288 = vmatpush1.bf16.msra.mxu0 0
      %289 = vmatprep.subr.bf16.mxu0 0
      %290 = vmatpush1.bf16.msra.mxu0 0
      %291 = vmatprep.subr.bf16.mxu0 0
      %292 = vmatpush1.bf16.msra.mxu0 %v277
      %293 = vmatprep.subr.bf16.mxu0 0
      %294 = vmatpush1.bf16.msra.mxu0 %v273
      %295 = vmatprep.subr.bf16.mxu0 0
      %296 = vmatpush2.bf16.msra.mxu0 0
      %297 = vmatprep.subr.bf16.mxu0 0
      %298 = vmatpush2.bf16.msra.mxu0 0
      %299 = vmatprep.subr.bf16.mxu0 0
      %300 = vmatpush2.bf16.msra.mxu0 0
      %301 = vmatprep.subr.bf16.mxu0 0
      %302 = vmatpush2.bf16.msra.mxu0 0
      %303 = vmatprep.subr.bf16.mxu0 0
      %304 = vmatpush2.bf16.msra.mxu0 0
      %305 = vmatprep.subr.bf16.mxu0 0
      %306 = vmatpush2.bf16.msra.mxu0 0
      %307 = vmatprep.subr.bf16.mxu0 0
      %308 = vmatpush2.bf16.msra.mxu0 0
      %309 = vmatprep.subr.bf16.mxu0 0
      %310 = vmatpush2.bf16.msra.mxu0 0
      %311 = vmatprep.mubr.bf16.mxu0 0
      %312 = vmatmul.mubr.bf16.gmra.mxu0 %v216
      %v313 = vpop.f32.mrf.mxu0
      %v314 = vadd.f32 0.0, %v313
      %v315 = vpop.f32.mrf.mxu0
      %v316 = vpop.f32.mrf.mxu0
      %v317 = vadd.f32 0.0, %v316
      %v318 = vpop.f32.mrf.mxu0
      %319 = vdwg.mxu0
      %vm322 = vcmask 1046528
      %v323 = vrot.slane %v314, 1
      %v324 = vrot.slane %v317, 1
      %v325 = vsel %vm322, %v323, %v324
      %v327 = vadd.f32 %v262, %v325
      %s328 = sadd.s32 %s19, 1
      %s329 = smul.u32 %s328, 2
      %s330 = smul.addr %s329, 4
      %s331 = scalar_lea.vmem %s182, %s330
      %v332 = vld [vmem:[%s331] sm:$0xf]
      %v333 = vld [vmem:[%s331 + $0x4] sm:$0x1]
      %s334 = scalar_lea.vmem %s1, 24
      %v335 = vld [vmem:[%s334] sm:$0xf]
      %v336 = vld [vmem:[%s334 + $0x4] sm:$0xf]
      %v337 = vld [vmem:[%s334 + $0x8] sm:$0xf]
      %v340 = vunpack.c.l.b16 %v332
      %v341 = vunpack.c.l.b16 %v333
      %v342 = vpack.c.b16 %v341, %v340
      %v346 = vunpack.c.l.b16 %v335
      %v347 = vunpack.c.l.b16 %v336
      %v348 = vunpack.c.l.b16 %v337
      %v349 = vpack.c.b16 %v347, %v346
      %v350 = vpack.c.b16 %v348, %v348
      %v353 = vsel %vm214, %v342, 0
      %v356 = vsel %vm218, %v350, 0
      %358 = vmatprep.subr.bf16.mxu0 0
      %359 = vmatpush1.bf16.msra.mxu0 0
      %360 = vmatprep.subr.bf16.mxu0 0
      %361 = vmatpush1.bf16.msra.mxu0 0
      %362 = vmatprep.subr.bf16.mxu0 0
      %363 = vmatpush1.bf16.msra.mxu0 0
      %364 = vmatprep.subr.bf16.mxu0 0
      %365 = vmatpush1.bf16.msra.mxu0 0
      %366 = vmatprep.subr.bf16.mxu0 0
      %367 = vmatpush1.bf16.msra.mxu0 0
      %368 = vmatprep.subr.bf16.mxu0 0
      %369 = vmatpush1.bf16.msra.mxu0 0
      %370 = vmatprep.subr.bf16.mxu0 0
      %371 = vmatpush1.bf16.msra.mxu0 %v356
      %372 = vmatprep.subr.bf16.mxu0 0
      %373 = vmatpush1.bf16.msra.mxu0 %v349
      %374 = vmatprep.subr.bf16.mxu0 0
      %375 = vmatpush2.bf16.msra.mxu0 0
      %376 = vmatprep.subr.bf16.mxu0 0
      %377 = vmatpush2.bf16.msra.mxu0 0
      %378 = vmatprep.subr.bf16.mxu0 0
      %379 = vmatpush2.bf16.msra.mxu0 0
      %380 = vmatprep.subr.bf16.mxu0 0
      %381 = vmatpush2.bf16.msra.mxu0 0
      %382 = vmatprep.subr.bf16.mxu0 0
      %383 = vmatpush2.bf16.msra.mxu0 0
      %384 = vmatprep.subr.bf16.mxu0 0
      %385 = vmatpush2.bf16.msra.mxu0 0
      %386 = vmatprep.subr.bf16.mxu0 0
      %387 = vmatpush2.bf16.msra.mxu0 0
      %388 = vmatprep.subr.bf16.mxu0 0
      %389 = vmatpush2.bf16.msra.mxu0 0
      %390 = vmatprep.mubr.bf16.mxu0 0
      %391 = vmatmul.mubr.bf16.gmra.mxu0 %v353
      %v392 = vpop.f32.mrf.mxu0
      %v393 = vadd.f32 0.0, %v392
      %v394 = vpop.f32.mrf.mxu0
      %v395 = vpop.f32.mrf.mxu0
      %v396 = vpop.f32.mrf.mxu0
      %397 = vdwg.mxu0
      %v398 = vadd.f32 %v327, %v393
      %s399 = scalar_lea.vmem %s1, 36
      %v400 = vld [vmem:[%s399] sm:$0xf]
      %v401 = vld [vmem:[%s399 + $0x4] sm:$0xf]
      %v402 = vld [vmem:[%s399 + $0x8] sm:$0xf]
      %v406 = vunpack.c.l.b16 %v400
      %v407 = vunpack.c.l.b16 %v401
      %v408 = vunpack.c.l.b16 %v402
      %v409 = vpack.c.b16 %v407, %v406
      %v410 = vpack.c.b16 %v408, %v408
      %v413 = vsel %vm218, %v410, 0
      %415 = vmatprep.subr.bf16.mxu0 0
      %416 = vmatpush1.bf16.msra.mxu0 0
      %417 = vmatprep.subr.bf16.mxu0 0
      %418 = vmatpush1.bf16.msra.mxu0 0
      %419 = vmatprep.subr.bf16.mxu0 0
      %420 = vmatpush1.bf16.msra.mxu0 0
      %421 = vmatprep.subr.bf16.mxu0 0
      %422 = vmatpush1.bf16.msra.mxu0 0
      %423 = vmatprep.subr.bf16.mxu0 0
      %424 = vmatpush1.bf16.msra.mxu0 0
      %425 = vmatprep.subr.bf16.mxu0 0
      %426 = vmatpush1.bf16.msra.mxu0 0
      %427 = vmatprep.subr.bf16.mxu0 0
      %428 = vmatpush1.bf16.msra.mxu0 %v413
      %429 = vmatprep.subr.bf16.mxu0 0
      %430 = vmatpush1.bf16.msra.mxu0 %v409
      %431 = vmatprep.subr.bf16.mxu0 0
      %432 = vmatpush2.bf16.msra.mxu0 0
      %433 = vmatprep.subr.bf16.mxu0 0
      %434 = vmatpush2.bf16.msra.mxu0 0
      %435 = vmatprep.subr.bf16.mxu0 0
      %436 = vmatpush2.bf16.msra.mxu0 0
      %437 = vmatprep.subr.bf16.mxu0 0
      %438 = vmatpush2.bf16.msra.mxu0 0
      %439 = vmatprep.subr.bf16.mxu0 0
      %440 = vmatpush2.bf16.msra.mxu0 0
      %441 = vmatprep.subr.bf16.mxu0 0
      %442 = vmatpush2.bf16.msra.mxu0 0
      %443 = vmatprep.subr.bf16.mxu0 0
      %444 = vmatpush2.bf16.msra.mxu0 0
      %445 = vmatprep.subr.bf16.mxu0 0
      %446 = vmatpush2.bf16.msra.mxu0 0
      %447 = vmatprep.mubr.bf16.mxu0 0
      %448 = vmatmul.mubr.bf16.gmra.mxu0 %v353
      %v449 = vpop.f32.mrf.mxu0
      %v450 = vadd.f32 0.0, %v449
      %v451 = vpop.f32.mrf.mxu0
      %v452 = vpop.f32.mrf.mxu0
      %v453 = vadd.f32 0.0, %v452
      %v454 = vpop.f32.mrf.mxu0
      %455 = vdwg.mxu0
      %v458 = vrot.slane %v450, 1
      %v459 = vrot.slane %v453, 1
      %v460 = vsel %vm322, %v458, %v459
      %v462 = vadd.f32 %v398, %v460
      %v463 = vld [vmem:[%s2] sm:$0x1]
      %v465 = vlaneseq
      %v466 = vshrl.u32 %v465, 7
      %v467 = vsub.s32 0, %v466
      %v468 = vrot.slane %v463, %v467
      %v470 = vadd.f32 %v462, %v468
      %vm471 = vcmp.gt.f32.partialorder %v470, 0.0
      %v472 = vmul.f32 %v470, 0.2
      %v473 = vsel %vm471, %v470, %v472
      %v474 = vpack.c.bf16 %v473, %v473
      %vm475 = vcmask 60416
      %476 = vst.msk [vmem:[%s190] sm:$0xf] %vm475, %v474
      %p477 = scmp.lt.s32.totalorder %s18, 1
      %s478 = scalar_select %p477, %s18, 1
      %p479 = scmp.lt.s32.totalorder %s19, 7
      %s480 = scalar_select %p479, %s19, 7
      %s481 = smul.addr %s478, 8
      %s482 = sadd.s32 %s480, %s481
      %s483 = smul.addr %s482, 4
      %s484 = scalar_lea.vmem %s3, %s483
      // Predicated region
      $region33: #{depth_model_forward.10} parent=31 // pred_check
        %p485 = pneg %p114
      $region34: #{depth_model_forward.10} parent=31 // pred_check_branch
        %487 = sbr.rel (%p485) target = $region36
      $region35: #{depth_model_forward.10} parent=31 // pred_region
        _
      $region36: #{depth_model_forward.10} parent=31 // pred_fallthru
        _
    $region32: #{depth_model_forward.10} parent=5 // pred_fallthru
      _
    %p488 = scmp.le.s32.totalorder 2, %s9
    // Predicated region
    $region37: #{depth_model_forward.10} parent=5 // pred_check
      %p489 = pneg %p488
    $region38: #{depth_model_forward.10} parent=5 // pred_check_branch
      %491 = sbr.rel (%p489) target = $region40
    $region39: #{depth_model_forward.10} parent=5 // pred_region
      %s492 = ssub.s32 %s9, 2
      // Predicated region
      $region41: #{depth_model_forward.10} parent=39 // pred_check
        %p493 = pneg %p120
      $region42: #{depth_model_forward.10} parent=39 // pred_check_branch
        %495 = sbr.rel (%p493) target = $region44
      $region43: #{depth_model_forward.10} parent=39 // pred_region
        %p496 = scmp.lt.s32.totalorder %s20, 1
        %s497 = scalar_select %p496, %s20, 1
        %p498 = scmp.lt.s32.totalorder %s21, 7
        %s499 = scalar_select %p498, %s21, 7
        %s500 = smul.addr %s497, 8
        %s501 = sadd.s32 %s499, %s500
        %s502 = smul.addr %s501, 4
        %s503 = scalar_lea.vmem %s3, %s502
      $region44: #{depth_model_forward.10} parent=39 // pred_fallthru
        _
    $region40: #{depth_model_forward.10} parent=5 // pred_fallthru
      _
  $region6: #{depth_model_forward.10} parent=0 // loop_footer
    %s13 = sadd.s32 1, %s9
  $region7: #{depth_model_forward.10} parent=0 // loop_footer_branch
    %8 = sbr.rel target = $region3
  $region8: #{depth_model_forward.10} parent=0 // loop_exit
    _

// kernel: depth_model_forward.12
$region0: #{depth_model_forward.12}
  #allocation0 [shape = 'u32[]', space=smem, size = 0x4, offset = 0x4, fixed_abs, tag = 'smem constant byte address 0x4 - core index']
  #allocation1 [shape = 'u32[144,128]{1,0:T(1,128)}', space=vmem, size = 0x12000, scoped, tag = 'internal scratch']
  %s0 = inlined_call_operand.vmem [shape: bf16[32,16], index: 0, kind: input, shape index: {}]
  %s1 = inlined_call_operand.vmem [shape: f32[2,16], index: 1, kind: input, shape index: {}]
  %s2 = inlined_call_operand.vmem [shape: f32[1,16], index: 2, kind: input, shape index: {}]
  %s3 = inlined_call_operand.vmem [shape: f32[1,16], index: 3, kind: input, shape index: {}]
  %s4 = inlined_call_operand.vmem [shape: bf16[32,16], index: 4, kind: output, shape index: {}]
  %s5 = sld [smem:[#allocation0]]
  $region26: #{depth_model_forward.12} parent=0
    _
  %s7 = ssub.s32 1, %s5
  %s8 = scalar_select 0, %s7, %s5
  // Predicated region
  $region2: #{depth_model_forward.12} parent=0 // pred_check
    _
  $region3: #{depth_model_forward.12} parent=0 // pred_check_branch
    %10 = sbr.rel (0) target = $region5
  $region4: #{depth_model_forward.12} parent=0 // pred_region
    _
  $region5: #{depth_model_forward.12} parent=0 // pred_fallthru
    _
  // Predicated region
  $region6: #{depth_model_forward.12} parent=0 // pred_check
    _
  $region7: #{depth_model_forward.12} parent=0 // pred_check_branch
    %12 = sbr.rel (0) target = $region9
  $region8: #{depth_model_forward.12} parent=0 // pred_region
    _
  $region9: #{depth_model_forward.12} parent=0 // pred_fallthru
    _
  // Predicated region
  $region10: #{depth_model_forward.12} parent=0 // pred_check
    _
  $region11: #{depth_model_forward.12} parent=0 // pred_check_branch
    %14 = sbr.rel (0) target = $region13
  $region12: #{depth_model_forward.12} parent=0 // pred_region
    _
  $region13: #{depth_model_forward.12} parent=0 // pred_fallthru
    _
  // Predicated region
  $region14: #{depth_model_forward.12} parent=0 // pred_check
    _
  $region15: #{depth_model_forward.12} parent=0 // pred_check_branch
    %16 = sbr.rel (0) target = $region17
  $region16: #{depth_model_forward.12} parent=0 // pred_region
    _
  $region17: #{depth_model_forward.12} parent=0 // pred_fallthru
    _
  %v17 = vld [vmem:[%s1] sm:$0x1]
  %v18 = vmul.f32 %v17, 0.03125
  %v19 = vld [vmem:[%s1 + $0x1] sm:$0x1]
  %v20 = vmul.f32 %v19, 0.03125
  %v21 = vmul.f32 %v18, %v18
  %v22 = vsub.f32 %v20, %v21
  %v23 = vmax.f32 %v22, 0.0
  %v24 = vld [vmem:[%s2] sm:$0x1]
  %v25 = vadd.f32 %v23, 1e-05
  %v26 = vrsqrt.pop %v25
  %v27 = vmul.f32 %v24, %v26
  %v28 = vld [vmem:[%s3] sm:$0x1]
  %v29 = vmul.f32 %v18, %v27
  %v30 = vsub.f32 %v28, %v29
  %v31 = vld [vmem:[%s0] sm:$0xf]
  %v32 = vld [vmem:[%s0 + $0x4] sm:$0xf]
  %v33 = vld [vmem:[%s0 + $0x8] sm:$0xf]
  %v34 = vld [vmem:[%s0 + $0xc] sm:$0xf]
  %v35 = vunpack.c.l.bf16 %v31
  %v36 = vunpack.c.l.bf16 %v32
  %v37 = vunpack.c.l.bf16 %v33
  %v38 = vunpack.c.l.bf16 %v34
  %v40 = vlaneseq
  %v41 = vshrl.u32 %v40, 7
  %v42 = vsub.s32 0, %v41
  %v43 = vrot.slane %v27, %v42
  %v45 = vmul.f32 %v35, %v43
  %v46 = vmul.f32 %v36, %v43
  %v47 = vmul.f32 %v37, %v43
  %v48 = vmul.f32 %v38, %v43
  %v50 = vlaneseq
  %v51 = vshrl.u32 %v50, 7
  %v52 = vsub.s32 0, %v51
  %v53 = vrot.slane %v30, %v52
  %v55 = vadd.f32 %v45, %v53
  %v56 = vadd.f32 %v46, %v53
  %v57 = vadd.f32 %v47, %v53
  %v58 = vadd.f32 %v48, %v53
  %vm59 = vcmp.gt.f32.partialorder %v55, 0.0
  %vm60 = vcmp.gt.f32.partialorder %v56, 0.0
  %vm61 = vcmp.gt.f32.partialorder %v57, 0.0
  %vm62 = vcmp.gt.f32.partialorder %v58, 0.0
  %v63 = vmul.f32 %v55, 0.2
  %v64 = vmul.f32 %v56, 0.2
  %v65 = vmul.f32 %v57, 0.2
  %v66 = vmul.f32 %v58, 0.2
  %v67 = vsel %vm59, %v55, %v63
  %v68 = vsel %vm60, %v56, %v64
  %v69 = vsel %vm61, %v57, %v65
  %v70 = vsel %vm62, %v58, %v66
  %v71 = vpack.c.bf16 %v68, %v67
  %v72 = vpack.c.bf16 %v70, %v69
  %v75 = vunpack.c.l.b16 %v71
  %v76 = vunpack.c.h.b16 %v71
  %v77 = vunpack.c.l.b16 %v72
  %v78 = vunpack.c.h.b16 %v72
  %v79 = vpack.c.b16 %v75, %v75
  %v80 = vpack.c.b16 %v76, %v76
  %v81 = vpack.c.b16 %v77, %v77
  %v82 = vpack.c.b16 %v78, %v78
  %vm87 = vcmask 125952
  %88 = vst.msk [vmem:[%s4] sm:$0xf] %vm87, %v79
  %89 = vst.msk [vmem:[%s4 + $0x4] sm:$0xf] %vm87, %v80
  %90 = vst.msk [vmem:[%s4 + $0x8] sm:$0xf] %vm87, %v81
  %91 = vst.msk [vmem:[%s4 + $0xc] sm:$0xf] %vm87, %v82
  // Predicated region
  $region18: #{depth_model_forward.12} parent=0 // pred_check
    _
  $region19: #{depth_model_forward.12} parent=0 // pred_check_branch
    %93 = sbr.rel (0) target = $region21
  $region20: #{depth_model_forward.12} parent=0 // pred_region
    _
  $region21: #{depth_model_forward.12} parent=0 // pred_fallthru
    _
  // Predicated region
  $region22: #{depth_model_forward.12} parent=0 // pred_check
    _
  $region23: #{depth_model_forward.12} parent=0 // pred_check_branch
    %95 = sbr.rel (0) target = $region25
  $region24: #{depth_model_forward.12} parent=0 // pred_region
    _
  $region25: #{depth_model_forward.12} parent=0 // pred_fallthru
    _

// kernel: depth_model_forward.11
$region0: #{depth_model_forward.11}
  #allocation0 [shape = 'u32[]', space=smem, size = 0x4, offset = 0x4, fixed_abs, tag = 'smem constant byte address 0x4 - core index']
  #allocation1 [shape = 'u32[144,128]{1,0:T(1,128)}', space=vmem, size = 0x12000, scoped, tag = 'internal scratch']
  %s0 = inlined_call_operand.vmem [shape: bf16[2,5,5,32], index: 0, kind: input, shape index: {}]
  %s1 = inlined_call_operand.vmem [shape: bf16[4,32,16], index: 1, kind: input, shape index: {}]
  %s2 = inlined_call_operand.vmem [shape: f32[1,16], index: 2, kind: input, shape index: {}]
  %s3 = inlined_call_operand.vmem [shape: bf16[2,4,4,16], index: 3, kind: output, shape index: {0}]
  %s4 = inlined_call_operand.vmem [shape: f32[2,16], index: 4, kind: output, shape index: {1}]
  %5 = xla_tuple %s3, %s4
  %s6 = sld [smem:[#allocation0]]
  $region57: #{depth_model_forward.11} parent=0
    _
  %s8 = ssub.s32 1, %s6
  %s9 = scalar_select 0, %s8, %s6
  loop: start=0, step=1, limit=10
  $region2: #{depth_model_forward.11} parent=0 // loop_pre_header
    _
  $region3: #{depth_model_forward.11} parent=0 // loop_header
    %s11 = sphi 0, %s15
    %p12 = scmp.ge.s32.totalorder %s11, 10
    %s18 = sphi 0, %s30
    %s19 = sphi 0, %s26
    %s20 = sphi 0, %s18
    %s21 = sphi 0, %s19
    %s22 = sphi 0, %s20
    %s23 = sphi 0, %s21
    %s33 = sphi 0, %s35
    %s36 = sphi 0, %s33
    %s37 = sphi 0, %s36
    %s53 = sphi 0, %s37
    %s57 = sphi 0, %s57
    %s59 = sphi 0, %s57
    %s60 = sphi 0, %s59
    %s74 = sphi 0, %s60
    %s78 = sphi 0, %s78
    %s80 = sphi 0, %s78
    %s81 = sphi 0, %s80
    %s95 = sphi 0, %s81
    %s103 = sphi 0, %s105
    %s106 = sphi 0, %s103
    %s107 = sphi 0, %s106
    %s123 = sphi 0, %s107
    %s127 = sphi 0, %s127
    %s129 = sphi 0, %s127
    %s130 = sphi 0, %s129
    %s144 = sphi 0, %s130
  $region4: #{depth_model_forward.11} parent=0 // loop_header_branch
    %14 = sbr.rel (%p12) target = $region8
  $region5: #{depth_model_forward.11} parent=0 // loop_body
    %s16 = ssub.s32 %s11, 1
    %s17 = ssub.s32 %s11, 2
    %s24 = sadd.s32 1, %s19
    %p25 = scmp.ge.s32.totalorder %s24, 4
    %s26 = scalar_select %p25, 0, %s24
    %s27 = sadd.s32 1, %s18
    %s28 = scalar_select %p25, %s27, %s18
    %p29 = scmp.ge.s32.totalorder %s28, 2
    %s30 = scalar_select %p29, 0, %s28
    %s31 = ssub.s32 %s18, %s30
    %p32 = scmp.eq.s32.totalorder %s31, 0
    %s34 = sadd.s32 %s33, 1
    %s35 = scalar_select %p32, %s33, %s34
    %p38 = pneg %p32
    %p39 = scmp.eq.s32.totalorder %s11, 7
    %p40 = por %p38, %p39
    %p41 = scmp.ne.s32.totalorder %s33, %s36
    %p42 = scmp.eq.s32.totalorder %s11, 0
    %p43 = por %p41, %p42
    %p44 = scmp.ne.s32.totalorder %s33, %s36
    %p45 = scmp.eq.s32.totalorder %s16, 7
    %p46 = por %p44, %p45
    %p47 = scmp.ne.s32.totalorder %s36, %s37
    %p48 = scmp.eq.s32.totalorder %s16, 0
    %p49 = por %p47, %p48
    %p50 = scmp.ne.s32.totalorder %s36, %s37
    %p51 = scmp.eq.s32.totalorder %s17, 7
    %p52 = por %p50, %p51
    %p54 = scmp.ne.s32.totalorder %s37, %s53
    %p55 = scmp.eq.s32.totalorder %s17, 0
    %p56 = por %p54, %p55
    %s58 = sadd.s32 %s57, 1
    %p61 = scmp.eq.s32.totalorder %s11, 7
    %p62 = scmp.ne.s32.totalorder %s57, %s59
    %p63 = scmp.eq.s32.totalorder %s11, 0
    %p64 = por %p62, %p63
    %p65 = scmp.ne.s32.totalorder %s57, %s59
    %p66 = scmp.eq.s32.totalorder %s16, 7
    %p67 = por %p65, %p66
    %p68 = scmp.ne.s32.totalorder %s59, %s60
    %p69 = scmp.eq.s32.totalorder %s16, 0
    %p70 = por %p68, %p69
    %p71 = scmp.ne.s32.totalorder %s59, %s60
    %p72 = scmp.eq.s32.totalorder %s17, 7
    %p73 = por %p71, %p72
    %p75 = scmp.ne.s32.totalorder %s60, %s74
    %p76 = scmp.eq.s32.totalorder %s17, 0
    %p77 = por %p75, %p76
    %s79 = sadd.s32 %s78, 1
    %p82 = scmp.eq.s32.totalorder %s11, 7
    %p83 = scmp.ne.s32.totalorder %s78, %s80
    %p84 = scmp.eq.s32.totalorder %s11, 0
    %p85 = por %p83, %p84
    %p86 = scmp.ne.s32.totalorder %s78, %s80
    %p87 = scmp.eq.s32.totalorder %s16, 7
    %p88 = por %p86, %p87
    %p89 = scmp.ne.s32.totalorder %s80, %s81
    %p90 = scmp.eq.s32.totalorder %s16, 0
    %p91 = por %p89, %p90
    %p92 = scmp.ne.s32.totalorder %s80, %s81
    %p93 = scmp.eq.s32.totalorder %s17, 7
    %p94 = por %p92, %p93
    %p96 = scmp.ne.s32.totalorder %s81, %s95
    %p97 = scmp.eq.s32.totalorder %s17, 0
    %p98 = por %p96, %p97
    %s99 = ssub.s32 %s18, %s30
    %s100 = ssub.s32 %s19, %s26
    %s101 = sor.u32 %s99, %s100
    %p102 = scmp.eq.s32.totalorder %s101, 0
    %s104 = sadd.s32 %s103, 1
    %s105 = scalar_select %p102, %s103, %s104
    %p108 = pneg %p102
    %p109 = scmp.eq.s32.totalorder %s11, 7
    %p110 = por %p108, %p109
    %p111 = scmp.ne.s32.totalorder %s103, %s106
    %p112 = scmp.eq.s32.totalorder %s11, 0
    %p113 = por %p111, %p112
    %p114 = scmp.ne.s32.totalorder %s103, %s106
    %p115 = scmp.eq.s32.totalorder %s16, 7
    %p116 = por %p114, %p115
    %p117 = scmp.ne.s32.totalorder %s106, %s107
    %p118 = scmp.eq.s32.totalorder %s16, 0
    %p119 = por %p117, %p118
    %p120 = scmp.ne.s32.totalorder %s106, %s107
    %p121 = scmp.eq.s32.totalorder %s17, 7
    %p122 = por %p120, %p121
    %p124 = scmp.ne.s32.totalorder %s107, %s123
    %p125 = scmp.eq.s32.totalorder %s17, 0
    %p126 = por %p124, %p125
    %s128 = sadd.s32 %s127, 1
    %p131 = scmp.eq.s32.totalorder %s11, 7
    %p132 = scmp.ne.s32.totalorder %s127, %s129
    %p133 = scmp.eq.s32.totalorder %s11, 0
    %p134 = por %p132, %p133
    %p135 = scmp.ne.s32.totalorder %s127, %s129
    %p136 = scmp.eq.s32.totalorder %s16, 7
    %p137 = por %p135, %p136
    %p138 = scmp.ne.s32.totalorder %s129, %s130
    %p139 = scmp.eq.s32.totalorder %s16, 0
    %p140 = por %p138, %p139
    %p141 = scmp.ne.s32.totalorder %s129, %s130
    %p142 = scmp.eq.s32.totalorder %s17, 7
    %p143 = por %p141, %p142
    %p145 = scmp.ne.s32.totalorder %s130, %s144
    %p146 = scmp.eq.s32.totalorder %s17, 0
    %p147 = por %p145, %p146
    %p148 = scmp.le.s32.totalorder 1, %s11
    %p149 = scmp.lt.s32.totalorder %s11, 9
    %p150 = pnand %p148, %p149
    %p151 = pneg %p150
    // Predicated region
    $region9: #{depth_model_forward.11} parent=5 // pred_check
      _
    $region10: #{depth_model_forward.11} parent=5 // pred_check_branch
      %153 = sbr.rel (%p150) target = $region12
    $region11: #{depth_model_forward.11} parent=5 // pred_region
      %s154 = ssub.s32 %s11, 1
      // Predicated region
      $region13: #{depth_model_forward.11} parent=11 // pred_check
        %p155 = pneg %p70
      $region14: #{depth_model_forward.11} parent=11 // pred_check_branch
        %157 = sbr.rel (%p155) target = $region16
      $region15: #{depth_model_forward.11} parent=11 // pred_region
        _
      $region16: #{depth_model_forward.11} parent=11 // pred_fallthru
        _
      // Predicated region
      $region17: #{depth_model_forward.11} parent=11 // pred_check
        %p158 = pneg %p91
      $region18: #{depth_model_forward.11} parent=11 // pred_check_branch
        %160 = sbr.rel (%p158) target = $region20
      $region19: #{depth_model_forward.11} parent=11 // pred_region
        _
      $region20: #{depth_model_forward.11} parent=11 // pred_fallthru
        _
    $region12: #{depth_model_forward.11} parent=5 // pred_fallthru
      _
    %p161 = scmp.lt.s32.totalorder %s11, 8
    // Predicated region
    $region21: #{depth_model_forward.11} parent=5 // pred_check
      %p162 = pneg %p161
    $region22: #{depth_model_forward.11} parent=5 // pred_check_branch
      %164 = sbr.rel (%p162) target = $region24
    $region23: #{depth_model_forward.11} parent=5 // pred_region
      // Predicated region
      $region25: #{depth_model_forward.11} parent=23 // pred_check
        %p165 = pneg %p43
      $region26: #{depth_model_forward.11} parent=23 // pred_check_branch
        %167 = sbr.rel (%p165) target = $region28
      $region27: #{depth_model_forward.11} parent=23 // pred_region
        %p168 = scmp.lt.s32.totalorder %s18, 1
        %s169 = scalar_select %p168, %s18, 1
        %s170 = smul.addr %s169, 5
        %s171 = smul.addr %s170, 4
        %s172 = scalar_lea.vmem %s0, %s171
      $region28: #{depth_model_forward.11} parent=23 // pred_fallthru
        _
    $region24: #{depth_model_forward.11} parent=5 // pred_fallthru
      _
    %p173 = scmp.le.s32.totalorder 1, %s11
    %p174 = scmp.lt.s32.totalorder %s11, 9
    %p175 = pnand %p173, %p174
    %p176 = pneg %p175
    // Predicated region
    $region29: #{depth_model_forward.11} parent=5 // pred_check
      _
    $region30: #{depth_model_forward.11} parent=5 // pred_check_branch
      %178 = sbr.rel (%p175) target = $region32
    $region31: #{depth_model_forward.11} parent=5 // pred_region
      %s179 = ssub.s32 %s11, 1
      %p180 = scmp.lt.s32.totalorder %s20, 1
      %s181 = scalar_select %p180, %s20, 1
      %s182 = smul.addr %s181, 5
      %s183 = smul.addr %s182, 4
      %s184 = scalar_lea.vmem %s0, %s183
      %p185 = pneg %p49
      %p186 = pneg %p46
      %p187 = pneg %p70
      %p188 = pneg %p67
      %p189 = pneg %p91
      %p190 = pneg %p88
      %p191 = pneg %p119
      %p192 = pneg %p116
      %p193 = scmp.lt.s32.totalorder %s20, 1
      %s194 = scalar_select %p193, %s20, 1
      %p195 = scmp.lt.s32.totalorder %s21, 3
      %s196 = scalar_select %p195, %s21, 3
      %s197 = smul.addr %s194, 4
      %s198 = sadd.s32 %s196, %s197
      %s199 = smul.addr %s198, 2
      %s200 = scalar_lea.vmem %s3, %s199
      %p201 = pneg %p140
      %p202 = pneg %p137
      %p203 = scmp.lt.s32.totalorder %s20, 1
      %s204 = scalar_select %p203, %s20, 1
      %s205 = smul.addr %s204, 5
      %s206 = smul.addr %s205, 4
      %s207 = scalar_lea.vmem %s0, %s206
      %p208 = scmp.lt.s32.totalorder %s20, 1
      %s209 = scalar_select %p208, %s20, 1
      %p210 = scmp.lt.s32.totalorder %s21, 3
      %s211 = scalar_select %p210, %s21, 3
      %s212 = smul.addr %s209, 4
      %s213 = sadd.s32 %s211, %s212
      %s214 = smul.addr %s213, 2
      %s215 = scalar_lea.vmem %s3, %s214
      %s217 = smul.addr %s21, 4
      %s218 = scalar_lea.vmem %s207, %s217
      %v219 = vld [vmem:[%s218] sm:$0x7]
      %v220 = vld [vmem:[%s1] sm:$0xf]
      %v221 = vld [vmem:[%s1 + $0x4] sm:$0xf]
      %v222 = vld [vmem:[%s1 + $0x8] sm:$0xf]
      %v223 = vld [vmem:[%s1 + $0xc] sm:$0xf]
      %v228 = vunpack.c.l.b16 %v220
      %v229 = vunpack.c.l.b16 %v221
      %v230 = vunpack.c.l.b16 %v222
      %v231 = vunpack.c.l.b16 %v223
      %v232 = vpack.c.b16 %v229, %v228
      %v233 = vpack.c.b16 %v231, %v230
      %vm236 = vcmask 261120
      %v238 = vsel %vm236, %v219, 0
      %240 = vmatprep.subr.bf16.mxu0 0
      %241 = vmatpush1.bf16.msra.mxu0 0
      %242 = vmatprep.subr.bf16.mxu0 0
      %243 = vmatpush1.bf16.msra.mxu0 0
      %244 = vmatprep.subr.bf16.mxu0 0
      %245 = vmatpush1.bf16.msra.mxu0 0
      %246 = vmatprep.subr.bf16.mxu0 0
      %247 = vmatpush1.bf16.msra.mxu0 0
      %248 = vmatprep.subr.bf16.mxu0 0
      %249 = vmatpush1.bf16.msra.mxu0 0
      %250 = vmatprep.subr.bf16.mxu0 0
      %251 = vmatpush1.bf16.msra.mxu0 0
      %252 = vmatprep.subr.bf16.mxu0 0
      %253 = vmatpush1.bf16.msra.mxu0 %v233
      %254 = vmatprep.subr.bf16.mxu0 0
      %255 = vmatpush1.bf16.msra.mxu0 %v232
      %256 = vmatprep.subr.bf16.mxu0 0
      %257 = vmatpush2.bf16.msra.mxu0 0
      %258 = vmatprep.subr.bf16.mxu0 0
      %259 = vmatpush2.bf16.msra.mxu0 0
      %260 = vmatprep.subr.bf16.mxu0 0
      %261 = vmatpush2.bf16.msra.mxu0 0
      %262 = vmatprep.subr.bf16.mxu0 0
      %263 = vmatpush2.bf16.msra.mxu0 0
      %264 = vmatprep.subr.bf16.mxu0 0
      %265 = vmatpush2.bf16.msra.mxu0 0
      %266 = vmatprep.subr.bf16.mxu0 0
      %267 = vmatpush2.bf16.msra.mxu0 0
      %268 = vmatprep.subr.bf16.mxu0 0
      %269 = vmatpush2.bf16.msra.mxu0 0
      %270 = vmatprep.subr.bf16.mxu0 0
      %271 = vmatpush2.bf16.msra.mxu0 0
      %272 = vmatprep.mubr.bf16.mxu0 0
      %273 = vmatmul.mubr.bf16.gmra.mxu0 %v238
      %v274 = vpop.f32.mrf.mxu0
      %v275 = vadd.f32 0.0, %v274
      %v276 = vpop.f32.mrf.mxu0
      %v277 = vpop.f32.mrf.mxu0
      %v278 = vpop.f32.mrf.mxu0
      %279 = vdwg.mxu0
      %v280 = vadd.f32 %v275, 0.0
      %s281 = scalar_lea.vmem %s1, 16
      %v282 = vld [vmem:[%s281] sm:$0xf]
      %v283 = vld [vmem:[%s281 + $0x4] sm:$0xf]
      %v284 = vld [vmem:[%s281 + $0x8] sm:$0xf]
      %v285 = vld [vmem:[%s281 + $0xc] sm:$0xf]
      %v290 = vunpack.c.l.b16 %v282
      %v291 = vunpack.c.l.b16 %v283
      %v292 = vunpack.c.l.b16 %v284
      %v293 = vunpack.c.l.b16 %v285
      %v294 = vpack.c.b16 %v291, %v290
      %v295 = vpack.c.b16 %v293, %v292
      %298 = vmatprep.subr.bf16.mxu0 0
      %299 = vmatpush1.bf16.msra.mxu0 0
      %300 = vmatprep.subr.bf16.mxu0 0
      %301 = vmatpush1.bf16.msra.mxu0 0
      %302 = vmatprep.subr.bf16.mxu0 0
      %303 = vmatpush1.bf16.msra.mxu0 0
      %304 = vmatprep.subr.bf16.mxu0 0
      %305 = vmatpush1.bf16.msra.mxu0 0
      %306 = vmatprep.subr.bf16.mxu0 0
      %307 = vmatpush1.bf16.msra.mxu0 0
      %308 = vmatprep.subr.bf16.mxu0 0
      %309 = vmatpush1.bf16.msra.mxu0 0
      %310 = vmatprep.subr.bf16.mxu0 0
      %311 = vmatpush1.bf16.msra.mxu0 %v295
      %312 = vmatprep.subr.bf16.mxu0 0
      %313 = vmatpush1.bf16.msra.mxu0 %v294
      %314 = vmatprep.subr.bf16.mxu0 0
      %315 = vmatpush2.bf16.msra.mxu0 0
      %316 = vmatprep.subr.bf16.mxu0 0
      %317 = vmatpush2.bf16.msra.mxu0 0
      %318 = vmatprep.subr.bf16.mxu0 0
      %319 = vmatpush2.bf16.msra.mxu0 0
      %320 = vmatprep.subr.bf16.mxu0 0
      %321 = vmatpush2.bf16.msra.mxu0 0
      %322 = vmatprep.subr.bf16.mxu0 0
      %323 = vmatpush2.bf16.msra.mxu0 0
      %324 = vmatprep.subr.bf16.mxu0 0
      %325 = vmatpush2.bf16.msra.mxu0 0
      %326 = vmatprep.subr.bf16.mxu0 0
      %327 = vmatpush2.bf16.msra.mxu0 0
      %328 = vmatprep.subr.bf16.mxu0 0
      %329 = vmatpush2.bf16.msra.mxu0 0
      %330 = vmatprep.mubr.bf16.mxu0 0
      %331 = vmatmul.mubr.bf16.gmra.mxu0 %v238
      %v332 = vpop.f32.mrf.mxu0
      %v333 = vadd.f32 0.0, %v332
      %v334 = vpop.f32.mrf.mxu0
      %v335 = vpop.f32.mrf.mxu0
      %v336 = vpop.f32.mrf.mxu0
      %337 = vdwg.mxu0
      %v339 = vrot.slane %v333, 1
      %v341 = vadd.f32 %v280, %v339
      %s342 = sadd.s32 %s21, 1
      %s343 = smul.addr %s342, 4
      %s344 = scalar_lea.vmem %s207, %s343
      %v345 = vld [vmem:[%s344] sm:$0x7]
      %s346 = scalar_lea.vmem %s1, 32
      %v347 = vld [vmem:[%s346] sm:$0xf]
      %v348 = vld [vmem:[%s346 + $0x4] sm:$0xf]
      %v349 = vld [vmem:[%s346 + $0x8] sm:$0xf]
      %v350 = vld [vmem:[%s346 + $0xc] sm:$0xf]
      %v355 = vunpack.c.l.b16 %v347
      %v356 = vunpack.c.l.b16 %v348
      %v357 = vunpack.c.l.b16 %v349
      %v358 = vunpack.c.l.b16 %v350
      %v359 = vpack.c.b16 %v356, %v355
      %v360 = vpack.c.b16 %v358, %v357
      %v364 = vsel %vm236, %v345, 0
      %366 = vmatprep.subr.bf16.mxu0 0
      %367 = vmatpush1.bf16.msra.mxu0 0
      %368 = vmatprep.subr.bf16.mxu0 0
      %369 = vmatpush1.bf16.msra.mxu0 0
      %370 = vmatprep.subr.bf16.mxu0 0
      %371 = vmatpush1.bf16.msra.mxu0 0
      %372 = vmatprep.subr.bf16.mxu0 0
      %373 = vmatpush1.bf16.msra.mxu0 0
      %374 = vmatprep.subr.bf16.mxu0 0
      %375 = vmatpush1.bf16.msra.mxu0 0
      %376 = vmatprep.subr.bf16.mxu0 0
      %377 = vmatpush1.bf16.msra.mxu0 0
      %378 = vmatprep.subr.bf16.mxu0 0
      %379 = vmatpush1.bf16.msra.mxu0 %v360
      %380 = vmatprep.subr.bf16.mxu0 0
      %381 = vmatpush1.bf16.msra.mxu0 %v359
      %382 = vmatprep.subr.bf16.mxu0 0
      %383 = vmatpush2.bf16.msra.mxu0 0
      %384 = vmatprep.subr.bf16.mxu0 0
      %385 = vmatpush2.bf16.msra.mxu0 0
      %386 = vmatprep.subr.bf16.mxu0 0
      %387 = vmatpush2.bf16.msra.mxu0 0
      %388 = vmatprep.subr.bf16.mxu0 0
      %389 = vmatpush2.bf16.msra.mxu0 0
      %390 = vmatprep.subr.bf16.mxu0 0
      %391 = vmatpush2.bf16.msra.mxu0 0
      %392 = vmatprep.subr.bf16.mxu0 0
      %393 = vmatpush2.bf16.msra.mxu0 0
      %394 = vmatprep.subr.bf16.mxu0 0
      %395 = vmatpush2.bf16.msra.mxu0 0
      %396 = vmatprep.subr.bf16.mxu0 0
      %397 = vmatpush2.bf16.msra.mxu0 0
      %398 = vmatprep.mubr.bf16.mxu0 0
      %399 = vmatmul.mubr.bf16.gmra.mxu0 %v364
      %v400 = vpop.f32.mrf.mxu0
      %v401 = vadd.f32 0.0, %v400
      %v402 = vpop.f32.mrf.mxu0
      %v403 = vpop.f32.mrf.mxu0
      %v404 = vpop.f32.mrf.mxu0
      %405 = vdwg.mxu0
      %v406 = vadd.f32 %v341, %v401
      %s407 = scalar_lea.vmem %s1, 48
      %v408 = vld [vmem:[%s407] sm:$0xf]
      %v409 = vld [vmem:[%s407 + $0x4] sm:$0xf]
      %v410 = vld [vmem:[%s407 + $0x8] sm:$0xf]
      %v411 = vld [vmem:[%s407 + $0xc] sm:$0xf]
      %v416 = vunpack.c.l.b16 %v408
      %v417 = vunpack.c.l.b16 %v409
      %v418 = vunpack.c.l.b16 %v410
      %v419 = vunpack.c.l.b16 %v411
      %v420 = vpack.c.b16 %v417, %v416
      %v421 = vpack.c.b16 %v419, %v418
      %424 = vmatprep.subr.bf16.mxu0 0
      %425 = vmatpush1.bf16.msra.mxu0 0
      %426 = vmatprep.subr.bf16.mxu0 0
      %427 = vmatpush1.bf16.msra.mxu0 0
      %428 = vmatprep.subr.bf16.mxu0 0
      %429 = vmatpush1.bf16.msra.mxu0 0
      %430 = vmatprep.subr.bf16.mxu0 0
      %431 = vmatpush1.bf16.msra.mxu0 0
      %432 = vmatprep.subr.bf16.mxu0 0
      %433 = vmatpush1.bf16.msra.mxu0 0
      %434 = vmatprep.subr.bf16.mxu0 0
      %435 = vmatpush1.bf16.msra.mxu0 0
      %436 = vmatprep.subr.bf16.mxu0 0
      %437 = vmatpush1.bf16.msra.mxu0 %v421
      %438 = vmatprep.subr.bf16.mxu0 0
      %439 = vmatpush1.bf16.msra.mxu0 %v420
      %440 = vmatprep.subr.bf16.mxu0 0
      %441 = vmatpush2.bf16.msra.mxu0 0
      %442 = vmatprep.subr.bf16.mxu0 0
      %443 = vmatpush2.bf16.msra.mxu0 0
      %444 = vmatprep.subr.bf16.mxu0 0
      %445 = vmatpush2.bf16.msra.mxu0 0
      %446 = vmatprep.subr.bf16.mxu0 0
      %447 = vmatpush2.bf16.msra.mxu0 0
      %448 = vmatprep.subr.bf16.mxu0 0
      %449 = vmatpush2.bf16.msra.mxu0 0
      %450 = vmatprep.subr.bf16.mxu0 0
      %451 = vmatpush2.bf16.msra.mxu0 0
      %452 = vmatprep.subr.bf16.mxu0 0
      %453 = vmatpush2.bf16.msra.mxu0 0
      %454 = vmatprep.subr.bf16.mxu0 0
      %455 = vmatpush2.bf16.msra.mxu0 0
      %456 = vmatprep.mubr.bf16.mxu0 0
      %457 = vmatmul.mubr.bf16.gmra.mxu0 %v364
      %v458 = vpop.f32.mrf.mxu0
      %v459 = vadd.f32 0.0, %v458
      %v460 = vpop.f32.mrf.mxu0
      %v461 = vpop.f32.mrf.mxu0
      %v462 = vpop.f32.mrf.mxu0
      %463 = vdwg.mxu0
      %v465 = vrot.slane %v459, 1
      %v467 = vadd.f32 %v406, %v465
      %v468 = vld [vmem:[%s2] sm:$0x1]
      %v470 = vlaneseq
      %v471 = vshrl.u32 %v470, 7
      %v472 = vsub.s32 0, %v471
      %v473 = vrot.slane %v468, %v472
      %v475 = vadd.f32 %v467, %v473
      %p476 = scmp.eq.s32.totalorder %s20, 0
      %p477 = scmp.eq.s32.totalorder %s21, 0
      %p478 = pnand %p476, %p477
      %p479 = pneg %p478
      // Predicated region
      $region33: #{depth_model_forward.11} parent=31 // pred_check
        _
      $region34: #{depth_model_forward.11} parent=31 // pred_check_branch
        %481 = sbr.rel (%p478) target = $region36
      $region35: #{depth_model_forward.11} parent=31 // pred_region
        %vm482 = vcmask 123904
        %483 = vst.msk [vmem:[%s4] sm:$0x3] %vm482, 0.0
      $region36: #{depth_model_forward.11} parent=31 // pred_fallthru
        _
      %v484 = vld [vmem:[%s4] sm:$0x1]
      %vm485 = vcmask 125952
      %v486 = vsel %vm485, %v475, 0.0
      %v487 = vrot.slane %v486, 4
      %v488 = vadd.f32 %v486, %v487
      %v489 = vrot.slane %v488, 2
      %v490 = vadd.f32 %v488, %v489
      %v491 = vrot.slane %v490, 1
      %v492 = vadd.f32 %v490, %v491
      %v493 = vadd.f32 %v484, %v492
      %vm494 = vcmask 122880
      %495 = vst.msk [vmem:[%s4] sm:$0x1] %vm494, %v493
      %v496 = vld [vmem:[%s4 + $0x1] sm:$0x1]
      %v497 = vmul.f32 %v475, %v475
      %v498 = vsel %vm485, %v497, 0.0
      %v499 = vrot.slane %v498, 4
      %v500 = vadd.f32 %v498, %v499
      %v501 = vrot.slane %v500, 2
      %v502 = vadd.f32 %v500, %v501
      %v503 = vrot.slane %v502, 1
      %v504 = vadd.f32 %v502, %v503
      %v505 = vadd.f32 %v496, %v504
      %506 = vst.msk [vmem:[%s4 + $0x1] sm:$0x1] %vm494, %v505
      %v507 = vpack.c.bf16 %v475, %v475
      %vm508 = vcmask 123904
      %509 = vst.msk [vmem:[%s215] sm:$0x3] %vm508, %v507
      %p510 = scmp.lt.s32.totalorder %s20, 1
      %s511 = scalar_select %p510, %s20, 1
      %p512 = scmp.lt.s32.totalorder %s21, 3
      %s513 = scalar_select %p512, %s21, 3
      %s514 = smul.addr %s511, 4
      %s515 = sadd.s32 %s513, %s514
      %s516 = smul.addr %s515, 2
      %s517 = scalar_lea.vmem %s3, %s516
      // Predicated region
      $region37: #{depth_model_forward.11} parent=31 // pred_check
        %p518 = pneg %p116
      $region38: #{depth_model_forward.11} parent=31 // pred_check_branch
        %520 = sbr.rel (%p518) target = $region40
      $region39: #{depth_model_forward.11} parent=31 // pred_region
        _
      $region40: #{depth_model_forward.11} parent=31 // pred_fallthru
        _
      // Predicated region
      $region41: #{depth_model_forward.11} parent=31 // pred_check
        %p521 = pneg %p137
      $region42: #{depth_model_forward.11} parent=31 // pred_check_branch
        %523 = sbr.rel (%p521) target = $region44
      $region43: #{depth_model_forward.11} parent=31 // pred_region
        _
      $region44: #{depth_model_forward.11} parent=31 // pred_fallthru
        _
      // Predicated region
      $region45: #{depth_model_forward.11} parent=31 // pred_check
        %p524 = pneg %p137
      $region46: #{depth_model_forward.11} parent=31 // pred_check_branch
        %526 = sbr.rel (%p524) target = $region48
      $region47: #{depth_model_forward.11} parent=31 // pred_region
        _
      $region48: #{depth_model_forward.11} parent=31 // pred_fallthru
        _
    $region32: #{depth_model_forward.11} parent=5 // pred_fallthru
      _
    %p527 = scmp.le.s32.totalorder 2, %s11
    // Predicated region
    $region49: #{depth_model_forward.11} parent=5 // pred_check
      %p528 = pneg %p527
    $region50: #{depth_model_forward.11} parent=5 // pred_check_branch
      %530 = sbr.rel (%p528) target = $region52
    $region51: #{depth_model_forward.11} parent=5 // pred_region
      %s531 = ssub.s32 %s11, 2
      // Predicated region
      $region53: #{depth_model_forward.11} parent=51 // pred_check
        %p532 = pneg %p122
      $region54: #{depth_model_forward.11} parent=51 // pred_check_branch
        %534 = sbr.rel (%p532) target = $region56
      $region55: #{depth_model_forward.11} parent=51 // pred_region
        %p535 = scmp.lt.s32.totalorder %s22, 1
        %s536 = scalar_select %p535, %s22, 1
        %p537 = scmp.lt.s32.totalorder %s23, 3
        %s538 = scalar_select %p537, %s23, 3
        %s539 = smul.addr %s536, 4
        %s540 = sadd.s32 %s538, %s539
        %s541 = smul.addr %s540, 2
        %s542 = scalar_lea.vmem %s3, %s541
      $region56: #{depth_model_forward.11} parent=51 // pred_fallthru
        _
    $region52: #{depth_model_forward.11} parent=5 // pred_fallthru
      _
  $region6: #{depth_model_forward.11} parent=0 // loop_footer
    %s15 = sadd.s32 1, %s11
  $region7: #{depth_model_forward.11} parent=0 // loop_footer_branch
    %10 = sbr.rel target = $region3
  $region8: #{depth_model_forward.11} parent=0 // loop_exit
    _

// kernel: depth_model_forward.14
$region0: #{depth_model_forward.14}
  #allocation0 [shape = 'u32[]', space=smem, size = 0x4, offset = 0x4, fixed_abs, tag = 'smem constant byte address 0x4 - core index']
  #allocation1 [shape = 'u32[144,128]{1,0:T(1,128)}', space=vmem, size = 0x12000, scoped, tag = 'internal scratch']
  %s0 = inlined_call_operand.vmem [shape: bf16[8,32], index: 0, kind: input, shape index: {}]
  %s1 = inlined_call_operand.vmem [shape: f32[2,32], index: 1, kind: input, shape index: {}]
  %s2 = inlined_call_operand.vmem [shape: f32[1,32], index: 2, kind: input, shape index: {}]
  %s3 = inlined_call_operand.vmem [shape: f32[1,32], index: 3, kind: input, shape index: {}]
  %s4 = inlined_call_operand.vmem [shape: bf16[8,32], index: 4, kind: output, shape index: {}]
  %s5 = sld [smem:[#allocation0]]
  $region26: #{depth_model_forward.14} parent=0
    _
  %s7 = ssub.s32 1, %s5
  %s8 = scalar_select 0, %s7, %s5
  // Predicated region
  $region2: #{depth_model_forward.14} parent=0 // pred_check
    _
  $region3: #{depth_model_forward.14} parent=0 // pred_check_branch
    %10 = sbr.rel (0) target = $region5
  $region4: #{depth_model_forward.14} parent=0 // pred_region
    _
  $region5: #{depth_model_forward.14} parent=0 // pred_fallthru
    _
  // Predicated region
  $region6: #{depth_model_forward.14} parent=0 // pred_check
    _
  $region7: #{depth_model_forward.14} parent=0 // pred_check_branch
    %12 = sbr.rel (0) target = $region9
  $region8: #{depth_model_forward.14} parent=0 // pred_region
    _
  $region9: #{depth_model_forward.14} parent=0 // pred_fallthru
    _
  // Predicated region
  $region10: #{depth_model_forward.14} parent=0 // pred_check
    _
  $region11: #{depth_model_forward.14} parent=0 // pred_check_branch
    %14 = sbr.rel (0) target = $region13
  $region12: #{depth_model_forward.14} parent=0 // pred_region
    _
  $region13: #{depth_model_forward.14} parent=0 // pred_fallthru
    _
  // Predicated region
  $region14: #{depth_model_forward.14} parent=0 // pred_check
    _
  $region15: #{depth_model_forward.14} parent=0 // pred_check_branch
    %16 = sbr.rel (0) target = $region17
  $region16: #{depth_model_forward.14} parent=0 // pred_region
    _
  $region17: #{depth_model_forward.14} parent=0 // pred_fallthru
    _
  %v17 = vld [vmem:[%s1] sm:$0x1]
  %v18 = vmul.f32 %v17, 0.125
  %v19 = vld [vmem:[%s1 + $0x1] sm:$0x1]
  %v20 = vmul.f32 %v19, 0.125
  %v21 = vmul.f32 %v18, %v18
  %v22 = vsub.f32 %v20, %v21
  %v23 = vmax.f32 %v22, 0.0
  %v24 = vld [vmem:[%s2] sm:$0x1]
  %v25 = vadd.f32 %v23, 1e-05
  %v26 = vrsqrt.pop %v25
  %v27 = vmul.f32 %v24, %v26
  %v28 = vld [vmem:[%s3] sm:$0x1]
  %v29 = vmul.f32 %v18, %v27
  %v30 = vsub.f32 %v28, %v29
  %v31 = vld [vmem:[%s0] sm:$0xf]
  %v32 = vunpack.c.l.bf16 %v31
  %v34 = vlaneseq
  %v35 = vshrl.u32 %v34, 7
  %v36 = vsub.s32 0, %v35
  %v37 = vrot.slane %v27, %v36
  %v39 = vmul.f32 %v32, %v37
  %v41 = vlaneseq
  %v42 = vshrl.u32 %v41, 7
  %v43 = vsub.s32 0, %v42
  %v44 = vrot.slane %v30, %v43
  %v46 = vadd.f32 %v39, %v44
  %vm47 = vcmp.gt.f32.partialorder %v46, 0.0
  %v48 = vmul.f32 %v46, 0.2
  %v49 = vsel %vm47, %v46, %v48
  %v50 = vpack.c.bf16 %v49, %v49
  %vm51 = vcmask 257024
  %52 = vst.msk [vmem:[%s4] sm:$0xf] %vm51, %v50
  // Predicated region
  $region18: #{depth_model_forward.14} parent=0 // pred_check
    _
  $region19: #{depth_model_forward.14} parent=0 // pred_check_branch
    %54 = sbr.rel (0) target = $region21
  $region20: #{depth_model_forward.14} parent=0 // pred_region
    _
  $region21: #{depth_model_forward.14} parent=0 // pred_fallthru
    _
  // Predicated region
  $region22: #{depth_model_forward.14} parent=0 // pred_check
    _
  $region23: #{depth_model_forward.14} parent=0 // pred_check_branch
    %56 = sbr.rel (0) target = $region25
  $region24: #{depth_model_forward.14} parent=0 // pred_region
    _
  $region25: #{depth_model_forward.14} parent=0 // pred_fallthru
    _

// kernel: depth_model_forward.13
$region0: #{depth_model_forward.13}
  #allocation0 [shape = 'u32[]', space=smem, size = 0x4, offset = 0x4, fixed_abs, tag = 'smem constant byte address 0x4 - core index']
  #allocation1 [shape = 'u32[144,128]{1,0:T(1,128)}', space=vmem, size = 0x12000, scoped, tag = 'internal scratch']
  %s0 = inlined_call_operand.vmem [shape: bf16[2,3,3,64], index: 0, kind: input, shape index: {}]
  %s1 = inlined_call_operand.vmem [shape: bf16[4,64,32], index: 1, kind: input, shape index: {}]
  %s2 = inlined_call_operand.vmem [shape: f32[1,32], index: 2, kind: input, shape index: {}]
  %s3 = inlined_call_operand.vmem [shape: bf16[2,2,2,32], index: 3, kind: output, shape index: {0}]
  %s4 = inlined_call_operand.vmem [shape: f32[2,32], index: 4, kind: output, shape index: {1}]
  %5 = xla_tuple %s3, %s4
  %s6 = sld [smem:[#allocation0]]
  $region57: #{depth_model_forward.13} parent=0
    _
  %s8 = ssub.s32 1, %s6
  %s9 = scalar_select 0, %s8, %s6
  loop: start=0, step=1, limit=6
  $region2: #{depth_model_forward.13} parent=0 // loop_pre_header
    _
  $region3: #{depth_model_forward.13} parent=0 // loop_header
    %s11 = sphi 0, %s15
    %p12 = scmp.ge.s32.totalorder %s11, 6
    %s18 = sphi 0, %s30
    %s19 = sphi 0, %s26
    %s20 = sphi 0, %s18
    %s21 = sphi 0, %s19
    %s22 = sphi 0, %s20
    %s23 = sphi 0, %s21
    %s33 = sphi 0, %s35
    %s36 = sphi 0, %s33
    %s37 = sphi 0, %s36
    %s53 = sphi 0, %s37
    %s57 = sphi 0, %s57
    %s59 = sphi 0, %s57
    %s60 = sphi 0, %s59
    %s74 = sphi 0, %s60
    %s78 = sphi 0, %s78
    %s80 = sphi 0, %s78
    %s81 = sphi 0, %s80
    %s95 = sphi 0, %s81
    %s103 = sphi 0, %s105
    %s106 = sphi 0, %s103
    %s107 = sphi 0, %s106
    %s123 = sphi 0, %s107
    %s127 = sphi 0, %s127
    %s129 = sphi 0, %s127
    %s130 = sphi 0, %s129
    %s144 = sphi 0, %s130
  $region4: #{depth_model_forward.13} parent=0 // loop_header_branch
    %14 = sbr.rel (%p12) target = $region8
  $region5: #{depth_model_forward.13} parent=0 // loop_body
    %s16 = ssub.s32 %s11, 1
    %s17 = ssub.s32 %s11, 2
    %s24 = sadd.s32 1, %s19
    %p25 = scmp.ge.s32.totalorder %s24, 2
    %s26 = scalar_select %p25, 0, %s24
    %s27 = sadd.s32 1, %s18
    %s28 = scalar_select %p25, %s27, %s18
    %p29 = scmp.ge.s32.totalorder %s28, 2
    %s30 = scalar_select %p29, 0, %s28
    %s31 = ssub.s32 %s18, %s30
    %p32 = scmp.eq.s32.totalorder %s31, 0
    %s34 = sadd.s32 %s33, 1
    %s35 = scalar_select %p32, %s33, %s34
    %p38 = pneg %p32
    %p39 = scmp.eq.s32.totalorder %s11, 3
    %p40 = por %p38, %p39
    %p41 = scmp.ne.s32.totalorder %s33, %s36
    %p42 = scmp.eq.s32.totalorder %s11, 0
    %p43 = por %p41, %p42
    %p44 = scmp.ne.s32.totalorder %s33, %s36
    %p45 = scmp.eq.s32.totalorder %s16, 3
    %p46 = por %p44, %p45
    %p47 = scmp.ne.s32.totalorder %s36, %s37
    %p48 = scmp.eq.s32.totalorder %s16, 0
    %p49 = por %p47, %p48
    %p50 = scmp.ne.s32.totalorder %s36, %s37
    %p51 = scmp.eq.s32.totalorder %s17, 3
    %p52 = por %p50, %p51
    %p54 = scmp.ne.s32.totalorder %s37, %s53
    %p55 = scmp.eq.s32.totalorder %s17, 0
    %p56 = por %p54, %p55
    %s58 = sadd.s32 %s57, 1
    %p61 = scmp.eq.s32.totalorder %s11, 3
    %p62 = scmp.ne.s32.totalorder %s57, %s59
    %p63 = scmp.eq.s32.totalorder %s11, 0
    %p64 = por %p62, %p63
    %p65 = scmp.ne.s32.totalorder %s57, %s59
    %p66 = scmp.eq.s32.totalorder %s16, 3
    %p67 = por %p65, %p66
    %p68 = scmp.ne.s32.totalorder %s59, %s60
    %p69 = scmp.eq.s32.totalorder %s16, 0
    %p70 = por %p68, %p69
    %p71 = scmp.ne.s32.totalorder %s59, %s60
    %p72 = scmp.eq.s32.totalorder %s17, 3
    %p73 = por %p71, %p72
    %p75 = scmp.ne.s32.totalorder %s60, %s74
    %p76 = scmp.eq.s32.totalorder %s17, 0
    %p77 = por %p75, %p76
    %s79 = sadd.s32 %s78, 1
    %p82 = scmp.eq.s32.totalorder %s11, 3
    %p83 = scmp.ne.s32.totalorder %s78, %s80
    %p84 = scmp.eq.s32.totalorder %s11, 0
    %p85 = por %p83, %p84
    %p86 = scmp.ne.s32.totalorder %s78, %s80
    %p87 = scmp.eq.s32.totalorder %s16, 3
    %p88 = por %p86, %p87
    %p89 = scmp.ne.s32.totalorder %s80, %s81
    %p90 = scmp.eq.s32.totalorder %s16, 0
    %p91 = por %p89, %p90
    %p92 = scmp.ne.s32.totalorder %s80, %s81
    %p93 = scmp.eq.s32.totalorder %s17, 3
    %p94 = por %p92, %p93
    %p96 = scmp.ne.s32.totalorder %s81, %s95
    %p97 = scmp.eq.s32.totalorder %s17, 0
    %p98 = por %p96, %p97
    %s99 = ssub.s32 %s18, %s30
    %s100 = ssub.s32 %s19, %s26
    %s101 = sor.u32 %s99, %s100
    %p102 = scmp.eq.s32.totalorder %s101, 0
    %s104 = sadd.s32 %s103, 1
    %s105 = scalar_select %p102, %s103, %s104
    %p108 = pneg %p102
    %p109 = scmp.eq.s32.totalorder %s11, 3
    %p110 = por %p108, %p109
    %p111 = scmp.ne.s32.totalorder %s103, %s106
    %p112 = scmp.eq.s32.totalorder %s11, 0
    %p113 = por %p111, %p112
    %p114 = scmp.ne.s32.totalorder %s103, %s106
    %p115 = scmp.eq.s32.totalorder %s16, 3
    %p116 = por %p114, %p115
    %p117 = scmp.ne.s32.totalorder %s106, %s107
    %p118 = scmp.eq.s32.totalorder %s16, 0
    %p119 = por %p117, %p118
    %p120 = scmp.ne.s32.totalorder %s106, %s107
    %p121 = scmp.eq.s32.totalorder %s17, 3
    %p122 = por %p120, %p121
    %p124 = scmp.ne.s32.totalorder %s107, %s123
    %p125 = scmp.eq.s32.totalorder %s17, 0
    %p126 = por %p124, %p125
    %s128 = sadd.s32 %s127, 1
    %p131 = scmp.eq.s32.totalorder %s11, 3
    %p132 = scmp.ne.s32.totalorder %s127, %s129
    %p133 = scmp.eq.s32.totalorder %s11, 0
    %p134 = por %p132, %p133
    %p135 = scmp.ne.s32.totalorder %s127, %s129
    %p136 = scmp.eq.s32.totalorder %s16, 3
    %p137 = por %p135, %p136
    %p138 = scmp.ne.s32.totalorder %s129, %s130
    %p139 = scmp.eq.s32.totalorder %s16, 0
    %p140 = por %p138, %p139
    %p141 = scmp.ne.s32.totalorder %s129, %s130
    %p142 = scmp.eq.s32.totalorder %s17, 3
    %p143 = por %p141, %p142
    %p145 = scmp.ne.s32.totalorder %s130, %s144
    %p146 = scmp.eq.s32.totalorder %s17, 0
    %p147 = por %p145, %p146
    %p148 = scmp.le.s32.totalorder 1, %s11
    %p149 = scmp.lt.s32.totalorder %s11, 5
    %p150 = pnand %p148, %p149
    %p151 = pneg %p150
    // Predicated region
    $region9: #{depth_model_forward.13} parent=5 // pred_check
      _
    $region10: #{depth_model_forward.13} parent=5 // pred_check_branch
      %153 = sbr.rel (%p150) target = $region12
    $region11: #{depth_model_forward.13} parent=5 // pred_region
      %s154 = ssub.s32 %s11, 1
      // Predicated region
      $region13: #{depth_model_forward.13} parent=11 // pred_check
        %p155 = pneg %p70
      $region14: #{depth_model_forward.13} parent=11 // pred_check_branch
        %157 = sbr.rel (%p155) target = $region16
      $region15: #{depth_model_forward.13} parent=11 // pred_region
        _
      $region16: #{depth_model_forward.13} parent=11 // pred_fallthru
        _
      // Predicated region
      $region17: #{depth_model_forward.13} parent=11 // pred_check
        %p158 = pneg %p91
      $region18: #{depth_model_forward.13} parent=11 // pred_check_branch
        %160 = sbr.rel (%p158) target = $region20
      $region19: #{depth_model_forward.13} parent=11 // pred_region
        _
      $region20: #{depth_model_forward.13} parent=11 // pred_fallthru
        _
    $region12: #{depth_model_forward.13} parent=5 // pred_fallthru
      _
    %p161 = scmp.lt.s32.totalorder %s11, 4
    // Predicated region
    $region21: #{depth_model_forward.13} parent=5 // pred_check
      %p162 = pneg %p161
    $region22: #{depth_model_forward.13} parent=5 // pred_check_branch
      %164 = sbr.rel (%p162) target = $region24
    $region23: #{depth_model_forward.13} parent=5 // pred_region
      // Predicated region
      $region25: #{depth_model_forward.13} parent=23 // pred_check
        %p165 = pneg %p43
      $region26: #{depth_model_forward.13} parent=23 // pred_check_branch
        %167 = sbr.rel (%p165) target = $region28
      $region27: #{depth_model_forward.13} parent=23 // pred_region
        %p168 = scmp.lt.s32.totalorder %s18, 1
        %s169 = scalar_select %p168, %s18, 1
        %s170 = smul.addr %s169, 3
        %s171 = smul.addr %s170, 2
        %s172 = scalar_lea.vmem %s0, %s171
      $region28: #{depth_model_forward.13} parent=23 // pred_fallthru
        _
    $region24: #{depth_model_forward.13} parent=5 // pred_fallthru
      _
    %p173 = scmp.le.s32.totalorder 1, %s11
    %p174 = scmp.lt.s32.totalorder %s11, 5
    %p175 = pnand %p173, %p174
    %p176 = pneg %p175
    // Predicated region
    $region29: #{depth_model_forward.13} parent=5 // pred_check
      _
    $region30: #{depth_model_forward.13} parent=5 // pred_check_branch
      %178 = sbr.rel (%p175) target = $region32
    $region31: #{depth_model_forward.13} parent=5 // pred_region
      %s179 = ssub.s32 %s11, 1
      %p180 = scmp.lt.s32.totalorder %s20, 1
      %s181 = scalar_select %p180, %s20, 1
      %s182 = smul.addr %s181, 3
      %s183 = smul.addr %s182, 2
      %s184 = scalar_lea.vmem %s0, %s183
      %p185 = pneg %p49
      %p186 = pneg %p46
      %p187 = pneg %p70
      %p188 = pneg %p67
      %p189 = pneg %p91
      %p190 = pneg %p88
      %p191 = pneg %p119
      %p192 = pneg %p116
      %p193 = scmp.lt.s32.totalorder %s20, 1
      %s194 = scalar_select %p193, %s20, 1
      %p195 = scmp.lt.s32.totalorder %s21, 1
      %s196 = scalar_select %p195, %s21, 1
      %s197 = smul.addr %s194, 2
      %s198 = sadd.s32 %s196, %s197
      %s199 = scalar_lea.vmem %s3, %s198
      %p200 = pneg %p140
      %p201 = pneg %p137
      %p202 = scmp.lt.s32.totalorder %s20, 1
      %s203 = scalar_select %p202, %s20, 1
      %s204 = smul.addr %s203, 3
      %s205 = smul.addr %s204, 2
      %s206 = scalar_lea.vmem %s0, %s205
      %p207 = scmp.lt.s32.totalorder %s20, 1
      %s208 = scalar_select %p207, %s20, 1
      %p209 = scmp.lt.s32.totalorder %s21, 1
      %s210 = scalar_select %p209, %s21, 1
      %s211 = smul.addr %s208, 2
      %s212 = sadd.s32 %s210, %s211
      %s213 = scalar_lea.vmem %s3, %s212
      %s215 = smul.addr %s21, 2
      %s216 = scalar_lea.vmem %s206, %s215
      %v217 = vld [vmem:[%s216] sm:$0x3]
      %v218 = vld [vmem:[%s1] sm:$0xf]
      %v219 = vld [vmem:[%s1 + $0x4] sm:$0xf]
      %v220 = vld [vmem:[%s1 + $0x8] sm:$0xf]
      %v221 = vld [vmem:[%s1 + $0xc] sm:$0xf]
      %v222 = vld [vmem:[%s1 + $0x10] sm:$0xf]
      %v223 = vld [vmem:[%s1 + $0x14] sm:$0xf]
      %v224 = vld [vmem:[%s1 + $0x18] sm:$0xf]
      %v225 = vld [vmem:[%s1 + $0x1c] sm:$0xf]
      %v234 = vunpack.c.l.b16 %v218
      %v235 = vunpack.c.l.b16 %v219
      %v236 = vunpack.c.l.b16 %v220
      %v237 = vunpack.c.l.b16 %v221
      %v238 = vunpack.c.l.b16 %v222
      %v239 = vunpack.c.l.b16 %v223
      %v240 = vunpack.c.l.b16 %v224
      %v241 = vunpack.c.l.b16 %v225
      %v242 = vpack.c.b16 %v235, %v234
      %v243 = vpack.c.b16 %v237, %v236
      %v244 = vpack.c.b16 %v239, %v238
      %v245 = vpack.c.b16 %v241, %v240
      %vm250 = vcmask 523264
      %v252 = vsel %vm250, %v217, 0
      %254 = vmatprep.subr.bf16.mxu0 0
      %255 = vmatpush1.bf16.msra.mxu0 0
      %256 = vmatprep.subr.bf16.mxu0 0
      %257 = vmatpush1.bf16.msra.mxu0 0
      %258 = vmatprep.subr.bf16.mxu0 0
      %259 = vmatpush1.bf16.msra.mxu0 0
      %260 = vmatprep.subr.bf16.mxu0 0
      %261 = vmatpush1.bf16.msra.mxu0 0
      %262 = vmatprep.subr.bf16.mxu0 0
      %263 = vmatpush1.bf16.msra.mxu0 %v245
      %264 = vmatprep.subr.bf16.mxu0 0
      %265 = vmatpush1.bf16.msra.mxu0 %v244
      %266 = vmatprep.subr.bf16.mxu0 0
      %267 = vmatpush1.bf16.msra.mxu0 %v243
      %268 = vmatprep.subr.bf16.mxu0 0
      %269 = vmatpush1.bf16.msra.mxu0 %v242
      %270 = vmatprep.subr.bf16.mxu0 0
      %271 = vmatpush2.bf16.msra.mxu0 0
      %272 = vmatprep.subr.bf16.mxu0 0
      %273 = vmatpush2.bf16.msra.mxu0 0
      %274 = vmatprep.subr.bf16.mxu0 0
      %275 = vmatpush2.bf16.msra.mxu0 0
      %276 = vmatprep.subr.bf16.mxu0 0
      %277 = vmatpush2.bf16.msra.mxu0 0
      %278 = vmatprep.subr.bf16.mxu0 0
      %279 = vmatpush2.bf16.msra.mxu0 0
      %280 = vmatprep.subr.bf16.mxu0 0
      %281 = vmatpush2.bf16.msra.mxu0 0
      %282 = vmatprep.subr.bf16.mxu0 0
      %283 = vmatpush2.bf16.msra.mxu0 0
      %284 = vmatprep.subr.bf16.mxu0 0
      %285 = vmatpush2.bf16.msra.mxu0 0
      %286 = vmatprep.mubr.bf16.mxu0 0
      %287 = vmatmul.mubr.bf16.gmra.mxu0 %v252
      %v288 = vpop.f32.mrf.mxu0
      %v289 = vadd.f32 0.0, %v288
      %v290 = vpop.f32.mrf.mxu0
      %v291 = vpop.f32.mrf.mxu0
      %v292 = vpop.f32.mrf.mxu0
      %293 = vdwg.mxu0
      %v294 = vadd.f32 %v289, 0.0
      %s295 = scalar_lea.vmem %s1, 32
      %v296 = vld [vmem:[%s295] sm:$0xf]
      %v297 = vld [vmem:[%s295 + $0x4] sm:$0xf]
      %v298 = vld [vmem:[%s295 + $0x8] sm:$0xf]
      %v299 = vld [vmem:[%s295 + $0xc] sm:$0xf]
      %v300 = vld [vmem:[%s295 + $0x10] sm:$0xf]
      %v301 = vld [vmem:[%s295 + $0x14] sm:$0xf]
      %v302 = vld [vmem:[%s295 + $0x18] sm:$0xf]
      %v303 = vld [vmem:[%s295 + $0x1c] sm:$0xf]
      %v312 = vunpack.c.l.b16 %v296
      %v313 = vunpack.c.l.b16 %v297
      %v314 = vunpack.c.l.b16 %v298
      %v315 = vunpack.c.l.b16 %v299
      %v316 = vunpack.c.l.b16 %v300
      %v317 = vunpack.c.l.b16 %v301
      %v318 = vunpack.c.l.b16 %v302
      %v319 = vunpack.c.l.b16 %v303
      %v320 = vpack.c.b16 %v313, %v312
      %v321 = vpack.c.b16 %v315, %v314
      %v322 = vpack.c.b16 %v317, %v316
      %v323 = vpack.c.b16 %v319, %v318
      %328 = vmatprep.subr.bf16.mxu0 0
      %329 = vmatpush1.bf16.msra.mxu0 0
      %330 = vmatprep.subr.bf16.mxu0 0
      %331 = vmatpush1.bf16.msra.mxu0 0
      %332 = vmatprep.subr.bf16.mxu0 0
      %333 = vmatpush1.bf16.msra.mxu0 0
      %334 = vmatprep.subr.bf16.mxu0 0
      %335 = vmatpush1.bf16.msra.mxu0 0
      %336 = vmatprep.subr.bf16.mxu0 0
      %337 = vmatpush1.bf16.msra.mxu0 %v323
      %338 = vmatprep.subr.bf16.mxu0 0
      %339 = vmatpush1.bf16.msra.mxu0 %v322
      %340 = vmatprep.subr.bf16.mxu0 0
      %341 = vmatpush1.bf16.msra.mxu0 %v321
      %342 = vmatprep.subr.bf16.mxu0 0
      %343 = vmatpush1.bf16.msra.mxu0 %v320
      %344 = vmatprep.subr.bf16.mxu0 0
      %345 = vmatpush2.bf16.msra.mxu0 0
      %346 = vmatprep.subr.bf16.mxu0 0
      %347 = vmatpush2.bf16.msra.mxu0 0
      %348 = vmatprep.subr.bf16.mxu0 0
      %349 = vmatpush2.bf16.msra.mxu0 0
      %350 = vmatprep.subr.bf16.mxu0 0
      %351 = vmatpush2.bf16.msra.mxu0 0
      %352 = vmatprep.subr.bf16.mxu0 0
      %353 = vmatpush2.bf16.msra.mxu0 0
      %354 = vmatprep.subr.bf16.mxu0 0
      %355 = vmatpush2.bf16.msra.mxu0 0
      %356 = vmatprep.subr.bf16.mxu0 0
      %357 = vmatpush2.bf16.msra.mxu0 0
      %358 = vmatprep.subr.bf16.mxu0 0
      %359 = vmatpush2.bf16.msra.mxu0 0
      %360 = vmatprep.mubr.bf16.mxu0 0
      %361 = vmatmul.mubr.bf16.gmra.mxu0 %v252
      %v362 = vpop.f32.mrf.mxu0
      %v363 = vadd.f32 0.0, %v362
      %v364 = vpop.f32.mrf.mxu0
      %v365 = vpop.f32.mrf.mxu0
      %v366 = vpop.f32.mrf.mxu0
      %367 = vdwg.mxu0
      %v369 = vrot.slane %v363, 1
      %v371 = vadd.f32 %v294, %v369
      %s372 = sadd.s32 %s21, 1
      %s373 = smul.addr %s372, 2
      %s374 = scalar_lea.vmem %s206, %s373
      %v375 = vld [vmem:[%s374] sm:$0x3]
      %s376 = scalar_lea.vmem %s1, 64
      %v377 = vld [vmem:[%s376] sm:$0xf]
      %v378 = vld [vmem:[%s376 + $0x4] sm:$0xf]
      %v379 = vld [vmem:[%s376 + $0x8] sm:$0xf]
      %v380 = vld [vmem:[%s376 + $0xc] sm:$0xf]
      %v381 = vld [vmem:[%s376 + $0x10] sm:$0xf]
      %v382 = vld [vmem:[%s376 + $0x14] sm:$0xf]
      %v383 = vld [vmem:[%s376 + $0x18] sm:$0xf]
      %v384 = vld [vmem:[%s376 + $0x1c] sm:$0xf]
      %v393 = vunpack.c.l.b16 %v377
      %v394 = vunpack.c.l.b16 %v378
      %v395 = vunpack.c.l.b16 %v379
      %v396 = vunpack.c.l.b16 %v380
      %v397 = vunpack.c.l.b16 %v381
      %v398 = vunpack.c.l.b16 %v382
      %v399 = vunpack.c.l.b16 %v383
      %v400 = vunpack.c.l.b16 %v384
      %v401 = vpack.c.b16 %v394, %v393
      %v402 = vpack.c.b16 %v396, %v395
      %v403 = vpack.c.b16 %v398, %v397
      %v404 = vpack.c.b16 %v400, %v399
      %v410 = vsel %vm250, %v375, 0
      %412 = vmatprep.subr.bf16.mxu0 0
      %413 = vmatpush1.bf16.msra.mxu0 0
      %414 = vmatprep.subr.bf16.mxu0 0
      %415 = vmatpush1.bf16.msra.mxu0 0
      %416 = vmatprep.subr.bf16.mxu0 0
      %417 = vmatpush1.bf16.msra.mxu0 0
      %418 = vmatprep.subr.bf16.mxu0 0
      %419 = vmatpush1.bf16.msra.mxu0 0
      %420 = vmatprep.subr.bf16.mxu0 0
      %421 = vmatpush1.bf16.msra.mxu0 %v404
      %422 = vmatprep.subr.bf16.mxu0 0
      %423 = vmatpush1.bf16.msra.mxu0 %v403
      %424 = vmatprep.subr.bf16.mxu0 0
      %425 = vmatpush1.bf16.msra.mxu0 %v402
      %426 = vmatprep.subr.bf16.mxu0 0
      %427 = vmatpush1.bf16.msra.mxu0 %v401
      %428 = vmatprep.subr.bf16.mxu0 0
      %429 = vmatpush2.bf16.msra.mxu0 0
      %430 = vmatprep.subr.bf16.mxu0 0
      %431 = vmatpush2.bf16.msra.mxu0 0
      %432 = vmatprep.subr.bf16.mxu0 0
      %433 = vmatpush2.bf16.msra.mxu0 0
      %434 = vmatprep.subr.bf16.mxu0 0
      %435 = vmatpush2.bf16.msra.mxu0 0
      %436 = vmatprep.subr.bf16.mxu0 0
      %437 = vmatpush2.bf16.msra.mxu0 0
      %438 = vmatprep.subr.bf16.mxu0 0
      %439 = vmatpush2.bf16.msra.mxu0 0
      %440 = vmatprep.subr.bf16.mxu0 0
      %441 = vmatpush2.bf16.msra.mxu0 0
      %442 = vmatprep.subr.bf16.mxu0 0
      %443 = vmatpush2.bf16.msra.mxu0 0
      %444 = vmatprep.mubr.bf16.mxu0 0
      %445 = vmatmul.mubr.bf16.gmra.mxu0 %v410
      %v446 = vpop.f32.mrf.mxu0
      %v447 = vadd.f32 0.0, %v446
      %v448 = vpop.f32.mrf.mxu0
      %v449 = vpop.f32.mrf.mxu0
      %v450 = vpop.f32.mrf.mxu0
      %451 = vdwg.mxu0
      %v452 = vadd.f32 %v371, %v447
      %s453 = scalar_lea.vmem %s1, 96
      %v454 = vld [vmem:[%s453] sm:$0xf]
      %v455 = vld [vmem:[%s453 + $0x4] sm:$0xf]
      %v456 = vld [vmem:[%s453 + $0x8] sm:$0xf]
      %v457 = vld [vmem:[%s453 + $0xc] sm:$0xf]
      %v458 = vld [vmem:[%s453 + $0x10] sm:$0xf]
      %v459 = vld [vmem:[%s453 + $0x14] sm:$0xf]
      %v460 = vld [vmem:[%s453 + $0x18] sm:$0xf]
      %v461 = vld [vmem:[%s453 + $0x1c] sm:$0xf]
      %v470 = vunpack.c.l.b16 %v454
      %v471 = vunpack.c.l.b16 %v455
      %v472 = vunpack.c.l.b16 %v456
      %v473 = vunpack.c.l.b16 %v457
      %v474 = vunpack.c.l.b16 %v458
      %v475 = vunpack.c.l.b16 %v459
      %v476 = vunpack.c.l.b16 %v460
      %v477 = vunpack.c.l.b16 %v461
      %v478 = vpack.c.b16 %v471, %v470
      %v479 = vpack.c.b16 %v473, %v472
      %v480 = vpack.c.b16 %v475, %v474
      %v481 = vpack.c.b16 %v477, %v476
      %486 = vmatprep.subr.bf16.mxu0 0
      %487 = vmatpush1.bf16.msra.mxu0 0
      %488 = vmatprep.subr.bf16.mxu0 0
      %489 = vmatpush1.bf16.msra.mxu0 0
      %490 = vmatprep.subr.bf16.mxu0 0
      %491 = vmatpush1.bf16.msra.mxu0 0
      %492 = vmatprep.subr.bf16.mxu0 0
      %493 = vmatpush1.bf16.msra.mxu0 0
      %494 = vmatprep.subr.bf16.mxu0 0
      %495 = vmatpush1.bf16.msra.mxu0 %v481
      %496 = vmatprep.subr.bf16.mxu0 0
      %497 = vmatpush1.bf16.msra.mxu0 %v480
      %498 = vmatprep.subr.bf16.mxu0 0
      %499 = vmatpush1.bf16.msra.mxu0 %v479
      %500 = vmatprep.subr.bf16.mxu0 0
      %501 = vmatpush1.bf16.msra.mxu0 %v478
      %502 = vmatprep.subr.bf16.mxu0 0
      %503 = vmatpush2.bf16.msra.mxu0 0
      %504 = vmatprep.subr.bf16.mxu0 0
      %505 = vmatpush2.bf16.msra.mxu0 0
      %506 = vmatprep.subr.bf16.mxu0 0
      %507 = vmatpush2.bf16.msra.mxu0 0
      %508 = vmatprep.subr.bf16.mxu0 0
      %509 = vmatpush2.bf16.msra.mxu0 0
      %510 = vmatprep.subr.bf16.mxu0 0
      %511 = vmatpush2.bf16.msra.mxu0 0
      %512 = vmatprep.subr.bf16.mxu0 0
      %513 = vmatpush2.bf16.msra.mxu0 0
      %514 = vmatprep.subr.bf16.mxu0 0
      %515 = vmatpush2.bf16.msra.mxu0 0
      %516 = vmatprep.subr.bf16.mxu0 0
      %517 = vmatpush2.bf16.msra.mxu0 0
      %518 = vmatprep.mubr.bf16.mxu0 0
      %519 = vmatmul.mubr.bf16.gmra.mxu0 %v410
      %v520 = vpop.f32.mrf.mxu0
      %v521 = vadd.f32 0.0, %v520
      %v522 = vpop.f32.mrf.mxu0
      %v523 = vpop.f32.mrf.mxu0
      %v524 = vpop.f32.mrf.mxu0
      %525 = vdwg.mxu0
      %v527 = vrot.slane %v521, 1
      %v529 = vadd.f32 %v452, %v527
      %v530 = vld [vmem:[%s2] sm:$0x1]
      %v532 = vlaneseq
      %v533 = vshrl.u32 %v532, 7
      %v534 = vsub.s32 0, %v533
      %v535 = vrot.slane %v530, %v534
      %v537 = vadd.f32 %v529, %v535
      %p538 = scmp.eq.s32.totalorder %s20, 0
      %p539 = scmp.eq.s32.totalorder %s21, 0
      %p540 = pnand %p538, %p539
      %p541 = pneg %p540
      // Predicated region
      $region33: #{depth_model_forward.13} parent=31 // pred_check
        _
      $region34: #{depth_model_forward.13} parent=31 // pred_check_branch
        %543 = sbr.rel (%p540) target = $region36
      $region35: #{depth_model_forward.13} parent=31 // pred_region
        %vm544 = vcmask 254976
        %545 = vst.msk [vmem:[%s4] sm:$0x3] %vm544, 0.0
      $region36: #{depth_model_forward.13} parent=31 // pred_fallthru
        _
      %v546 = vld [vmem:[%s4] sm:$0x1]
      %vm547 = vcmask 254976
      %v548 = vsel %vm547, %v537, 0.0
      %v549 = vrot.slane %v548, 4
      %v550 = vadd.f32 %v548, %v549
      %v551 = vrot.slane %v550, 2
      %v552 = vadd.f32 %v550, %v551
      %v553 = vrot.slane %v552, 1
      %v554 = vadd.f32 %v552, %v553
      %v555 = vadd.f32 %v546, %v554
      %vm556 = vcmask 253952
      %557 = vst.msk [vmem:[%s4] sm:$0x1] %vm556, %v555
      %v558 = vld [vmem:[%s4 + $0x1] sm:$0x1]
      %v559 = vmul.f32 %v537, %v537
      %v560 = vsel %vm547, %v559, 0.0
      %v561 = vrot.slane %v560, 4
      %v562 = vadd.f32 %v560, %v561
      %v563 = vrot.slane %v562, 2
      %v564 = vadd.f32 %v562, %v563
      %v565 = vrot.slane %v564, 1
      %v566 = vadd.f32 %v564, %v565
      %v567 = vadd.f32 %v558, %v566
      %568 = vst.msk [vmem:[%s4 + $0x1] sm:$0x1] %vm556, %v567
      %v569 = vpack.c.bf16 %v537, %v537
      %570 = vst.msk [vmem:[%s213] sm:$0x1] %vm556, %v569
      %p571 = scmp.lt.s32.totalorder %s20, 1
      %s572 = scalar_select %p571, %s20, 1
      %p573 = scmp.lt.s32.totalorder %s21, 1
      %s574 = scalar_select %p573, %s21, 1
      %s575 = smul.addr %s572, 2
      %s576 = sadd.s32 %s574, %s575
      %s577 = scalar_lea.vmem %s3, %s576
      // Predicated region
      $region37: #{depth_model_forward.13} parent=31 // pred_check
        %p578 = pneg %p116
      $region38: #{depth_model_forward.13} parent=31 // pred_check_branch
        %580 = sbr.rel (%p578) target = $region40
      $region39: #{depth_model_forward.13} parent=31 // pred_region
        _
      $region40: #{depth_model_forward.13} parent=31 // pred_fallthru
        _
      // Predicated region
      $region41: #{depth_model_forward.13} parent=31 // pred_check
        %p581 = pneg %p137
      $region42: #{depth_model_forward.13} parent=31 // pred_check_branch
        %583 = sbr.rel (%p581) target = $region44
      $region43: #{depth_model_forward.13} parent=31 // pred_region
        _
      $region44: #{depth_model_forward.13} parent=31 // pred_fallthru
        _
      // Predicated region
      $region45: #{depth_model_forward.13} parent=31 // pred_check
        %p584 = pneg %p137
      $region46: #{depth_model_forward.13} parent=31 // pred_check_branch
        %586 = sbr.rel (%p584) target = $region48
      $region47: #{depth_model_forward.13} parent=31 // pred_region
        _
      $region48: #{depth_model_forward.13} parent=31 // pred_fallthru
        _
    $region32: #{depth_model_forward.13} parent=5 // pred_fallthru
      _
    %p587 = scmp.le.s32.totalorder 2, %s11
    // Predicated region
    $region49: #{depth_model_forward.13} parent=5 // pred_check
      %p588 = pneg %p587
    $region50: #{depth_model_forward.13} parent=5 // pred_check_branch
      %590 = sbr.rel (%p588) target = $region52
    $region51: #{depth_model_forward.13} parent=5 // pred_region
      %s591 = ssub.s32 %s11, 2
      // Predicated region
      $region53: #{depth_model_forward.13} parent=51 // pred_check
        %p592 = pneg %p122
      $region54: #{depth_model_forward.13} parent=51 // pred_check_branch
        %594 = sbr.rel (%p592) target = $region56
      $region55: #{depth_model_forward.13} parent=51 // pred_region
        %p595 = scmp.lt.s32.totalorder %s22, 1
        %s596 = scalar_select %p595, %s22, 1
        %p597 = scmp.lt.s32.totalorder %s23, 1
        %s598 = scalar_select %p597, %s23, 1
        %s599 = smul.addr %s596, 2
        %s600 = sadd.s32 %s598, %s599
        %s601 = scalar_lea.vmem %s3, %s600
      $region56: #{depth_model_forward.13} parent=51 // pred_fallthru
        _
    $region52: #{depth_model_forward.13} parent=5 // pred_fallthru
      _
  $region6: #{depth_model_forward.13} parent=0 // loop_footer
    %s15 = sadd.s32 1, %s11
  $region7: #{depth_model_forward.13} parent=0 // loop_footer_branch
    %10 = sbr.rel target = $region3
  $region8: #{depth_model_forward.13} parent=0 // loop_exit
    _

// kernel: depth_model_forward.16
$region0: #{depth_model_forward.16}
  #allocation0 [shape = 'u32[]', space=smem, size = 0x4, offset = 0x4, fixed_abs, tag = 'smem constant byte address 0x4 - core index']
  #allocation1 [shape = 'u32[144,128]{1,0:T(1,128)}', space=vmem, size = 0x12000, scoped, tag = 'internal scratch']
  %s0 = inlined_call_operand.vmem [shape: bf16[32,16], index: 0, kind: input, shape index: {}]
  %s1 = inlined_call_operand.vmem [shape: f32[2,16], index: 1, kind: input, shape index: {}]
  %s2 = inlined_call_operand.vmem [shape: f32[1,16], index: 2, kind: input, shape index: {}]
  %s3 = inlined_call_operand.vmem [shape: f32[1,16], index: 3, kind: input, shape index: {}]
  %s4 = inlined_call_operand.vmem [shape: bf16[32,16], index: 4, kind: output, shape index: {}]
  %s5 = sld [smem:[#allocation0]]
  $region26: #{depth_model_forward.16} parent=0
    _
  %s7 = ssub.s32 1, %s5
  %s8 = scalar_select 0, %s7, %s5
  // Predicated region
  $region2: #{depth_model_forward.16} parent=0 // pred_check
    _
  $region3: #{depth_model_forward.16} parent=0 // pred_check_branch
    %10 = sbr.rel (0) target = $region5
  $region4: #{depth_model_forward.16} parent=0 // pred_region
    _
  $region5: #{depth_model_forward.16} parent=0 // pred_fallthru
    _
  // Predicated region
  $region6: #{depth_model_forward.16} parent=0 // pred_check
    _
  $region7: #{depth_model_forward.16} parent=0 // pred_check_branch
    %12 = sbr.rel (0) target = $region9
  $region8: #{depth_model_forward.16} parent=0 // pred_region
    _
  $region9: #{depth_model_forward.16} parent=0 // pred_fallthru
    _
  // Predicated region
  $region10: #{depth_model_forward.16} parent=0 // pred_check
    _
  $region11: #{depth_model_forward.16} parent=0 // pred_check_branch
    %14 = sbr.rel (0) target = $region13
  $region12: #{depth_model_forward.16} parent=0 // pred_region
    _
  $region13: #{depth_model_forward.16} parent=0 // pred_fallthru
    _
  // Predicated region
  $region14: #{depth_model_forward.16} parent=0 // pred_check
    _
  $region15: #{depth_model_forward.16} parent=0 // pred_check_branch
    %16 = sbr.rel (0) target = $region17
  $region16: #{depth_model_forward.16} parent=0 // pred_region
    _
  $region17: #{depth_model_forward.16} parent=0 // pred_fallthru
    _
  %v17 = vld [vmem:[%s1] sm:$0x1]
  %v18 = vmul.f32 %v17, 0.03125
  %v19 = vld [vmem:[%s1 + $0x1] sm:$0x1]
  %v20 = vmul.f32 %v19, 0.03125
  %v21 = vmul.f32 %v18, %v18
  %v22 = vsub.f32 %v20, %v21
  %v23 = vmax.f32 %v22, 0.0
  %v24 = vld [vmem:[%s2] sm:$0x1]
  %v25 = vadd.f32 %v23, 1e-05
  %v26 = vrsqrt.pop %v25
  %v27 = vmul.f32 %v24, %v26
  %v28 = vld [vmem:[%s3] sm:$0x1]
  %v29 = vmul.f32 %v18, %v27
  %v30 = vsub.f32 %v28, %v29
  %v31 = vld [vmem:[%s0] sm:$0xf]
  %v32 = vld [vmem:[%s0 + $0x4] sm:$0xf]
  %v33 = vld [vmem:[%s0 + $0x8] sm:$0xf]
  %v34 = vld [vmem:[%s0 + $0xc] sm:$0xf]
  %v35 = vunpack.c.l.bf16 %v31
  %v36 = vunpack.c.l.bf16 %v32
  %v37 = vunpack.c.l.bf16 %v33
  %v38 = vunpack.c.l.bf16 %v34
  %v40 = vlaneseq
  %v41 = vshrl.u32 %v40, 7
  %v42 = vsub.s32 0, %v41
  %v43 = vrot.slane %v27, %v42
  %v45 = vmul.f32 %v35, %v43
  %v46 = vmul.f32 %v36, %v43
  %v47 = vmul.f32 %v37, %v43
  %v48 = vmul.f32 %v38, %v43
  %v50 = vlaneseq
  %v51 = vshrl.u32 %v50, 7
  %v52 = vsub.s32 0, %v51
  %v53 = vrot.slane %v30, %v52
  %v55 = vadd.f32 %v45, %v53
  %v56 = vadd.f32 %v46, %v53
  %v57 = vadd.f32 %v47, %v53
  %v58 = vadd.f32 %v48, %v53
  %v59 = vmax.f32 %v55, 0.0
  %v60 = vmax.f32 %v56, 0.0
  %v61 = vmax.f32 %v57, 0.0
  %v62 = vmax.f32 %v58, 0.0
  %v63 = vpack.c.bf16 %v60, %v59
  %v64 = vpack.c.bf16 %v62, %v61
  %v67 = vunpack.c.l.b16 %v63
  %v68 = vunpack.c.h.b16 %v63
  %v69 = vunpack.c.l.b16 %v64
  %v70 = vunpack.c.h.b16 %v64
  %v71 = vpack.c.b16 %v67, %v67
  %v72 = vpack.c.b16 %v68, %v68
  %v73 = vpack.c.b16 %v69, %v69
  %v74 = vpack.c.b16 %v70, %v70
  %vm79 = vcmask 125952
  %80 = vst.msk [vmem:[%s4] sm:$0xf] %vm79, %v71
  %81 = vst.msk [vmem:[%s4 + $0x4] sm:$0xf] %vm79, %v72
  %82 = vst.msk [vmem:[%s4 + $0x8] sm:$0xf] %vm79, %v73
  %83 = vst.msk [vmem:[%s4 + $0xc] sm:$0xf] %vm79, %v74
  // Predicated region
  $region18: #{depth_model_forward.16} parent=0 // pred_check
    _
  $region19: #{depth_model_forward.16} parent=0 // pred_check_branch
    %85 = sbr.rel (0) target = $region21
  $region20: #{depth_model_forward.16} parent=0 // pred_region
    _
  $region21: #{depth_model_forward.16} parent=0 // pred_fallthru
    _
  // Predicated region
  $region22: #{depth_model_forward.16} parent=0 // pred_check
    _
  $region23: #{depth_model_forward.16} parent=0 // pred_check_branch
    %87 = sbr.rel (0) target = $region25
  $region24: #{depth_model_forward.16} parent=0 // pred_region
    _
  $region25: #{depth_model_forward.16} parent=0 // pred_fallthru
    _

// kernel: depth_model_forward.15
$region0: #{depth_model_forward.15}
  #allocation0 [shape = 'u32[]', space=smem, size = 0x4, offset = 0x4, fixed_abs, tag = 'smem constant byte address 0x4 - core index']
  #allocation1 [shape = 'u32[144,128]{1,0:T(1,128)}', space=vmem, size = 0x12000, scoped, tag = 'internal scratch']
  %s0 = inlined_call_operand.vmem [shape: bf16[2,6,6,32], index: 0, kind: input, shape index: {}]
  %s1 = inlined_call_operand.vmem [shape: bf16[9,32,16], index: 1, kind: input, shape index: {}]
  %s2 = inlined_call_operand.vmem [shape: f32[1,16], index: 2, kind: input, shape index: {}]
  %s3 = inlined_call_operand.vmem [shape: bf16[2,4,4,16], index: 3, kind: output, shape index: {0}]
  %s4 = inlined_call_operand.vmem [shape: f32[2,16], index: 4, kind: output, shape index: {1}]
  %5 = xla_tuple %s3, %s4
  %s6 = sld [smem:[#allocation0]]
  $region57: #{depth_model_forward.15} parent=0
    _
  %s8 = ssub.s32 1, %s6
  %s9 = scalar_select 0, %s8, %s6
  loop: start=0, step=1, limit=10
  $region2: #{depth_model_forward.15} parent=0 // loop_pre_header
    _
  $region3: #{depth_model_forward.15} parent=0 // loop_header
    %s11 = sphi 0, %s15
    %p12 = scmp.ge.s32.totalorder %s11, 10
    %s18 = sphi 0, %s30
    %s19 = sphi 0, %s26
    %s20 = sphi 0, %s18
    %s21 = sphi 0, %s19
    %s22 = sphi 0, %s20
    %s23 = sphi 0, %s21
    %s33 = sphi 0, %s35
    %s36 = sphi 0, %s33
    %s37 = sphi 0, %s36
    %s53 = sphi 0, %s37
    %s57 = sphi 0, %s57
    %s59 = sphi 0, %s57
    %s60 = sphi 0, %s59
    %s74 = sphi 0, %s60
    %s78 = sphi 0, %s78
    %s80 = sphi 0, %s78
    %s81 = sphi 0, %s80
    %s95 = sphi 0, %s81
    %s103 = sphi 0, %s105
    %s106 = sphi 0, %s103
    %s107 = sphi 0, %s106
    %s123 = sphi 0, %s107
    %s127 = sphi 0, %s127
    %s129 = sphi 0, %s127
    %s130 = sphi 0, %s129
    %s144 = sphi 0, %s130
  $region4: #{depth_model_forward.15} parent=0 // loop_header_branch
    %14 = sbr.rel (%p12) target = $region8
  $region5: #{depth_model_forward.15} parent=0 // loop_body
    %s16 = ssub.s32 %s11, 1
    %s17 = ssub.s32 %s11, 2
    %s24 = sadd.s32 1, %s19
    %p25 = scmp.ge.s32.totalorder %s24, 4
    %s26 = scalar_select %p25, 0, %s24
    %s27 = sadd.s32 1, %s18
    %s28 = scalar_select %p25, %s27, %s18
    %p29 = scmp.ge.s32.totalorder %s28, 2
    %s30 = scalar_select %p29, 0, %s28
    %s31 = ssub.s32 %s18, %s30
    %p32 = scmp.eq.s32.totalorder %s31, 0
    %s34 = sadd.s32 %s33, 1
    %s35 = scalar_select %p32, %s33, %s34
    %p38 = pneg %p32
    %p39 = scmp.eq.s32.totalorder %s11, 7
    %p40 = por %p38, %p39
    %p41 = scmp.ne.s32.totalorder %s33, %s36
    %p42 = scmp.eq.s32.totalorder %s11, 0
    %p43 = por %p41, %p42
    %p44 = scmp.ne.s32.totalorder %s33, %s36
    %p45 = scmp.eq.s32.totalorder %s16, 7
    %p46 = por %p44, %p45
    %p47 = scmp.ne.s32.totalorder %s36, %s37
    %p48 = scmp.eq.s32.totalorder %s16, 0
    %p49 = por %p47, %p48
    %p50 = scmp.ne.s32.totalorder %s36, %s37
    %p51 = scmp.eq.s32.totalorder %s17, 7
    %p52 = por %p50, %p51
    %p54 = scmp.ne.s32.totalorder %s37, %s53
    %p55 = scmp.eq.s32.totalorder %s17, 0
    %p56 = por %p54, %p55
    %s58 = sadd.s32 %s57, 1
    %p61 = scmp.eq.s32.totalorder %s11, 7
    %p62 = scmp.ne.s32.totalorder %s57, %s59
    %p63 = scmp.eq.s32.totalorder %s11, 0
    %p64 = por %p62, %p63
    %p65 = scmp.ne.s32.totalorder %s57, %s59
    %p66 = scmp.eq.s32.totalorder %s16, 7
    %p67 = por %p65, %p66
    %p68 = scmp.ne.s32.totalorder %s59, %s60
    %p69 = scmp.eq.s32.totalorder %s16, 0
    %p70 = por %p68, %p69
    %p71 = scmp.ne.s32.totalorder %s59, %s60
    %p72 = scmp.eq.s32.totalorder %s17, 7
    %p73 = por %p71, %p72
    %p75 = scmp.ne.s32.totalorder %s60, %s74
    %p76 = scmp.eq.s32.totalorder %s17, 0
    %p77 = por %p75, %p76
    %s79 = sadd.s32 %s78, 1
    %p82 = scmp.eq.s32.totalorder %s11, 7
    %p83 = scmp.ne.s32.totalorder %s78, %s80
    %p84 = scmp.eq.s32.totalorder %s11, 0
    %p85 = por %p83, %p84
    %p86 = scmp.ne.s32.totalorder %s78, %s80
    %p87 = scmp.eq.s32.totalorder %s16, 7
    %p88 = por %p86, %p87
    %p89 = scmp.ne.s32.totalorder %s80, %s81
    %p90 = scmp.eq.s32.totalorder %s16, 0
    %p91 = por %p89, %p90
    %p92 = scmp.ne.s32.totalorder %s80, %s81
    %p93 = scmp.eq.s32.totalorder %s17, 7
    %p94 = por %p92, %p93
    %p96 = scmp.ne.s32.totalorder %s81, %s95
    %p97 = scmp.eq.s32.totalorder %s17, 0
    %p98 = por %p96, %p97
    %s99 = ssub.s32 %s18, %s30
    %s100 = ssub.s32 %s19, %s26
    %s101 = sor.u32 %s99, %s100
    %p102 = scmp.eq.s32.totalorder %s101, 0
    %s104 = sadd.s32 %s103, 1
    %s105 = scalar_select %p102, %s103, %s104
    %p108 = pneg %p102
    %p109 = scmp.eq.s32.totalorder %s11, 7
    %p110 = por %p108, %p109
    %p111 = scmp.ne.s32.totalorder %s103, %s106
    %p112 = scmp.eq.s32.totalorder %s11, 0
    %p113 = por %p111, %p112
    %p114 = scmp.ne.s32.totalorder %s103, %s106
    %p115 = scmp.eq.s32.totalorder %s16, 7
    %p116 = por %p114, %p115
    %p117 = scmp.ne.s32.totalorder %s106, %s107
    %p118 = scmp.eq.s32.totalorder %s16, 0
    %p119 = por %p117, %p118
    %p120 = scmp.ne.s32.totalorder %s106, %s107
    %p121 = scmp.eq.s32.totalorder %s17, 7
    %p122 = por %p120, %p121
    %p124 = scmp.ne.s32.totalorder %s107, %s123
    %p125 = scmp.eq.s32.totalorder %s17, 0
    %p126 = por %p124, %p125
    %s128 = sadd.s32 %s127, 1
    %p131 = scmp.eq.s32.totalorder %s11, 7
    %p132 = scmp.ne.s32.totalorder %s127, %s129
    %p133 = scmp.eq.s32.totalorder %s11, 0
    %p134 = por %p132, %p133
    %p135 = scmp.ne.s32.totalorder %s127, %s129
    %p136 = scmp.eq.s32.totalorder %s16, 7
    %p137 = por %p135, %p136
    %p138 = scmp.ne.s32.totalorder %s129, %s130
    %p139 = scmp.eq.s32.totalorder %s16, 0
    %p140 = por %p138, %p139
    %p141 = scmp.ne.s32.totalorder %s129, %s130
    %p142 = scmp.eq.s32.totalorder %s17, 7
    %p143 = por %p141, %p142
    %p145 = scmp.ne.s32.totalorder %s130, %s144
    %p146 = scmp.eq.s32.totalorder %s17, 0
    %p147 = por %p145, %p146
    %p148 = scmp.le.s32.totalorder 1, %s11
    %p149 = scmp.lt.s32.totalorder %s11, 9
    %p150 = pnand %p148, %p149
    %p151 = pneg %p150
    // Predicated region
    $region9: #{depth_model_forward.15} parent=5 // pred_check
      _
    $region10: #{depth_model_forward.15} parent=5 // pred_check_branch
      %153 = sbr.rel (%p150) target = $region12
    $region11: #{depth_model_forward.15} parent=5 // pred_region
      %s154 = ssub.s32 %s11, 1
      // Predicated region
      $region13: #{depth_model_forward.15} parent=11 // pred_check
        %p155 = pneg %p70
      $region14: #{depth_model_forward.15} parent=11 // pred_check_branch
        %157 = sbr.rel (%p155) target = $region16
      $region15: #{depth_model_forward.15} parent=11 // pred_region
        _
      $region16: #{depth_model_forward.15} parent=11 // pred_fallthru
        _
      // Predicated region
      $region17: #{depth_model_forward.15} parent=11 // pred_check
        %p158 = pneg %p91
      $region18: #{depth_model_forward.15} parent=11 // pred_check_branch
        %160 = sbr.rel (%p158) target = $region20
      $region19: #{depth_model_forward.15} parent=11 // pred_region
        _
      $region20: #{depth_model_forward.15} parent=11 // pred_fallthru
        _
    $region12: #{depth_model_forward.15} parent=5 // pred_fallthru
      _
    %p161 = scmp.lt.s32.totalorder %s11, 8
    // Predicated region
    $region21: #{depth_model_forward.15} parent=5 // pred_check
      %p162 = pneg %p161
    $region22: #{depth_model_forward.15} parent=5 // pred_check_branch
      %164 = sbr.rel (%p162) target = $region24
    $region23: #{depth_model_forward.15} parent=5 // pred_region
      // Predicated region
      $region25: #{depth_model_forward.15} parent=23 // pred_check
        %p165 = pneg %p43
      $region26: #{depth_model_forward.15} parent=23 // pred_check_branch
        %167 = sbr.rel (%p165) target = $region28
      $region27: #{depth_model_forward.15} parent=23 // pred_region
        %p168 = scmp.lt.s32.totalorder %s18, 1
        %s169 = scalar_select %p168, %s18, 1
        %s170 = smul.addr %s169, 6
        %s171 = smul.addr %s170, 4
        %s172 = scalar_lea.vmem %s0, %s171
      $region28: #{depth_model_forward.15} parent=23 // pred_fallthru
        _
    $region24: #{depth_model_forward.15} parent=5 // pred_fallthru
      _
    %p173 = scmp.le.s32.totalorder 1, %s11
    %p174 = scmp.lt.s32.totalorder %s11, 9
    %p175 = pnand %p173, %p174
    %p176 = pneg %p175
    // Predicated region
    $region29: #{depth_model_forward.15} parent=5 // pred_check
      _
    $region30: #{depth_model_forward.15} parent=5 // pred_check_branch
      %178 = sbr.rel (%p175) target = $region32
    $region31: #{depth_model_forward.15} parent=5 // pred_region
      %s179 = ssub.s32 %s11, 1
      %p180 = scmp.lt.s32.totalorder %s20, 1
      %s181 = scalar_select %p180, %s20, 1
      %s182 = smul.addr %s181, 6
      %s183 = smul.addr %s182, 4
      %s184 = scalar_lea.vmem %s0, %s183
      %p185 = pneg %p49
      %p186 = pneg %p46
      %p187 = pneg %p70
      %p188 = pneg %p67
      %p189 = pneg %p91
      %p190 = pneg %p88
      %p191 = pneg %p119
      %p192 = pneg %p116
      %p193 = scmp.lt.s32.totalorder %s20, 1
      %s194 = scalar_select %p193, %s20, 1
      %p195 = scmp.lt.s32.totalorder %s21, 3
      %s196 = scalar_select %p195, %s21, 3
      %s197 = smul.addr %s194, 4
      %s198 = sadd.s32 %s196, %s197
      %s199 = smul.addr %s198, 2
      %s200 = scalar_lea.vmem %s3, %s199
      %p201 = pneg %p140
      %p202 = pneg %p137
      %p203 = scmp.lt.s32.totalorder %s20, 1
      %s204 = scalar_select %p203, %s20, 1
      %s205 = smul.addr %s204, 6
      %s206 = smul.addr %s205, 4
      %s207 = scalar_lea.vmem %s0, %s206
      %p208 = scmp.lt.s32.totalorder %s20, 1
      %s209 = scalar_select %p208, %s20, 1
      %p210 = scmp.lt.s32.totalorder %s21, 3
      %s211 = scalar_select %p210, %s21, 3
      %s212 = smul.addr %s209, 4
      %s213 = sadd.s32 %s211, %s212
      %s214 = smul.addr %s213, 2
      %s215 = scalar_lea.vmem %s3, %s214
      %s217 = smul.addr %s21, 4
      %s218 = scalar_lea.vmem %s207, %s217
      %v219 = vld [vmem:[%s218] sm:$0x7]
      %v220 = vld [vmem:[%s1] sm:$0xf]
      %v221 = vld [vmem:[%s1 + $0x4] sm:$0xf]
      %v222 = vld [vmem:[%s1 + $0x8] sm:$0xf]
      %v223 = vld [vmem:[%s1 + $0xc] sm:$0xf]
      %v228 = vunpack.c.l.b16 %v220
      %v229 = vunpack.c.l.b16 %v221
      %v230 = vunpack.c.l.b16 %v222
      %v231 = vunpack.c.l.b16 %v223
      %v232 = vpack.c.b16 %v229, %v228
      %v233 = vpack.c.b16 %v231, %v230
      %vm236 = vcmask 261120
      %v238 = vsel %vm236, %v219, 0
      %240 = vmatprep.subr.bf16.mxu0 0
      %241 = vmatpush1.bf16.msra.mxu0 0
      %242 = vmatprep.subr.bf16.mxu0 0
      %243 = vmatpush1.bf16.msra.mxu0 0
      %244 = vmatprep.subr.bf16.mxu0 0
      %245 = vmatpush1.bf16.msra.mxu0 0
      %246 = vmatprep.subr.bf16.mxu0 0
      %247 = vmatpush1.bf16.msra.mxu0 0
      %248 = vmatprep.subr.bf16.mxu0 0
      %249 = vmatpush1.bf16.msra.mxu0 0
      %250 = vmatprep.subr.bf16.mxu0 0
      %251 = vmatpush1.bf16.msra.mxu0 0
      %252 = vmatprep.subr.bf16.mxu0 0
      %253 = vmatpush1.bf16.msra.mxu0 %v233
      %254 = vmatprep.subr.bf16.mxu0 0
      %255 = vmatpush1.bf16.msra.mxu0 %v232
      %256 = vmatprep.subr.bf16.mxu0 0
      %257 = vmatpush2.bf16.msra.mxu0 0
      %258 = vmatprep.subr.bf16.mxu0 0
      %259 = vmatpush2.bf16.msra.mxu0 0
      %260 = vmatprep.subr.bf16.mxu0 0
      %261 = vmatpush2.bf16.msra.mxu0 0
      %262 = vmatprep.subr.bf16.mxu0 0
      %263 = vmatpush2.bf16.msra.mxu0 0
      %264 = vmatprep.subr.bf16.mxu0 0
      %265 = vmatpush2.bf16.msra.mxu0 0
      %266 = vmatprep.subr.bf16.mxu0 0
      %267 = vmatpush2.bf16.msra.mxu0 0
      %268 = vmatprep.subr.bf16.mxu0 0
      %269 = vmatpush2.bf16.msra.mxu0 0
      %270 = vmatprep.subr.bf16.mxu0 0
      %271 = vmatpush2.bf16.msra.mxu0 0
      %272 = vmatprep.mubr.bf16.mxu0 0
      %273 = vmatmul.mubr.bf16.gmra.mxu0 %v238
      %v274 = vpop.f32.mrf.mxu0
      %v275 = vadd.f32 0.0, %v274
      %v276 = vpop.f32.mrf.mxu0
      %v277 = vpop.f32.mrf.mxu0
      %v278 = vpop.f32.mrf.mxu0
      %279 = vdwg.mxu0
      %v280 = vadd.f32 %v275, 0.0
      %s281 = scalar_lea.vmem %s1, 16
      %v282 = vld [vmem:[%s281] sm:$0xf]
      %v283 = vld [vmem:[%s281 + $0x4] sm:$0xf]
      %v284 = vld [vmem:[%s281 + $0x8] sm:$0xf]
      %v285 = vld [vmem:[%s281 + $0xc] sm:$0xf]
      %v290 = vunpack.c.l.b16 %v282
      %v291 = vunpack.c.l.b16 %v283
      %v292 = vunpack.c.l.b16 %v284
      %v293 = vunpack.c.l.b16 %v285
      %v294 = vpack.c.b16 %v291, %v290
      %v295 = vpack.c.b16 %v293, %v292
      %298 = vmatprep.subr.bf16.mxu0 0
      %299 = vmatpush1.bf16.msra.mxu0 0
      %300 = vmatprep.subr.bf16.mxu0 0
      %301 = vmatpush1.bf16.msra.mxu0 0
      %302 = vmatprep.subr.bf16.mxu0 0
      %303 = vmatpush1.bf16.msra.mxu0 0
      %304 = vmatprep.subr.bf16.mxu0 0
      %305 = vmatpush1.bf16.msra.mxu0 0
      %306 = vmatprep.subr.bf16.mxu0 0
      %307 = vmatpush1.bf16.msra.mxu0 0
      %308 = vmatprep.subr.bf16.mxu0 0
      %309 = vmatpush1.bf16.msra.mxu0 0
      %310 = vmatprep.subr.bf16.mxu0 0
      %311 = vmatpush1.bf16.msra.mxu0 %v295
      %312 = vmatprep.subr.bf16.mxu0 0
      %313 = vmatpush1.bf16.msra.mxu0 %v294
      %314 = vmatprep.subr.bf16.mxu0 0
      %315 = vmatpush2.bf16.msra.mxu0 0
      %316 = vmatprep.subr.bf16.mxu0 0
      %317 = vmatpush2.bf16.msra.mxu0 0
      %318 = vmatprep.subr.bf16.mxu0 0
      %319 = vmatpush2.bf16.msra.mxu0 0
      %320 = vmatprep.subr.bf16.mxu0 0
      %321 = vmatpush2.bf16.msra.mxu0 0
      %322 = vmatprep.subr.bf16.mxu0 0
      %323 = vmatpush2.bf16.msra.mxu0 0
      %324 = vmatprep.subr.bf16.mxu0 0
      %325 = vmatpush2.bf16.msra.mxu0 0
      %326 = vmatprep.subr.bf16.mxu0 0
      %327 = vmatpush2.bf16.msra.mxu0 0
      %328 = vmatprep.subr.bf16.mxu0 0
      %329 = vmatpush2.bf16.msra.mxu0 0
      %330 = vmatprep.mubr.bf16.mxu0 0
      %331 = vmatmul.mubr.bf16.gmra.mxu0 %v238
      %v332 = vpop.f32.mrf.mxu0
      %v333 = vadd.f32 0.0, %v332
      %v334 = vpop.f32.mrf.mxu0
      %v335 = vpop.f32.mrf.mxu0
      %v336 = vpop.f32.mrf.mxu0
      %337 = vdwg.mxu0
      %v339 = vrot.slane %v333, 1
      %v341 = vadd.f32 %v280, %v339
      %s342 = scalar_lea.vmem %s1, 32
      %v343 = vld [vmem:[%s342] sm:$0xf]
      %v344 = vld [vmem:[%s342 + $0x4] sm:$0xf]
      %v345 = vld [vmem:[%s342 + $0x8] sm:$0xf]
      %v346 = vld [vmem:[%s342 + $0xc] sm:$0xf]
      %v351 = vunpack.c.l.b16 %v343
      %v352 = vunpack.c.l.b16 %v344
      %v353 = vunpack.c.l.b16 %v345
      %v354 = vunpack.c.l.b16 %v346
      %v355 = vpack.c.b16 %v352, %v351
      %v356 = vpack.c.b16 %v354, %v353
      %359 = vmatprep.subr.bf16.mxu0 0
      %360 = vmatpush1.bf16.msra.mxu0 0
      %361 = vmatprep.subr.bf16.mxu0 0
      %362 = vmatpush1.bf16.msra.mxu0 0
      %363 = vmatprep.subr.bf16.mxu0 0
      %364 = vmatpush1.bf16.msra.mxu0 0
      %365 = vmatprep.subr.bf16.mxu0 0
      %366 = vmatpush1.bf16.msra.mxu0 0
      %367 = vmatprep.subr.bf16.mxu0 0
      %368 = vmatpush1.bf16.msra.mxu0 0
      %369 = vmatprep.subr.bf16.mxu0 0
      %370 = vmatpush1.bf16.msra.mxu0 0
      %371 = vmatprep.subr.bf16.mxu0 0
      %372 = vmatpush1.bf16.msra.mxu0 %v356
      %373 = vmatprep.subr.bf16.mxu0 0
      %374 = vmatpush1.bf16.msra.mxu0 %v355
      %375 = vmatprep.subr.bf16.mxu0 0
      %376 = vmatpush2.bf16.msra.mxu0 0
      %377 = vmatprep.subr.bf16.mxu0 0
      %378 = vmatpush2.bf16.msra.mxu0 0
      %379 = vmatprep.subr.bf16.mxu0 0
      %380 = vmatpush2.bf16.msra.mxu0 0
      %381 = vmatprep.subr.bf16.mxu0 0
      %382 = vmatpush2.bf16.msra.mxu0 0
      %383 = vmatprep.subr.bf16.mxu0 0
      %384 = vmatpush2.bf16.msra.mxu0 0
      %385 = vmatprep.subr.bf16.mxu0 0
      %386 = vmatpush2.bf16.msra.mxu0 0
      %387 = vmatprep.subr.bf16.mxu0 0
      %388 = vmatpush2.bf16.msra.mxu0 0
      %389 = vmatprep.subr.bf16.mxu0 0
      %390 = vmatpush2.bf16.msra.mxu0 0
      %391 = vmatprep.mubr.bf16.mxu0 0
      %392 = vmatmul.mubr.bf16.gmra.mxu0 %v238
      %v393 = vpop.f32.mrf.mxu0
      %v394 = vadd.f32 0.0, %v393
      %v395 = vpop.f32.mrf.mxu0
      %v396 = vpop.f32.mrf.mxu0
      %v397 = vpop.f32.mrf.mxu0
      %398 = vdwg.mxu0
      %v400 = vrot.slane %v394, 2
      %v402 = vadd.f32 %v341, %v400
      %s403 = sadd.s32 %s21, 1
      %s404 = smul.addr %s403, 4
      %s405 = scalar_lea.vmem %s207, %s404
      %v406 = vld [vmem:[%s405] sm:$0x7]
      %s407 = scalar_lea.vmem %s1, 48
      %v408 = vld [vmem:[%s407] sm:$0xf]
      %v409 = vld [vmem:[%s407 + $0x4] sm:$0xf]
      %v410 = vld [vmem:[%s407 + $0x8] sm:$0xf]
      %v411 = vld [vmem:[%s407 + $0xc] sm:$0xf]
      %v416 = vunpack.c.l.b16 %v408
      %v417 = vunpack.c.l.b16 %v409
      %v418 = vunpack.c.l.b16 %v410
      %v419 = vunpack.c.l.b16 %v411
      %v420 = vpack.c.b16 %v417, %v416
      %v421 = vpack.c.b16 %v419, %v418
      %v425 = vsel %vm236, %v406, 0
      %427 = vmatprep.subr.bf16.mxu0 0
      %428 = vmatpush1.bf16.msra.mxu0 0
      %429 = vmatprep.subr.bf16.mxu0 0
      %430 = vmatpush1.bf16.msra.mxu0 0
      %431 = vmatprep.subr.bf16.mxu0 0
      %432 = vmatpush1.bf16.msra.mxu0 0
      %433 = vmatprep.subr.bf16.mxu0 0
      %434 = vmatpush1.bf16.msra.mxu0 0
      %435 = vmatprep.subr.bf16.mxu0 0
      %436 = vmatpush1.bf16.msra.mxu0 0
      %437 = vmatprep.subr.bf16.mxu0 0
      %438 = vmatpush1.bf16.msra.mxu0 0
      %439 = vmatprep.subr.bf16.mxu0 0
      %440 = vmatpush1.bf16.msra.mxu0 %v421
      %441 = vmatprep.subr.bf16.mxu0 0
      %442 = vmatpush1.bf16.msra.mxu0 %v420
      %443 = vmatprep.subr.bf16.mxu0 0
      %444 = vmatpush2.bf16.msra.mxu0 0
      %445 = vmatprep.subr.bf16.mxu0 0
      %446 = vmatpush2.bf16.msra.mxu0 0
      %447 = vmatprep.subr.bf16.mxu0 0
      %448 = vmatpush2.bf16.msra.mxu0 0
      %449 = vmatprep.subr.bf16.mxu0 0
      %450 = vmatpush2.bf16.msra.mxu0 0
      %451 = vmatprep.subr.bf16.mxu0 0
      %452 = vmatpush2.bf16.msra.mxu0 0
      %453 = vmatprep.subr.bf16.mxu0 0
      %454 = vmatpush2.bf16.msra.mxu0 0
      %455 = vmatprep.subr.bf16.mxu0 0
      %456 = vmatpush2.bf16.msra.mxu0 0
      %457 = vmatprep.subr.bf16.mxu0 0
      %458 = vmatpush2.bf16.msra.mxu0 0
      %459 = vmatprep.mubr.bf16.mxu0 0
      %460 = vmatmul.mubr.bf16.gmra.mxu0 %v425
      %v461 = vpop.f32.mrf.mxu0
      %v462 = vadd.f32 0.0, %v461
      %v463 = vpop.f32.mrf.mxu0
      %v464 = vpop.f32.mrf.mxu0
      %v465 = vpop.f32.mrf.mxu0
      %466 = vdwg.mxu0
      %v467 = vadd.f32 %v402, %v462
      %s468 = scalar_lea.vmem %s1, 64
      %v469 = vld [vmem:[%s468] sm:$0xf]
      %v470 = vld [vmem:[%s468 + $0x4] sm:$0xf]
      %v471 = vld [vmem:[%s468 + $0x8] sm:$0xf]
      %v472 = vld [vmem:[%s468 + $0xc] sm:$0xf]
      %v477 = vunpack.c.l.b16 %v469
      %v478 = vunpack.c.l.b16 %v470
      %v479 = vunpack.c.l.b16 %v471
      %v480 = vunpack.c.l.b16 %v472
      %v481 = vpack.c.b16 %v478, %v477
      %v482 = vpack.c.b16 %v480, %v479
      %485 = vmatprep.subr.bf16.mxu0 0
      %486 = vmatpush1.bf16.msra.mxu0 0
      %487 = vmatprep.subr.bf16.mxu0 0
      %488 = vmatpush1.bf16.msra.mxu0 0
      %489 = vmatprep.subr.bf16.mxu0 0
      %490 = vmatpush1.bf16.msra.mxu0 0
      %491 = vmatprep.subr.bf16.mxu0 0
      %492 = vmatpush1.bf16.msra.mxu0 0
      %493 = vmatprep.subr.bf16.mxu0 0
      %494 = vmatpush1.bf16.msra.mxu0 0
      %495 = vmatprep.subr.bf16.mxu0 0
      %496 = vmatpush1.bf16.msra.mxu0 0
      %497 = vmatprep.subr.bf16.mxu0 0
      %498 = vmatpush1.bf16.msra.mxu0 %v482
      %499 = vmatprep.subr.bf16.mxu0 0
      %500 = vmatpush1.bf16.msra.mxu0 %v481
      %501 = vmatprep.subr.bf16.mxu0 0
      %502 = vmatpush2.bf16.msra.mxu0 0
      %503 = vmatprep.subr.bf16.mxu0 0
      %504 = vmatpush2.bf16.msra.mxu0 0
      %505 = vmatprep.subr.bf16.mxu0 0
      %506 = vmatpush2.bf16.msra.mxu0 0
      %507 = vmatprep.subr.bf16.mxu0 0
      %508 = vmatpush2.bf16.msra.mxu0 0
      %509 = vmatprep.subr.bf16.mxu0 0
      %510 = vmatpush2.bf16.msra.mxu0 0
      %511 = vmatprep.subr.bf16.mxu0 0
      %512 = vmatpush2.bf16.msra.mxu0 0
      %513 = vmatprep.subr.bf16.mxu0 0
      %514 = vmatpush2.bf16.msra.mxu0 0
      %515 = vmatprep.subr.bf16.mxu0 0
      %516 = vmatpush2.bf16.msra.mxu0 0
      %517 = vmatprep.mubr.bf16.mxu0 0
      %518 = vmatmul.mubr.bf16.gmra.mxu0 %v425
      %v519 = vpop.f32.mrf.mxu0
      %v520 = vadd.f32 0.0, %v519
      %v521 = vpop.f32.mrf.mxu0
      %v522 = vpop.f32.mrf.mxu0
      %v523 = vpop.f32.mrf.mxu0
      %524 = vdwg.mxu0
      %v526 = vrot.slane %v520, 1
      %v528 = vadd.f32 %v467, %v526
      %s529 = scalar_lea.vmem %s1, 80
      %v530 = vld [vmem:[%s529] sm:$0xf]
      %v531 = vld [vmem:[%s529 + $0x4] sm:$0xf]
      %v532 = vld [vmem:[%s529 + $0x8] sm:$0xf]
      %v533 = vld [vmem:[%s529 + $0xc] sm:$0xf]
      %v538 = vunpack.c.l.b16 %v530
      %v539 = vunpack.c.l.b16 %v531
      %v540 = vunpack.c.l.b16 %v532
      %v541 = vunpack.c.l.b16 %v533
      %v542 = vpack.c.b16 %v539, %v538
      %v543 = vpack.c.b16 %v541, %v540
      %546 = vmatprep.subr.bf16.mxu0 0
      %547 = vmatpush1.bf16.msra.mxu0 0
      %548 = vmatprep.subr.bf16.mxu0 0
      %549 = vmatpush1.bf16.msra.mxu0 0
      %550 = vmatprep.subr.bf16.mxu0 0
      %551 = vmatpush1.bf16.msra.mxu0 0
      %552 = vmatprep.subr.bf16.mxu0 0
      %553 = vmatpush1.bf16.msra.mxu0 0
      %554 = vmatprep.subr.bf16.mxu0 0
      %555 = vmatpush1.bf16.msra.mxu0 0
      %556 = vmatprep.subr.bf16.mxu0 0
      %557 = vmatpush1.bf16.msra.mxu0 0
      %558 = vmatprep.subr.bf16.mxu0 0
      %559 = vmatpush1.bf16.msra.mxu0 %v543
      %560 = vmatprep.subr.bf16.mxu0 0
      %561 = vmatpush1.bf16.msra.mxu0 %v542
      %562 = vmatprep.subr.bf16.mxu0 0
      %563 = vmatpush2.bf16.msra.mxu0 0
      %564 = vmatprep.subr.bf16.mxu0 0
      %565 = vmatpush2.bf16.msra.mxu0 0
      %566 = vmatprep.subr.bf16.mxu0 0
      %567 = vmatpush2.bf16.msra.mxu0 0
      %568 = vmatprep.subr.bf16.mxu0 0
      %569 = vmatpush2.bf16.msra.mxu0 0
      %570 = vmatprep.subr.bf16.mxu0 0
      %571 = vmatpush2.bf16.msra.mxu0 0
      %572 = vmatprep.subr.bf16.mxu0 0
      %573 = vmatpush2.bf16.msra.mxu0 0
      %574 = vmatprep.subr.bf16.mxu0 0
      %575 = vmatpush2.bf16.msra.mxu0 0
      %576 = vmatprep.subr.bf16.mxu0 0
      %577 = vmatpush2.bf16.msra.mxu0 0
      %578 = vmatprep.mubr.bf16.mxu0 0
      %579 = vmatmul.mubr.bf16.gmra.mxu0 %v425
      %v580 = vpop.f32.mrf.mxu0
      %v581 = vadd.f32 0.0, %v580
      %v582 = vpop.f32.mrf.mxu0
      %v583 = vpop.f32.mrf.mxu0
      %v584 = vpop.f32.mrf.mxu0
      %585 = vdwg.mxu0
      %v587 = vrot.slane %v581, 2
      %v589 = vadd.f32 %v528, %v587
      %s590 = sadd.s32 %s21, 2
      %s591 = smul.addr %s590, 4
      %s592 = scalar_lea.vmem %s207, %s591
      %v593 = vld [vmem:[%s592] sm:$0x7]
      %s594 = scalar_lea.vmem %s1, 96
      %v595 = vld [vmem:[%s594] sm:$0xf]
      %v596 = vld [vmem:[%s594 + $0x4] sm:$0xf]
      %v597 = vld [vmem:[%s594 + $0x8] sm:$0xf]
      %v598 = vld [vmem:[%s594 + $0xc] sm:$0xf]
      %v603 = vunpack.c.l.b16 %v595
      %v604 = vunpack.c.l.b16 %v596
      %v605 = vunpack.c.l.b16 %v597
      %v606 = vunpack.c.l.b16 %v598
      %v607 = vpack.c.b16 %v604, %v603
      %v608 = vpack.c.b16 %v606, %v605
      %v612 = vsel %vm236, %v593, 0
      %614 = vmatprep.subr.bf16.mxu0 0
      %615 = vmatpush1.bf16.msra.mxu0 0
      %616 = vmatprep.subr.bf16.mxu0 0
      %617 = vmatpush1.bf16.msra.mxu0 0
      %618 = vmatprep.subr.bf16.mxu0 0
      %619 = vmatpush1.bf16.msra.mxu0 0
      %620 = vmatprep.subr.bf16.mxu0 0
      %621 = vmatpush1.bf16.msra.mxu0 0
      %622 = vmatprep.subr.bf16.mxu0 0
      %623 = vmatpush1.bf16.msra.mxu0 0
      %624 = vmatprep.subr.bf16.mxu0 0
      %625 = vmatpush1.bf16.msra.mxu0 0
      %626 = vmatprep.subr.bf16.mxu0 0
      %627 = vmatpush1.bf16.msra.mxu0 %v608
      %628 = vmatprep.subr.bf16.mxu0 0
      %629 = vmatpush1.bf16.msra.mxu0 %v607
      %630 = vmatprep.subr.bf16.mxu0 0
      %631 = vmatpush2.bf16.msra.mxu0 0
      %632 = vmatprep.subr.bf16.mxu0 0
      %633 = vmatpush2.bf16.msra.mxu0 0
      %634 = vmatprep.subr.bf16.mxu0 0
      %635 = vmatpush2.bf16.msra.mxu0 0
      %636 = vmatprep.subr.bf16.mxu0 0
      %637 = vmatpush2.bf16.msra.mxu0 0
      %638 = vmatprep.subr.bf16.mxu0 0
      %639 = vmatpush2.bf16.msra.mxu0 0
      %640 = vmatprep.subr.bf16.mxu0 0
      %641 = vmatpush2.bf16.msra.mxu0 0
      %642 = vmatprep.subr.bf16.mxu0 0
      %643 = vmatpush2.bf16.msra.mxu0 0
      %644 = vmatprep.subr.bf16.mxu0 0
      %645 = vmatpush2.bf16.msra.mxu0 0
      %646 = vmatprep.mubr.bf16.mxu0 0
      %647 = vmatmul.mubr.bf16.gmra.mxu0 %v612
      %v648 = vpop.f32.mrf.mxu0
      %v649 = vadd.f32 0.0, %v648
      %v650 = vpop.f32.mrf.mxu0
      %v651 = vpop.f32.mrf.mxu0
      %v652 = vpop.f32.mrf.mxu0
      %653 = vdwg.mxu0
      %v654 = vadd.f32 %v589, %v649
      %s655 = scalar_lea.vmem %s1, 112
      %v656 = vld [vmem:[%s655] sm:$0xf]
      %v657 = vld [vmem:[%s655 + $0x4] sm:$0xf]
      %v658 = vld [vmem:[%s655 + $0x8] sm:$0xf]
      %v659 = vld [vmem:[%s655 + $0xc] sm:$0xf]
      %v664 = vunpack.c.l.b16 %v656
      %v665 = vunpack.c.l.b16 %v657
      %v666 = vunpack.c.l.b16 %v658
      %v667 = vunpack.c.l.b16 %v659
      %v668 = vpack.c.b16 %v665, %v664
      %v669 = vpack.c.b16 %v667, %v666
      %672 = vmatprep.subr.bf16.mxu0 0
      %673 = vmatpush1.bf16.msra.mxu0 0
      %674 = vmatprep.subr.bf16.mxu0 0
      %675 = vmatpush1.bf16.msra.mxu0 0
      %676 = vmatprep.subr.bf16.mxu0 0
      %677 = vmatpush1.bf16.msra.mxu0 0
      %678 = vmatprep.subr.bf16.mxu0 0
      %679 = vmatpush1.bf16.msra.mxu0 0
      %680 = vmatprep.subr.bf16.mxu0 0
      %681 = vmatpush1.bf16.msra.mxu0 0
      %682 = vmatprep.subr.bf16.mxu0 0
      %683 = vmatpush1.bf16.msra.mxu0 0
      %684 = vmatprep.subr.bf16.mxu0 0
      %685 = vmatpush1.bf16.msra.mxu0 %v669
      %686 = vmatprep.subr.bf16.mxu0 0
      %687 = vmatpush1.bf16.msra.mxu0 %v668
      %688 = vmatprep.subr.bf16.mxu0 0
      %689 = vmatpush2.bf16.msra.mxu0 0
      %690 = vmatprep.subr.bf16.mxu0 0
      %691 = vmatpush2.bf16.msra.mxu0 0
      %692 = vmatprep.subr.bf16.mxu0 0
      %693 = vmatpush2.bf16.msra.mxu0 0
      %694 = vmatprep.subr.bf16.mxu0 0
      %695 = vmatpush2.bf16.msra.mxu0 0
      %696 = vmatprep.subr.bf16.mxu0 0
      %697 = vmatpush2.bf16.msra.mxu0 0
      %698 = vmatprep.subr.bf16.mxu0 0
      %699 = vmatpush2.bf16.msra.mxu0 0
      %700 = vmatprep.subr.bf16.mxu0 0
      %701 = vmatpush2.bf16.msra.mxu0 0
      %702 = vmatprep.subr.bf16.mxu0 0
      %703 = vmatpush2.bf16.msra.mxu0 0
      %704 = vmatprep.mubr.bf16.mxu0 0
      %705 = vmatmul.mubr.bf16.gmra.mxu0 %v612
      %v706 = vpop.f32.mrf.mxu0
      %v707 = vadd.f32 0.0, %v706
      %v708 = vpop.f32.mrf.mxu0
      %v709 = vpop.f32.mrf.mxu0
      %v710 = vpop.f32.mrf.mxu0
      %711 = vdwg.mxu0
      %v713 = vrot.slane %v707, 1
      %v715 = vadd.f32 %v654, %v713
      %s716 = scalar_lea.vmem %s1, 128
      %v717 = vld [vmem:[%s716] sm:$0xf]
      %v718 = vld [vmem:[%s716 + $0x4] sm:$0xf]
      %v719 = vld [vmem:[%s716 + $0x8] sm:$0xf]
      %v720 = vld [vmem:[%s716 + $0xc] sm:$0xf]
      %v725 = vunpack.c.l.b16 %v717
      %v726 = vunpack.c.l.b16 %v718
      %v727 = vunpack.c.l.b16 %v719
      %v728 = vunpack.c.l.b16 %v720
      %v729 = vpack.c.b16 %v726, %v725
      %v730 = vpack.c.b16 %v728, %v727
      %733 = vmatprep.subr.bf16.mxu0 0
      %734 = vmatpush1.bf16.msra.mxu0 0
      %735 = vmatprep.subr.bf16.mxu0 0
      %736 = vmatpush1.bf16.msra.mxu0 0
      %737 = vmatprep.subr.bf16.mxu0 0
      %738 = vmatpush1.bf16.msra.mxu0 0
      %739 = vmatprep.subr.bf16.mxu0 0
      %740 = vmatpush1.bf16.msra.mxu0 0
      %741 = vmatprep.subr.bf16.mxu0 0
      %742 = vmatpush1.bf16.msra.mxu0 0
      %743 = vmatprep.subr.bf16.mxu0 0
      %744 = vmatpush1.bf16.msra.mxu0 0
      %745 = vmatprep.subr.bf16.mxu0 0
      %746 = vmatpush1.bf16.msra.mxu0 %v730
      %747 = vmatprep.subr.bf16.mxu0 0
      %748 = vmatpush1.bf16.msra.mxu0 %v729
      %749 = vmatprep.subr.bf16.mxu0 0
      %750 = vmatpush2.bf16.msra.mxu0 0
      %751 = vmatprep.subr.bf16.mxu0 0
      %752 = vmatpush2.bf16.msra.mxu0 0
      %753 = vmatprep.subr.bf16.mxu0 0
      %754 = vmatpush2.bf16.msra.mxu0 0
      %755 = vmatprep.subr.bf16.mxu0 0
      %756 = vmatpush2.bf16.msra.mxu0 0
      %757 = vmatprep.subr.bf16.mxu0 0
      %758 = vmatpush2.bf16.msra.mxu0 0
      %759 = vmatprep.subr.bf16.mxu0 0
      %760 = vmatpush2.bf16.msra.mxu0 0
      %761 = vmatprep.subr.bf16.mxu0 0
      %762 = vmatpush2.bf16.msra.mxu0 0
      %763 = vmatprep.subr.bf16.mxu0 0
      %764 = vmatpush2.bf16.msra.mxu0 0
      %765 = vmatprep.mubr.bf16.mxu0 0
      %766 = vmatmul.mubr.bf16.gmra.mxu0 %v612
      %v767 = vpop.f32.mrf.mxu0
      %v768 = vadd.f32 0.0, %v767
      %v769 = vpop.f32.mrf.mxu0
      %v770 = vpop.f32.mrf.mxu0
      %v771 = vpop.f32.mrf.mxu0
      %772 = vdwg.mxu0
      %v774 = vrot.slane %v768, 2
      %v776 = vadd.f32 %v715, %v774
      %v777 = vld [vmem:[%s2] sm:$0x1]
      %v779 = vlaneseq
      %v780 = vshrl.u32 %v779, 7
      %v781 = vsub.s32 0, %v780
      %v782 = vrot.slane %v777, %v781
      %v784 = vadd.f32 %v776, %v782
      %p785 = scmp.eq.s32.totalorder %s20, 0
      %p786 = scmp.eq.s32.totalorder %s21, 0
      %p787 = pnand %p785, %p786
      %p788 = pneg %p787
      // Predicated region
      $region33: #{depth_model_forward.15} parent=31 // pred_check
        _
      $region34: #{depth_model_forward.15} parent=31 // pred_check_branch
        %790 = sbr.rel (%p787) target = $region36
      $region35: #{depth_model_forward.15} parent=31 // pred_region
        %vm791 = vcmask 123904
        %792 = vst.msk [vmem:[%s4] sm:$0x3] %vm791, 0.0
      $region36: #{depth_model_forward.15} parent=31 // pred_fallthru
        _
      %v793 = vld [vmem:[%s4] sm:$0x1]
      %vm794 = vcmask 125952
      %v795 = vsel %vm794, %v784, 0.0
      %v796 = vrot.slane %v795, 4
      %v797 = vadd.f32 %v795, %v796
      %v798 = vrot.slane %v797, 2
      %v799 = vadd.f32 %v797, %v798
      %v800 = vrot.slane %v799, 1
      %v801 = vadd.f32 %v799, %v800
      %v802 = vadd.f32 %v793, %v801
      %vm803 = vcmask 122880
      %804 = vst.msk [vmem:[%s4] sm:$0x1] %vm803, %v802
      %v805 = vld [vmem:[%s4 + $0x1] sm:$0x1]
      %v806 = vmul.f32 %v784, %v784
      %v807 = vsel %vm794, %v806, 0.0
      %v808 = vrot.slane %v807, 4
      %v809 = vadd.f32 %v807, %v808
      %v810 = vrot.slane %v809, 2
      %v811 = vadd.f32 %v809, %v810
      %v812 = vrot.slane %v811, 1
      %v813 = vadd.f32 %v811, %v812
      %v814 = vadd.f32 %v805, %v813
      %815 = vst.msk [vmem:[%s4 + $0x1] sm:$0x1] %vm803, %v814
      %v816 = vpack.c.bf16 %v784, %v784
      %vm817 = vcmask 123904
      %818 = vst.msk [vmem:[%s215] sm:$0x3] %vm817, %v816
      %p819 = scmp.lt.s32.totalorder %s20, 1
      %s820 = scalar_select %p819, %s20, 1
      %p821 = scmp.lt.s32.totalorder %s21, 3
      %s822 = scalar_select %p821, %s21, 3
      %s823 = smul.addr %s820, 4
      %s824 = sadd.s32 %s822, %s823
      %s825 = smul.addr %s824, 2
      %s826 = scalar_lea.vmem %s3, %s825
      // Predicated region
      $region37: #{depth_model_forward.15} parent=31 // pred_check
        %p827 = pneg %p116
      $region38: #{depth_model_forward.15} parent=31 // pred_check_branch
        %829 = sbr.rel (%p827) target = $region40
      $region39: #{depth_model_forward.15} parent=31 // pred_region
        _
      $region40: #{depth_model_forward.15} parent=31 // pred_fallthru
        _
      // Predicated region
      $region41: #{depth_model_forward.15} parent=31 // pred_check
        %p830 = pneg %p137
      $region42: #{depth_model_forward.15} parent=31 // pred_check_branch
        %832 = sbr.rel (%p830) target = $region44
      $region43: #{depth_model_forward.15} parent=31 // pred_region
        _
      $region44: #{depth_model_forward.15} parent=31 // pred_fallthru
        _
      // Predicated region
      $region45: #{depth_model_forward.15} parent=31 // pred_check
        %p833 = pneg %p137
      $region46: #{depth_model_forward.15} parent=31 // pred_check_branch
        %835 = sbr.rel (%p833) target = $region48
      $region47: #{depth_model_forward.15} parent=31 // pred_region
        _
      $region48: #{depth_model_forward.15} parent=31 // pred_fallthru
        _
    $region32: #{depth_model_forward.15} parent=5 // pred_fallthru
      _
    %p836 = scmp.le.s32.totalorder 2, %s11
    // Predicated region
    $region49: #{depth_model_forward.15} parent=5 // pred_check
      %p837 = pneg %p836
    $region50: #{depth_model_forward.15} parent=5 // pred_check_branch
      %839 = sbr.rel (%p837) target = $region52
    $region51: #{depth_model_forward.15} parent=5 // pred_region
      %s840 = ssub.s32 %s11, 2
      // Predicated region
      $region53: #{depth_model_forward.15} parent=51 // pred_check
        %p841 = pneg %p122
      $region54: #{depth_model_forward.15} parent=51 // pred_check_branch
        %843 = sbr.rel (%p841) target = $region56
      $region55: #{depth_model_forward.15} parent=51 // pred_region
        %p844 = scmp.lt.s32.totalorder %s22, 1
        %s845 = scalar_select %p844, %s22, 1
        %p846 = scmp.lt.s32.totalorder %s23, 3
        %s847 = scalar_select %p846, %s23, 3
        %s848 = smul.addr %s845, 4
        %s849 = sadd.s32 %s847, %s848
        %s850 = smul.addr %s849, 2
        %s851 = scalar_lea.vmem %s3, %s850
      $region56: #{depth_model_forward.15} parent=51 // pred_fallthru
        _
    $region52: #{depth_model_forward.15} parent=5 // pred_fallthru
      _
  $region6: #{depth_model_forward.15} parent=0 // loop_footer
    %s15 = sadd.s32 1, %s11
  $region7: #{depth_model_forward.15} parent=0 // loop_footer_branch
    %10 = sbr.rel target = $region3
  $region8: #{depth_model_forward.15} parent=0 // loop_exit
    _

// kernel: depth_model_forward.18
$region0: #{depth_model_forward.18}
  #allocation0 [shape = 'u32[]', space=smem, size = 0x4, offset = 0x4, fixed_abs, tag = 'smem constant byte address 0x4 - core index']
  #allocation1 [shape = 'u32[144,128]{1,0:T(1,128)}', space=vmem, size = 0x12000, scoped, tag = 'internal scratch']
  %s0 = inlined_call_operand.vmem [shape: bf16[128,8], index: 0, kind: input, shape index: {}]
  %s1 = inlined_call_operand.vmem [shape: f32[2,8], index: 1, kind: input, shape index: {}]
  %s2 = inlined_call_operand.vmem [shape: f32[1,8], index: 2, kind: input, shape index: {}]
  %s3 = inlined_call_operand.vmem [shape: f32[1,8], index: 3, kind: input, shape index: {}]
  %s4 = inlined_call_operand.vmem [shape: bf16[128,8], index: 4, kind: output, shape index: {}]
  %s5 = sld [smem:[#allocation0]]
  $region26: #{depth_model_forward.18} parent=0
    _
  %s7 = ssub.s32 1, %s5
  %s8 = scalar_select 0, %s7, %s5
  // Predicated region
  $region2: #{depth_model_forward.18} parent=0 // pred_check
    _
  $region3: #{depth_model_forward.18} parent=0 // pred_check_branch
    %10 = sbr.rel (0) target = $region5
  $region4: #{depth_model_forward.18} parent=0 // pred_region
    _
  $region5: #{depth_model_forward.18} parent=0 // pred_fallthru
    _
  // Predicated region
  $region6: #{depth_model_forward.18} parent=0 // pred_check
    _
  $region7: #{depth_model_forward.18} parent=0 // pred_check_branch
    %12 = sbr.rel (0) target = $region9
  $region8: #{depth_model_forward.18} parent=0 // pred_region
    _
  $region9: #{depth_model_forward.18} parent=0 // pred_fallthru
    _
  // Predicated region
  $region10: #{depth_model_forward.18} parent=0 // pred_check
    _
  $region11: #{depth_model_forward.18} parent=0 // pred_check_branch
    %14 = sbr.rel (0) target = $region13
  $region12: #{depth_model_forward.18} parent=0 // pred_region
    _
  $region13: #{depth_model_forward.18} parent=0 // pred_fallthru
    _
  // Predicated region
  $region14: #{depth_model_forward.18} parent=0 // pred_check
    _
  $region15: #{depth_model_forward.18} parent=0 // pred_check_branch
    %16 = sbr.rel (0) target = $region17
  $region16: #{depth_model_forward.18} parent=0 // pred_region
    _
  $region17: #{depth_model_forward.18} parent=0 // pred_fallthru
    _
  %v17 = vld [vmem:[%s1] sm:$0x1]
  %v18 = vmul.f32 %v17, 0.0078125
  %v19 = vld [vmem:[%s1 + $0x1] sm:$0x1]
  %v20 = vmul.f32 %v19, 0.0078125
  %v21 = vmul.f32 %v18, %v18
  %v22 = vsub.f32 %v20, %v21
  %v23 = vmax.f32 %v22, 0.0
  %v24 = vld [vmem:[%s2] sm:$0x1]
  %v25 = vadd.f32 %v23, 1e-05
  %v26 = vrsqrt.pop %v25
  %v27 = vmul.f32 %v24, %v26
  %v28 = vld [vmem:[%s3] sm:$0x1]
  %v29 = vmul.f32 %v18, %v27
  %v30 = vsub.f32 %v28, %v29
  %v31 = vld [vmem:[%s0] sm:$0xf]
  %v32 = vld [vmem:[%s0 + $0x4] sm:$0xf]
  %v33 = vld [vmem:[%s0 + $0x8] sm:$0xf]
  %v34 = vld [vmem:[%s0 + $0xc] sm:$0xf]
  %v35 = vld [vmem:[%s0 + $0x10] sm:$0xf]
  %v36 = vld [vmem:[%s0 + $0x14] sm:$0xf]
  %v37 = vld [vmem:[%s0 + $0x18] sm:$0xf]
  %v38 = vld [vmem:[%s0 + $0x1c] sm:$0xf]
  %v39 = vld [vmem:[%s0 + $0x20] sm:$0xf]
  %v40 = vld [vmem:[%s0 + $0x24] sm:$0xf]
  %v41 = vld [vmem:[%s0 + $0x28] sm:$0xf]
  %v42 = vld [vmem:[%s0 + $0x2c] sm:$0xf]
  %v43 = vld [vmem:[%s0 + $0x30] sm:$0xf]
  %v44 = vld [vmem:[%s0 + $0x34] sm:$0xf]
  %v45 = vld [vmem:[%s0 + $0x38] sm:$0xf]
  %v46 = vld [vmem:[%s0 + $0x3c] sm:$0xf]
  %v47 = vunpack.c.l.bf16 %v31
  %v48 = vunpack.c.l.bf16 %v32
  %v49 = vunpack.c.l.bf16 %v33
  %v50 = vunpack.c.l.bf16 %v34
  %v51 = vunpack.c.l.bf16 %v35
  %v52 = vunpack.c.l.bf16 %v36
  %v53 = vunpack.c.l.bf16 %v37
  %v54 = vunpack.c.l.bf16 %v38
  %v55 = vunpack.c.l.bf16 %v39
  %v56 = vunpack.c.l.bf16 %v40
  %v57 = vunpack.c.l.bf16 %v41
  %v58 = vunpack.c.l.bf16 %v42
  %v59 = vunpack.c.l.bf16 %v43
  %v60 = vunpack.c.l.bf16 %v44
  %v61 = vunpack.c.l.bf16 %v45
  %v62 = vunpack.c.l.bf16 %v46
  %v64 = vlaneseq
  %v65 = vshrl.u32 %v64, 7
  %v66 = vsub.s32 0, %v65
  %v67 = vrot.slane %v27, %v66
  %v69 = vmul.f32 %v47, %v67
  %v70 = vmul.f32 %v48, %v67
  %v71 = vmul.f32 %v49, %v67
  %v72 = vmul.f32 %v50, %v67
  %v73 = vmul.f32 %v51, %v67
  %v74 = vmul.f32 %v52, %v67
  %v75 = vmul.f32 %v53, %v67
  %v76 = vmul.f32 %v54, %v67
  %v77 = vmul.f32 %v55, %v67
  %v78 = vmul.f32 %v56, %v67
  %v79 = vmul.f32 %v57, %v67
  %v80 = vmul.f32 %v58, %v67
  %v81 = vmul.f32 %v59, %v67
  %v82 = vmul.f32 %v60, %v67
  %v83 = vmul.f32 %v61, %v67
  %v84 = vmul.f32 %v62, %v67
  %v86 = vlaneseq
  %v87 = vshrl.u32 %v86, 7
  %v88 = vsub.s32 0, %v87
  %v89 = vrot.slane %v30, %v88
  %v91 = vadd.f32 %v69, %v89
  %v92 = vadd.f32 %v70, %v89
  %v93 = vadd.f32 %v71, %v89
  %v94 = vadd.f32 %v72, %v89
  %v95 = vadd.f32 %v73, %v89
  %v96 = vadd.f32 %v74, %v89
  %v97 = vadd.f32 %v75, %v89
  %v98 = vadd.f32 %v76, %v89
  %v99 = vadd.f32 %v77, %v89
  %v100 = vadd.f32 %v78, %v89
  %v101 = vadd.f32 %v79, %v89
  %v102 = vadd.f32 %v80, %v89
  %v103 = vadd.f32 %v81, %v89
  %v104 = vadd.f32 %v82, %v89
  %v105 = vadd.f32 %v83, %v89
  %v106 = vadd.f32 %v84, %v89
  %v107 = vmax.f32 %v91, 0.0
  %v108 = vmax.f32 %v92, 0.0
  %v109 = vmax.f32 %v93, 0.0
  %v110 = vmax.f32 %v94, 0.0
  %v111 = vmax.f32 %v95, 0.0
  %v112 = vmax.f32 %v96, 0.0
  %v113 = vmax.f32 %v97, 0.0
  %v114 = vmax.f32 %v98, 0.0
  %v115 = vmax.f32 %v99, 0.0
  %v116 = vmax.f32 %v100, 0.0
  %v117 = vmax.f32 %v101, 0.0
  %v118 = vmax.f32 %v102, 0.0
  %v119 = vmax.f32 %v103, 0.0
  %v120 = vmax.f32 %v104, 0.0
  %v121 = vmax.f32 %v105, 0.0
  %v122 = vmax.f32 %v106, 0.0
  %v123 = vpack.c.bf16 %v108, %v107
  %v124 = vpack.c.bf16 %v110, %v109
  %v125 = vpack.c.bf16 %v112, %v111
  %v126 = vpack.c.bf16 %v114, %v113
  %v127 = vpack.c.bf16 %v116, %v115
  %v128 = vpack.c.bf16 %v118, %v117
  %v129 = vpack.c.bf16 %v120, %v119
  %v130 = vpack.c.bf16 %v122, %v121
  %v139 = vunpack.c.l.b16 %v123
  %v140 = vunpack.c.h.b16 %v123
  %v141 = vunpack.c.l.b16 %v124
  %v142 = vunpack.c.h.b16 %v124
  %v143 = vunpack.c.l.b16 %v125
  %v144 = vunpack.c.h.b16 %v125
  %v145 = vunpack.c.l.b16 %v126
  %v146 = vunpack.c.h.b16 %v126
  %v147 = vunpack.c.l.b16 %v127
  %v148 = vunpack.c.h.b16 %v127
  %v149 = vunpack.c.l.b16 %v128
  %v150 = vunpack.c.h.b16 %v128
  %v151 = vunpack.c.l.b16 %v129
  %v152 = vunpack.c.h.b16 %v129
  %v153 = vunpack.c.l.b16 %v130
  %v154 = vunpack.c.h.b16 %v130
  %v155 = vpack.c.b16 %v139, %v139
  %v156 = vpack.c.b16 %v140, %v140
  %v157 = vpack.c.b16 %v141, %v141
  %v158 = vpack.c.b16 %v142, %v142
  %v159 = vpack.c.b16 %v143, %v143
  %v160 = vpack.c.b16 %v144, %v144
  %v161 = vpack.c.b16 %v145, %v145
  %v162 = vpack.c.b16 %v146, %v146
  %v163 = vpack.c.b16 %v147, %v147
  %v164 = vpack.c.b16 %v148, %v148
  %v165 = vpack.c.b16 %v149, %v149
  %v166 = vpack.c.b16 %v150, %v150
  %v167 = vpack.c.b16 %v151, %v151
  %v168 = vpack.c.b16 %v152, %v152
  %v169 = vpack.c.b16 %v153, %v153
  %v170 = vpack.c.b16 %v154, %v154
  %vm187 = vcmask 60416
  %188 = vst.msk [vmem:[%s4] sm:$0xf] %vm187, %v155
  %189 = vst.msk [vmem:[%s4 + $0x4] sm:$0xf] %vm187, %v156
  %190 = vst.msk [vmem:[%s4 + $0x8] sm:$0xf] %vm187, %v157
  %191 = vst.msk [vmem:[%s4 + $0xc] sm:$0xf] %vm187, %v158
  %192 = vst.msk [vmem:[%s4 + $0x10] sm:$0xf] %vm187, %v159
  %193 = vst.msk [vmem:[%s4 + $0x14] sm:$0xf] %vm187, %v160
  %194 = vst.msk [vmem:[%s4 + $0x18] sm:$0xf] %vm187, %v161
  %195 = vst.msk [vmem:[%s4 + $0x1c] sm:$0xf] %vm187, %v162
  %196 = vst.msk [vmem:[%s4 + $0x20] sm:$0xf] %vm187, %v163
  %197 = vst.msk [vmem:[%s4 + $0x24] sm:$0xf] %vm187, %v164
  %198 = vst.msk [vmem:[%s4 + $0x28] sm:$0xf] %vm187, %v165
  %199 = vst.msk [vmem:[%s4 + $0x2c] sm:$0xf] %vm187, %v166
  %200 = vst.msk [vmem:[%s4 + $0x30] sm:$0xf] %vm187, %v167
  %201 = vst.msk [vmem:[%s4 + $0x34] sm:$0xf] %vm187, %v168
  %202 = vst.msk [vmem:[%s4 + $0x38] sm:$0xf] %vm187, %v169
  %203 = vst.msk [vmem:[%s4 + $0x3c] sm:$0xf] %vm187, %v170
  // Predicated region
  $region18: #{depth_model_forward.18} parent=0 // pred_check
    _
  $region19: #{depth_model_forward.18} parent=0 // pred_check_branch
    %205 = sbr.rel (0) target = $region21
  $region20: #{depth_model_forward.18} parent=0 // pred_region
    _
  $region21: #{depth_model_forward.18} parent=0 // pred_fallthru
    _
  // Predicated region
  $region22: #{depth_model_forward.18} parent=0 // pred_check
    _
  $region23: #{depth_model_forward.18} parent=0 // pred_check_branch
    %207 = sbr.rel (0) target = $region25
  $region24: #{depth_model_forward.18} parent=0 // pred_region
    _
  $region25: #{depth_model_forward.18} parent=0 // pred_fallthru
    _

// kernel: depth_model_forward.17
$region0: #{depth_model_forward.17}
  #allocation0 [shape = 'u32[]', space=smem, size = 0x4, offset = 0x4, fixed_abs, tag = 'smem constant byte address 0x4 - core index']
  #allocation1 [shape = 'u32[144,128]{1,0:T(1,128)}', space=vmem, size = 0x12000, scoped, tag = 'internal scratch']
  %s0 = inlined_call_operand.vmem [shape: bf16[2,10,10,32], index: 0, kind: input, shape index: {}]
  %s1 = inlined_call_operand.vmem [shape: bf16[9,32,8], index: 1, kind: input, shape index: {}]
  %s2 = inlined_call_operand.vmem [shape: f32[1,8], index: 2, kind: input, shape index: {}]
  %s3 = inlined_call_operand.vmem [shape: bf16[2,8,8,8], index: 3, kind: output, shape index: {0}]
  %s4 = inlined_call_operand.vmem [shape: f32[2,8], index: 4, kind: output, shape index: {1}]
  %5 = xla_tuple %s3, %s4
  %s6 = sld [smem:[#allocation0]]
  $region57: #{depth_model_forward.17} parent=0
    _
  %s8 = ssub.s32 1, %s6
  %s9 = scalar_select 0, %s8, %s6
  loop: start=0, step=1, limit=18
  $region2: #{depth_model_forward.17} parent=0 // loop_pre_header
    _
  $region3: #{depth_model_forward.17} parent=0 // loop_header
    %s11 = sphi 0, %s15
    %p12 = scmp.ge.s32.totalorder %s11, 18
    %s18 = sphi 0, %s30
    %s19 = sphi 0, %s26
    %s20 = sphi 0, %s18
    %s21 = sphi 0, %s19
    %s22 = sphi 0, %s20
    %s23 = sphi 0, %s21
    %s33 = sphi 0, %s35
    %s36 = sphi 0, %s33
    %s37 = sphi 0, %s36
    %s53 = sphi 0, %s37
    %s57 = sphi 0, %s57
    %s59 = sphi 0, %s57
    %s60 = sphi 0, %s59
    %s74 = sphi 0, %s60
    %s78 = sphi 0, %s78
    %s80 = sphi 0, %s78
    %s81 = sphi 0, %s80
    %s95 = sphi 0, %s81
    %s103 = sphi 0, %s105
    %s106 = sphi 0, %s103
    %s107 = sphi 0, %s106
    %s123 = sphi 0, %s107
    %s127 = sphi 0, %s127
    %s129 = sphi 0, %s127
    %s130 = sphi 0, %s129
    %s144 = sphi 0, %s130
  $region4: #{depth_model_forward.17} parent=0 // loop_header_branch
    %14 = sbr.rel (%p12) target = $region8
  $region5: #{depth_model_forward.17} parent=0 // loop_body
    %s16 = ssub.s32 %s11, 1
    %s17 = ssub.s32 %s11, 2
    %s24 = sadd.s32 1, %s19
    %p25 = scmp.ge.s32.totalorder %s24, 8
    %s26 = scalar_select %p25, 0, %s24
    %s27 = sadd.s32 1, %s18
    %s28 = scalar_select %p25, %s27, %s18
    %p29 = scmp.ge.s32.totalorder %s28, 2
    %s30 = scalar_select %p29, 0, %s28
    %s31 = ssub.s32 %s18, %s30
    %p32 = scmp.eq.s32.totalorder %s31, 0
    %s34 = sadd.s32 %s33, 1
    %s35 = scalar_select %p32, %s33, %s34
    %p38 = pneg %p32
    %p39 = scmp.eq.s32.totalorder %s11, 15
    %p40 = por %p38, %p39
    %p41 = scmp.ne.s32.totalorder %s33, %s36
    %p42 = scmp.eq.s32.totalorder %s11, 0
    %p43 = por %p41, %p42
    %p44 = scmp.ne.s32.totalorder %s33, %s36
    %p45 = scmp.eq.s32.totalorder %s16, 15
    %p46 = por %p44, %p45
    %p47 = scmp.ne.s32.totalorder %s36, %s37
    %p48 = scmp.eq.s32.totalorder %s16, 0
    %p49 = por %p47, %p48
    %p50 = scmp.ne.s32.totalorder %s36, %s37
    %p51 = scmp.eq.s32.totalorder %s17, 15
    %p52 = por %p50, %p51
    %p54 = scmp.ne.s32.totalorder %s37, %s53
    %p55 = scmp.eq.s32.totalorder %s17, 0
    %p56 = por %p54, %p55
    %s58 = sadd.s32 %s57, 1
    %p61 = scmp.eq.s32.totalorder %s11, 15
    %p62 = scmp.ne.s32.totalorder %s57, %s59
    %p63 = scmp.eq.s32.totalorder %s11, 0
    %p64 = por %p62, %p63
    %p65 = scmp.ne.s32.totalorder %s57, %s59
    %p66 = scmp.eq.s32.totalorder %s16, 15
    %p67 = por %p65, %p66
    %p68 = scmp.ne.s32.totalorder %s59, %s60
    %p69 = scmp.eq.s32.totalorder %s16, 0
    %p70 = por %p68, %p69
    %p71 = scmp.ne.s32.totalorder %s59, %s60
    %p72 = scmp.eq.s32.totalorder %s17, 15
    %p73 = por %p71, %p72
    %p75 = scmp.ne.s32.totalorder %s60, %s74
    %p76 = scmp.eq.s32.totalorder %s17, 0
    %p77 = por %p75, %p76
    %s79 = sadd.s32 %s78, 1
    %p82 = scmp.eq.s32.totalorder %s11, 15
    %p83 = scmp.ne.s32.totalorder %s78, %s80
    %p84 = scmp.eq.s32.totalorder %s11, 0
    %p85 = por %p83, %p84
    %p86 = scmp.ne.s32.totalorder %s78, %s80
    %p87 = scmp.eq.s32.totalorder %s16, 15
    %p88 = por %p86, %p87
    %p89 = scmp.ne.s32.totalorder %s80, %s81
    %p90 = scmp.eq.s32.totalorder %s16, 0
    %p91 = por %p89, %p90
    %p92 = scmp.ne.s32.totalorder %s80, %s81
    %p93 = scmp.eq.s32.totalorder %s17, 15
    %p94 = por %p92, %p93
    %p96 = scmp.ne.s32.totalorder %s81, %s95
    %p97 = scmp.eq.s32.totalorder %s17, 0
    %p98 = por %p96, %p97
    %s99 = ssub.s32 %s18, %s30
    %s100 = ssub.s32 %s19, %s26
    %s101 = sor.u32 %s99, %s100
    %p102 = scmp.eq.s32.totalorder %s101, 0
    %s104 = sadd.s32 %s103, 1
    %s105 = scalar_select %p102, %s103, %s104
    %p108 = pneg %p102
    %p109 = scmp.eq.s32.totalorder %s11, 15
    %p110 = por %p108, %p109
    %p111 = scmp.ne.s32.totalorder %s103, %s106
    %p112 = scmp.eq.s32.totalorder %s11, 0
    %p113 = por %p111, %p112
    %p114 = scmp.ne.s32.totalorder %s103, %s106
    %p115 = scmp.eq.s32.totalorder %s16, 15
    %p116 = por %p114, %p115
    %p117 = scmp.ne.s32.totalorder %s106, %s107
    %p118 = scmp.eq.s32.totalorder %s16, 0
    %p119 = por %p117, %p118
    %p120 = scmp.ne.s32.totalorder %s106, %s107
    %p121 = scmp.eq.s32.totalorder %s17, 15
    %p122 = por %p120, %p121
    %p124 = scmp.ne.s32.totalorder %s107, %s123
    %p125 = scmp.eq.s32.totalorder %s17, 0
    %p126 = por %p124, %p125
    %s128 = sadd.s32 %s127, 1
    %p131 = scmp.eq.s32.totalorder %s11, 15
    %p132 = scmp.ne.s32.totalorder %s127, %s129
    %p133 = scmp.eq.s32.totalorder %s11, 0
    %p134 = por %p132, %p133
    %p135 = scmp.ne.s32.totalorder %s127, %s129
    %p136 = scmp.eq.s32.totalorder %s16, 15
    %p137 = por %p135, %p136
    %p138 = scmp.ne.s32.totalorder %s129, %s130
    %p139 = scmp.eq.s32.totalorder %s16, 0
    %p140 = por %p138, %p139
    %p141 = scmp.ne.s32.totalorder %s129, %s130
    %p142 = scmp.eq.s32.totalorder %s17, 15
    %p143 = por %p141, %p142
    %p145 = scmp.ne.s32.totalorder %s130, %s144
    %p146 = scmp.eq.s32.totalorder %s17, 0
    %p147 = por %p145, %p146
    %p148 = scmp.le.s32.totalorder 1, %s11
    %p149 = scmp.lt.s32.totalorder %s11, 17
    %p150 = pnand %p148, %p149
    %p151 = pneg %p150
    // Predicated region
    $region9: #{depth_model_forward.17} parent=5 // pred_check
      _
    $region10: #{depth_model_forward.17} parent=5 // pred_check_branch
      %153 = sbr.rel (%p150) target = $region12
    $region11: #{depth_model_forward.17} parent=5 // pred_region
      %s154 = ssub.s32 %s11, 1
      // Predicated region
      $region13: #{depth_model_forward.17} parent=11 // pred_check
        %p155 = pneg %p70
      $region14: #{depth_model_forward.17} parent=11 // pred_check_branch
        %157 = sbr.rel (%p155) target = $region16
      $region15: #{depth_model_forward.17} parent=11 // pred_region
        _
      $region16: #{depth_model_forward.17} parent=11 // pred_fallthru
        _
      // Predicated region
      $region17: #{depth_model_forward.17} parent=11 // pred_check
        %p158 = pneg %p91
      $region18: #{depth_model_forward.17} parent=11 // pred_check_branch
        %160 = sbr.rel (%p158) target = $region20
      $region19: #{depth_model_forward.17} parent=11 // pred_region
        _
      $region20: #{depth_model_forward.17} parent=11 // pred_fallthru
        _
    $region12: #{depth_model_forward.17} parent=5 // pred_fallthru
      _
    %p161 = scmp.lt.s32.totalorder %s11, 16
    // Predicated region
    $region21: #{depth_model_forward.17} parent=5 // pred_check
      %p162 = pneg %p161
    $region22: #{depth_model_forward.17} parent=5 // pred_check_branch
      %164 = sbr.rel (%p162) target = $region24
    $region23: #{depth_model_forward.17} parent=5 // pred_region
      // Predicated region
      $region25: #{depth_model_forward.17} parent=23 // pred_check
        %p165 = pneg %p43
      $region26: #{depth_model_forward.17} parent=23 // pred_check_branch
        %167 = sbr.rel (%p165) target = $region28
      $region27: #{depth_model_forward.17} parent=23 // pred_region
        %p168 = scmp.lt.s32.totalorder %s18, 1
        %s169 = scalar_select %p168, %s18, 1
        %s170 = smul.addr %s169, 20
        %s171 = smul.addr %s170, 4
        %s172 = scalar_lea.vmem %s0, %s171
      $region28: #{depth_model_forward.17} parent=23 // pred_fallthru
        _
    $region24: #{depth_model_forward.17} parent=5 // pred_fallthru
      _
    %p173 = scmp.le.s32.totalorder 1, %s11
    %p174 = scmp.lt.s32.totalorder %s11, 17
    %p175 = pnand %p173, %p174
    %p176 = pneg %p175
    // Predicated region
    $region29: #{depth_model_forward.17} parent=5 // pred_check
      _
    $region30: #{depth_model_forward.17} parent=5 // pred_check_branch
      %178 = sbr.rel (%p175) target = $region32
    $region31: #{depth_model_forward.17} parent=5 // pred_region
      %s179 = ssub.s32 %s11, 1
      %p180 = scmp.lt.s32.totalorder %s20, 1
      %s181 = scalar_select %p180, %s20, 1
      %s182 = smul.addr %s181, 20
      %s183 = smul.addr %s182, 4
      %s184 = scalar_lea.vmem %s0, %s183
      %p185 = pneg %p49
      %p186 = pneg %p46
      %p187 = pneg %p70
      %p188 = pneg %p67
      %p189 = pneg %p91
      %p190 = pneg %p88
      %p191 = pneg %p119
      %p192 = pneg %p116
      %p193 = scmp.lt.s32.totalorder %s20, 1
      %s194 = scalar_select %p193, %s20, 1
      %p195 = scmp.lt.s32.totalorder %s21, 7
      %s196 = scalar_select %p195, %s21, 7
      %s197 = smul.addr %s194, 8
      %s198 = sadd.s32 %s196, %s197
      %s199 = smul.addr %s198, 4
      %s200 = scalar_lea.vmem %s3, %s199
      %p201 = pneg %p140
      %p202 = pneg %p137
      %p203 = scmp.lt.s32.totalorder %s20, 1
      %s204 = scalar_select %p203, %s20, 1
      %s205 = smul.addr %s204, 20
      %s206 = smul.addr %s205, 4
      %s207 = scalar_lea.vmem %s0, %s206
      %p208 = scmp.lt.s32.totalorder %s20, 1
      %s209 = scalar_select %p208, %s20, 1
      %p210 = scmp.lt.s32.totalorder %s21, 7
      %s211 = scalar_select %p210, %s21, 7
      %s212 = smul.addr %s209, 8
      %s213 = sadd.s32 %s211, %s212
      %s214 = smul.addr %s213, 4
      %s215 = scalar_lea.vmem %s3, %s214
      %s217 = smul.u32 %s21, 2
      %s218 = smul.addr %s217, 4
      %s219 = scalar_lea.vmem %s207, %s218
      %v220 = vld [vmem:[%s219] sm:$0xf]
      %v221 = vld [vmem:[%s219 + $0x4] sm:$0x1]
      %v222 = vld [vmem:[%s1] sm:$0xf]
      %v223 = vld [vmem:[%s1 + $0x4] sm:$0xf]
      %v224 = vld [vmem:[%s1 + $0x8] sm:$0xf]
      %v225 = vld [vmem:[%s1 + $0xc] sm:$0xf]
      %v228 = vunpack.c.l.b16 %v220
      %v229 = vunpack.c.l.b16 %v221
      %v230 = vpack.c.b16 %v229, %v228
      %v235 = vunpack.c.l.b16 %v222
      %v236 = vunpack.c.l.b16 %v223
      %v237 = vunpack.c.l.b16 %v224
      %v238 = vunpack.c.l.b16 %v225
      %v239 = vpack.c.b16 %v236, %v235
      %v240 = vpack.c.b16 %v238, %v237
      %vm243 = vcmask 261120
      %v245 = vsel %vm243, %v230, 0
      %247 = vmatprep.subr.bf16.mxu0 0
      %248 = vmatpush1.bf16.msra.mxu0 0
      %249 = vmatprep.subr.bf16.mxu0 0
      %250 = vmatpush1.bf16.msra.mxu0 0
      %251 = vmatprep.subr.bf16.mxu0 0
      %252 = vmatpush1.bf16.msra.mxu0 0
      %253 = vmatprep.subr.bf16.mxu0 0
      %254 = vmatpush1.bf16.msra.mxu0 0
      %255 = vmatprep.subr.bf16.mxu0 0
      %256 = vmatpush1.bf16.msra.mxu0 0
      %257 = vmatprep.subr.bf16.mxu0 0
      %258 = vmatpush1.bf16.msra.mxu0 0
      %259 = vmatprep.subr.bf16.mxu0 0
      %260 = vmatpush1.bf16.msra.mxu0 %v240
      %261 = vmatprep.subr.bf16.mxu0 0
      %262 = vmatpush1.bf16.msra.mxu0 %v239
      %263 = vmatprep.subr.bf16.mxu0 0
      %264 = vmatpush2.bf16.msra.mxu0 0
      %265 = vmatprep.subr.bf16.mxu0 0
      %266 = vmatpush2.bf16.msra.mxu0 0
      %267 = vmatprep.subr.bf16.mxu0 0
      %268 = vmatpush2.bf16.msra.mxu0 0
      %269 = vmatprep.subr.bf16.mxu0 0
      %270 = vmatpush2.bf16.msra.mxu0 0
      %271 = vmatprep.subr.bf16.mxu0 0
      %272 = vmatpush2.bf16.msra.mxu0 0
      %273 = vmatprep.subr.bf16.mxu0 0
      %274 = vmatpush2.bf16.msra.mxu0 0
      %275 = vmatprep.subr.bf16.mxu0 0
      %276 = vmatpush2.bf16.msra.mxu0 0
      %277 = vmatprep.subr.bf16.mxu0 0
      %278 = vmatpush2.bf16.msra.mxu0 0
      %279 = vmatprep.mubr.bf16.mxu0 0
      %280 = vmatmul.mubr.bf16.gmra.mxu0 %v245
      %v281 = vpop.f32.mrf.mxu0
      %v282 = vadd.f32 0.0, %v281
      %v283 = vpop.f32.mrf.mxu0
      %v284 = vpop.f32.mrf.mxu0
      %v285 = vpop.f32.mrf.mxu0
      %286 = vdwg.mxu0
      %v287 = vadd.f32 %v282, 0.0
      %s288 = scalar_lea.vmem %s1, 16
      %v289 = vld [vmem:[%s288] sm:$0xf]
      %v290 = vld [vmem:[%s288 + $0x4] sm:$0xf]
      %v291 = vld [vmem:[%s288 + $0x8] sm:$0xf]
      %v292 = vld [vmem:[%s288 + $0xc] sm:$0xf]
      %v297 = vunpack.c.l.b16 %v289
      %v298 = vunpack.c.l.b16 %v290
      %v299 = vunpack.c.l.b16 %v291
      %v300 = vunpack.c.l.b16 %v292
      %v301 = vpack.c.b16 %v298, %v297
      %v302 = vpack.c.b16 %v300, %v299
      %305 = vmatprep.subr.bf16.mxu0 0
      %306 = vmatpush1.bf16.msra.mxu0 0
      %307 = vmatprep.subr.bf16.mxu0 0
      %308 = vmatpush1.bf16.msra.mxu0 0
      %309 = vmatprep.subr.bf16.mxu0 0
      %310 = vmatpush1.bf16.msra.mxu0 0
      %311 = vmatprep.subr.bf16.mxu0 0
      %312 = vmatpush1.bf16.msra.mxu0 0
      %313 = vmatprep.subr.bf16.mxu0 0
      %314 = vmatpush1.bf16.msra.mxu0 0
      %315 = vmatprep.subr.bf16.mxu0 0
      %316 = vmatpush1.bf16.msra.mxu0 0
      %317 = vmatprep.subr.bf16.mxu0 0
      %318 = vmatpush1.bf16.msra.mxu0 %v302
      %319 = vmatprep.subr.bf16.mxu0 0
      %320 = vmatpush1.bf16.msra.mxu0 %v301
      %321 = vmatprep.subr.bf16.mxu0 0
      %322 = vmatpush2.bf16.msra.mxu0 0
      %323 = vmatprep.subr.bf16.mxu0 0
      %324 = vmatpush2.bf16.msra.mxu0 0
      %325 = vmatprep.subr.bf16.mxu0 0
      %326 = vmatpush2.bf16.msra.mxu0 0
      %327 = vmatprep.subr.bf16.mxu0 0
      %328 = vmatpush2.bf16.msra.mxu0 0
      %329 = vmatprep.subr.bf16.mxu0 0
      %330 = vmatpush2.bf16.msra.mxu0 0
      %331 = vmatprep.subr.bf16.mxu0 0
      %332 = vmatpush2.bf16.msra.mxu0 0
      %333 = vmatprep.subr.bf16.mxu0 0
      %334 = vmatpush2.bf16.msra.mxu0 0
      %335 = vmatprep.subr.bf16.mxu0 0
      %336 = vmatpush2.bf16.msra.mxu0 0
      %337 = vmatprep.mubr.bf16.mxu0 0
      %338 = vmatmul.mubr.bf16.gmra.mxu0 %v245
      %v339 = vpop.f32.mrf.mxu0
      %v340 = vadd.f32 0.0, %v339
      %v341 = vpop.f32.mrf.mxu0
      %v342 = vpop.f32.mrf.mxu0
      %v343 = vadd.f32 0.0, %v342
      %v344 = vpop.f32.mrf.mxu0
      %345 = vdwg.mxu0
      %vm348 = vcmask 1046528
      %v349 = vrot.slane %v340, 1
      %v350 = vrot.slane %v343, 1
      %v351 = vsel %vm348, %v349, %v350
      %v353 = vadd.f32 %v287, %v351
      %s354 = scalar_lea.vmem %s1, 32
      %v355 = vld [vmem:[%s354] sm:$0xf]
      %v356 = vld [vmem:[%s354 + $0x4] sm:$0xf]
      %v357 = vld [vmem:[%s354 + $0x8] sm:$0xf]
      %v358 = vld [vmem:[%s354 + $0xc] sm:$0xf]
      %v363 = vunpack.c.l.b16 %v355
      %v364 = vunpack.c.l.b16 %v356
      %v365 = vunpack.c.l.b16 %v357
      %v366 = vunpack.c.l.b16 %v358
      %v367 = vpack.c.b16 %v364, %v363
      %v368 = vpack.c.b16 %v366, %v365
      %371 = vmatprep.subr.bf16.mxu0 0
      %372 = vmatpush1.bf16.msra.mxu0 0
      %373 = vmatprep.subr.bf16.mxu0 0
      %374 = vmatpush1.bf16.msra.mxu0 0
      %375 = vmatprep.subr.bf16.mxu0 0
      %376 = vmatpush1.bf16.msra.mxu0 0
      %377 = vmatprep.subr.bf16.mxu0 0
      %378 = vmatpush1.bf16.msra.mxu0 0
      %379 = vmatprep.subr.bf16.mxu0 0
      %380 = vmatpush1.bf16.msra.mxu0 0
      %381 = vmatprep.subr.bf16.mxu0 0
      %382 = vmatpush1.bf16.msra.mxu0 0
      %383 = vmatprep.subr.bf16.mxu0 0
      %384 = vmatpush1.bf16.msra.mxu0 %v368
      %385 = vmatprep.subr.bf16.mxu0 0
      %386 = vmatpush1.bf16.msra.mxu0 %v367
      %387 = vmatprep.subr.bf16.mxu0 0
      %388 = vmatpush2.bf16.msra.mxu0 0
      %389 = vmatprep.subr.bf16.mxu0 0
      %390 = vmatpush2.bf16.msra.mxu0 0
      %391 = vmatprep.subr.bf16.mxu0 0
      %392 = vmatpush2.bf16.msra.mxu0 0
      %393 = vmatprep.subr.bf16.mxu0 0
      %394 = vmatpush2.bf16.msra.mxu0 0
      %395 = vmatprep.subr.bf16.mxu0 0
      %396 = vmatpush2.bf16.msra.mxu0 0
      %397 = vmatprep.subr.bf16.mxu0 0
      %398 = vmatpush2.bf16.msra.mxu0 0
      %399 = vmatprep.subr.bf16.mxu0 0
      %400 = vmatpush2.bf16.msra.mxu0 0
      %401 = vmatprep.subr.bf16.mxu0 0
      %402 = vmatpush2.bf16.msra.mxu0 0
      %403 = vmatprep.mubr.bf16.mxu0 0
      %404 = vmatmul.mubr.bf16.gmra.mxu0 %v245
      %v405 = vpop.f32.mrf.mxu0
      %v406 = vadd.f32 0.0, %v405
      %v407 = vpop.f32.mrf.mxu0
      %v408 = vpop.f32.mrf.mxu0
      %v409 = vadd.f32 0.0, %v408
      %v410 = vpop.f32.mrf.mxu0
      %411 = vdwg.mxu0
      %vm414 = vcmask 1045504
      %v415 = vrot.slane %v406, 2
      %v416 = vrot.slane %v409, 2
      %v417 = vsel %vm414, %v415, %v416
      %v419 = vadd.f32 %v353, %v417
      %s420 = sadd.s32 %s21, 1
      %s421 = smul.u32 %s420, 2
      %s422 = smul.addr %s421, 4
      %s423 = scalar_lea.vmem %s207, %s422
      %v424 = vld [vmem:[%s423] sm:$0xf]
      %v425 = vld [vmem:[%s423 + $0x4] sm:$0x1]
      %s426 = scalar_lea.vmem %s1, 48
      %v427 = vld [vmem:[%s426] sm:$0xf]
      %v428 = vld [vmem:[%s426 + $0x4] sm:$0xf]
      %v429 = vld [vmem:[%s426 + $0x8] sm:$0xf]
      %v430 = vld [vmem:[%s426 + $0xc] sm:$0xf]
      %v433 = vunpack.c.l.b16 %v424
      %v434 = vunpack.c.l.b16 %v425
      %v435 = vpack.c.b16 %v434, %v433
      %v440 = vunpack.c.l.b16 %v427
      %v441 = vunpack.c.l.b16 %v428
      %v442 = vunpack.c.l.b16 %v429
      %v443 = vunpack.c.l.b16 %v430
      %v444 = vpack.c.b16 %v441, %v440
      %v445 = vpack.c.b16 %v443, %v442
      %v449 = vsel %vm243, %v435, 0
      %451 = vmatprep.subr.bf16.mxu0 0
      %452 = vmatpush1.bf16.msra.mxu0 0
      %453 = vmatprep.subr.bf16.mxu0 0
      %454 = vmatpush1.bf16.msra.mxu0 0
      %455 = vmatprep.subr.bf16.mxu0 0
      %456 = vmatpush1.bf16.msra.mxu0 0
      %457 = vmatprep.subr.bf16.mxu0 0
      %458 = vmatpush1.bf16.msra.mxu0 0
      %459 = vmatprep.subr.bf16.mxu0 0
      %460 = vmatpush1.bf16.msra.mxu0 0
      %461 = vmatprep.subr.bf16.mxu0 0
      %462 = vmatpush1.bf16.msra.mxu0 0
      %463 = vmatprep.subr.bf16.mxu0 0
      %464 = vmatpush1.bf16.msra.mxu0 %v445
      %465 = vmatprep.subr.bf16.mxu0 0
      %466 = vmatpush1.bf16.msra.mxu0 %v444
      %467 = vmatprep.subr.bf16.mxu0 0
      %468 = vmatpush2.bf16.msra.mxu0 0
      %469 = vmatprep.subr.bf16.mxu0 0
      %470 = vmatpush2.bf16.msra.mxu0 0
      %471 = vmatprep.subr.bf16.mxu0 0
      %472 = vmatpush2.bf16.msra.mxu0 0
      %473 = vmatprep.subr.bf16.mxu0 0
      %474 = vmatpush2.bf16.msra.mxu0 0
      %475 = vmatprep.subr.bf16.mxu0 0
      %476 = vmatpush2.bf16.msra.mxu0 0
      %477 = vmatprep.subr.bf16.mxu0 0
      %478 = vmatpush2.bf16.msra.mxu0 0
      %479 = vmatprep.subr.bf16.mxu0 0
      %480 = vmatpush2.bf16.msra.mxu0 0
      %481 = vmatprep.subr.bf16.mxu0 0
      %482 = vmatpush2.bf16.msra.mxu0 0
      %483 = vmatprep.mubr.bf16.mxu0 0
      %484 = vmatmul.mubr.bf16.gmra.mxu0 %v449
      %v485 = vpop.f32.mrf.mxu0
      %v486 = vadd.f32 0.0, %v485
      %v487 = vpop.f32.mrf.mxu0
      %v488 = vpop.f32.mrf.mxu0
      %v489 = vpop.f32.mrf.mxu0
      %490 = vdwg.mxu0
      %v491 = vadd.f32 %v419, %v486
      %s492 = scalar_lea.vmem %s1, 64
      %v493 = vld [vmem:[%s492] sm:$0xf]
      %v494 = vld [vmem:[%s492 + $0x4] sm:$0xf]
      %v495 = vld [vmem:[%s492 + $0x8] sm:$0xf]
      %v496 = vld [vmem:[%s492 + $0xc] sm:$0xf]
      %v501 = vunpack.c.l.b16 %v493
      %v502 = vunpack.c.l.b16 %v494
      %v503 = vunpack.c.l.b16 %v495
      %v504 = vunpack.c.l.b16 %v496
      %v505 = vpack.c.b16 %v502, %v501
      %v506 = vpack.c.b16 %v504, %v503
      %509 = vmatprep.subr.bf16.mxu0 0
      %510 = vmatpush1.bf16.msra.mxu0 0
      %511 = vmatprep.subr.bf16.mxu0 0
      %512 = vmatpush1.bf16.msra.mxu0 0
      %513 = vmatprep.subr.bf16.mxu0 0
      %514 = vmatpush1.bf16.msra.mxu0 0
      %515 = vmatprep.subr.bf16.mxu0 0
      %516 = vmatpush1.bf16.msra.mxu0 0
      %517 = vmatprep.subr.bf16.mxu0 0
      %518 = vmatpush1.bf16.msra.mxu0 0
      %519 = vmatprep.subr.bf16.mxu0 0
      %520 = vmatpush1.bf16.msra.mxu0 0
      %521 = vmatprep.subr.bf16.mxu0 0
      %522 = vmatpush1.bf16.msra.mxu0 %v506
      %523 = vmatprep.subr.bf16.mxu0 0
      %524 = vmatpush1.bf16.msra.mxu0 %v505
      %525 = vmatprep.subr.bf16.mxu0 0
      %526 = vmatpush2.bf16.msra.mxu0 0
      %527 = vmatprep.subr.bf16.mxu0 0
      %528 = vmatpush2.bf16.msra.mxu0 0
      %529 = vmatprep.subr.bf16.mxu0 0
      %530 = vmatpush2.bf16.msra.mxu0 0
      %531 = vmatprep.subr.bf16.mxu0 0
      %532 = vmatpush2.bf16.msra.mxu0 0
      %533 = vmatprep.subr.bf16.mxu0 0
      %534 = vmatpush2.bf16.msra.mxu0 0
      %535 = vmatprep.subr.bf16.mxu0 0
      %536 = vmatpush2.bf16.msra.mxu0 0
      %537 = vmatprep.subr.bf16.mxu0 0
      %538 = vmatpush2.bf16.msra.mxu0 0
      %539 = vmatprep.subr.bf16.mxu0 0
      %540 = vmatpush2.bf16.msra.mxu0 0
      %541 = vmatprep.mubr.bf16.mxu0 0
      %542 = vmatmul.mubr.bf16.gmra.mxu0 %v449
      %v543 = vpop.f32.mrf.mxu0
      %v544 = vadd.f32 0.0, %v543
      %v545 = vpop.f32.mrf.mxu0
      %v546 = vpop.f32.mrf.mxu0
      %v547 = vadd.f32 0.0, %v546
      %v548 = vpop.f32.mrf.mxu0
      %549 = vdwg.mxu0
      %v552 = vrot.slane %v544, 1
      %v553 = vrot.slane %v547, 1
      %v554 = vsel %vm348, %v552, %v553
      %v556 = vadd.f32 %v491, %v554
      %s557 = scalar_lea.vmem %s1, 80
      %v558 = vld [vmem:[%s557] sm:$0xf]
      %v559 = vld [vmem:[%s557 + $0x4] sm:$0xf]
      %v560 = vld [vmem:[%s557 + $0x8] sm:$0xf]
      %v561 = vld [vmem:[%s557 + $0xc] sm:$0xf]
      %v566 = vunpack.c.l.b16 %v558
      %v567 = vunpack.c.l.b16 %v559
      %v568 = vunpack.c.l.b16 %v560
      %v569 = vunpack.c.l.b16 %v561
      %v570 = vpack.c.b16 %v567, %v566
      %v571 = vpack.c.b16 %v569, %v568
      %574 = vmatprep.subr.bf16.mxu0 0
      %575 = vmatpush1.bf16.msra.mxu0 0
      %576 = vmatprep.subr.bf16.mxu0 0
      %577 = vmatpush1.bf16.msra.mxu0 0
      %578 = vmatprep.subr.bf16.mxu0 0
      %579 = vmatpush1.bf16.msra.mxu0 0
      %580 = vmatprep.subr.bf16.mxu0 0
      %581 = vmatpush1.bf16.msra.mxu0 0
      %582 = vmatprep.subr.bf16.mxu0 0
      %583 = vmatpush1.bf16.msra.mxu0 0
      %584 = vmatprep.subr.bf16.mxu0 0
      %585 = vmatpush1.bf16.msra.mxu0 0
      %586 = vmatprep.subr.bf16.mxu0 0
      %587 = vmatpush1.bf16.msra.mxu0 %v571
      %588 = vmatprep.subr.bf16.mxu0 0
      %589 = vmatpush1.bf16.msra.mxu0 %v570
      %590 = vmatprep.subr.bf16.mxu0 0
      %591 = vmatpush2.bf16.msra.mxu0 0
      %592 = vmatprep.subr.bf16.mxu0 0
      %593 = vmatpush2.bf16.msra.mxu0 0
      %594 = vmatprep.subr.bf16.mxu0 0
      %595 = vmatpush2.bf16.msra.mxu0 0
      %596 = vmatprep.subr.bf16.mxu0 0
      %597 = vmatpush2.bf16.msra.mxu0 0
      %598 = vmatprep.subr.bf16.mxu0 0
      %599 = vmatpush2.bf16.msra.mxu0 0
      %600 = vmatprep.subr.bf16.mxu0 0
      %601 = vmatpush2.bf16.msra.mxu0 0
      %602 = vmatprep.subr.bf16.mxu0 0
      %603 = vmatpush2.bf16.msra.mxu0 0
      %604 = vmatprep.subr.bf16.mxu0 0
      %605 = vmatpush2.bf16.msra.mxu0 0
      %606 = vmatprep.mubr.bf16.mxu0 0
      %607 = vmatmul.mubr.bf16.gmra.mxu0 %v449
      %v608 = vpop.f32.mrf.mxu0
      %v609 = vadd.f32 0.0, %v608
      %v610 = vpop.f32.mrf.mxu0
      %v611 = vpop.f32.mrf.mxu0
      %v612 = vadd.f32 0.0, %v611
      %v613 = vpop.f32.mrf.mxu0
      %614 = vdwg.mxu0
      %v617 = vrot.slane %v609, 2
      %v618 = vrot.slane %v612, 2
      %v619 = vsel %vm414, %v617, %v618
      %v621 = vadd.f32 %v556, %v619
      %s622 = sadd.s32 %s21, 2
      %s623 = smul.u32 %s622, 2
      %s624 = smul.addr %s623, 4
      %s625 = scalar_lea.vmem %s207, %s624
      %v626 = vld [vmem:[%s625] sm:$0xf]
      %v627 = vld [vmem:[%s625 + $0x4] sm:$0x1]
      %s628 = scalar_lea.vmem %s1, 96
      %v629 = vld [vmem:[%s628] sm:$0xf]
      %v630 = vld [vmem:[%s628 + $0x4] sm:$0xf]
      %v631 = vld [vmem:[%s628 + $0x8] sm:$0xf]
      %v632 = vld [vmem:[%s628 + $0xc] sm:$0xf]
      %v635 = vunpack.c.l.b16 %v626
      %v636 = vunpack.c.l.b16 %v627
      %v637 = vpack.c.b16 %v636, %v635
      %v642 = vunpack.c.l.b16 %v629
      %v643 = vunpack.c.l.b16 %v630
      %v644 = vunpack.c.l.b16 %v631
      %v645 = vunpack.c.l.b16 %v632
      %v646 = vpack.c.b16 %v643, %v642
      %v647 = vpack.c.b16 %v645, %v644
      %v651 = vsel %vm243, %v637, 0
      %653 = vmatprep.subr.bf16.mxu0 0
      %654 = vmatpush1.bf16.msra.mxu0 0
      %655 = vmatprep.subr.bf16.mxu0 0
      %656 = vmatpush1.bf16.msra.mxu0 0
      %657 = vmatprep.subr.bf16.mxu0 0
      %658 = vmatpush1.bf16.msra.mxu0 0
      %659 = vmatprep.subr.bf16.mxu0 0
      %660 = vmatpush1.bf16.msra.mxu0 0
      %661 = vmatprep.subr.bf16.mxu0 0
      %662 = vmatpush1.bf16.msra.mxu0 0
      %663 = vmatprep.subr.bf16.mxu0 0
      %664 = vmatpush1.bf16.msra.mxu0 0
      %665 = vmatprep.subr.bf16.mxu0 0
      %666 = vmatpush1.bf16.msra.mxu0 %v647
      %667 = vmatprep.subr.bf16.mxu0 0
      %668 = vmatpush1.bf16.msra.mxu0 %v646
      %669 = vmatprep.subr.bf16.mxu0 0
      %670 = vmatpush2.bf16.msra.mxu0 0
      %671 = vmatprep.subr.bf16.mxu0 0
      %672 = vmatpush2.bf16.msra.mxu0 0
      %673 = vmatprep.subr.bf16.mxu0 0
      %674 = vmatpush2.bf16.msra.mxu0 0
      %675 = vmatprep.subr.bf16.mxu0 0
      %676 = vmatpush2.bf16.msra.mxu0 0
      %677 = vmatprep.subr.bf16.mxu0 0
      %678 = vmatpush2.bf16.msra.mxu0 0
      %679 = vmatprep.subr.bf16.mxu0 0
      %680 = vmatpush2.bf16.msra.mxu0 0
      %681 = vmatprep.subr.bf16.mxu0 0
      %682 = vmatpush2.bf16.msra.mxu0 0
      %683 = vmatprep.subr.bf16.mxu0 0
      %684 = vmatpush2.bf16.msra.mxu0 0
      %685 = vmatprep.mubr.bf16.mxu0 0
      %686 = vmatmul.mubr.bf16.gmra.mxu0 %v651
      %v687 = vpop.f32.mrf.mxu0
      %v688 = vadd.f32 0.0, %v687
      %v689 = vpop.f32.mrf.mxu0
      %v690 = vpop.f32.mrf.mxu0
      %v691 = vpop.f32.mrf.mxu0
      %692 = vdwg.mxu0
      %v693 = vadd.f32 %v621, %v688
      %s694 = scalar_lea.vmem %s1, 112
      %v695 = vld [vmem:[%s694] sm:$0xf]
      %v696 = vld [vmem:[%s694 + $0x4] sm:$0xf]
      %v697 = vld [vmem:[%s694 + $0x8] sm:$0xf]
      %v698 = vld [vmem:[%s694 + $0xc] sm:$0xf]
      %v703 = vunpack.c.l.b16 %v695
      %v704 = vunpack.c.l.b16 %v696
      %v705 = vunpack.c.l.b16 %v697
      %v706 = vunpack.c.l.b16 %v698
      %v707 = vpack.c.b16 %v704, %v703
      %v708 = vpack.c.b16 %v706, %v705
      %711 = vmatprep.subr.bf16.mxu0 0
      %712 = vmatpush1.bf16.msra.mxu0 0
      %713 = vmatprep.subr.bf16.mxu0 0
      %714 = vmatpush1.bf16.msra.mxu0 0
      %715 = vmatprep.subr.bf16.mxu0 0
      %716 = vmatpush1.bf16.msra.mxu0 0
      %717 = vmatprep.subr.bf16.mxu0 0
      %718 = vmatpush1.bf16.msra.mxu0 0
      %719 = vmatprep.subr.bf16.mxu0 0
      %720 = vmatpush1.bf16.msra.mxu0 0
      %721 = vmatprep.subr.bf16.mxu0 0
      %722 = vmatpush1.bf16.msra.mxu0 0
      %723 = vmatprep.subr.bf16.mxu0 0
      %724 = vmatpush1.bf16.msra.mxu0 %v708
      %725 = vmatprep.subr.bf16.mxu0 0
      %726 = vmatpush1.bf16.msra.mxu0 %v707
      %727 = vmatprep.subr.bf16.mxu0 0
      %728 = vmatpush2.bf16.msra.mxu0 0
      %729 = vmatprep.subr.bf16.mxu0 0
      %730 = vmatpush2.bf16.msra.mxu0 0
      %731 = vmatprep.subr.bf16.mxu0 0
      %732 = vmatpush2.bf16.msra.mxu0 0
      %733 = vmatprep.subr.bf16.mxu0 0
      %734 = vmatpush2.bf16.msra.mxu0 0
      %735 = vmatprep.subr.bf16.mxu0 0
      %736 = vmatpush2.bf16.msra.mxu0 0
      %737 = vmatprep.subr.bf16.mxu0 0
      %738 = vmatpush2.bf16.msra.mxu0 0
      %739 = vmatprep.subr.bf16.mxu0 0
      %740 = vmatpush2.bf16.msra.mxu0 0
      %741 = vmatprep.subr.bf16.mxu0 0
      %742 = vmatpush2.bf16.msra.mxu0 0
      %743 = vmatprep.mubr.bf16.mxu0 0
      %744 = vmatmul.mubr.bf16.gmra.mxu0 %v651
      %v745 = vpop.f32.mrf.mxu0
      %v746 = vadd.f32 0.0, %v745
      %v747 = vpop.f32.mrf.mxu0
      %v748 = vpop.f32.mrf.mxu0
      %v749 = vadd.f32 0.0, %v748
      %v750 = vpop.f32.mrf.mxu0
      %751 = vdwg.mxu0
      %v754 = vrot.slane %v746, 1
      %v755 = vrot.slane %v749, 1
      %v756 = vsel %vm348, %v754, %v755
      %v758 = vadd.f32 %v693, %v756
      %s759 = scalar_lea.vmem %s1, 128
      %v760 = vld [vmem:[%s759] sm:$0xf]
      %v761 = vld [vmem:[%s759 + $0x4] sm:$0xf]
      %v762 = vld [vmem:[%s759 + $0x8] sm:$0xf]
      %v763 = vld [vmem:[%s759 + $0xc] sm:$0xf]
      %v768 = vunpack.c.l.b16 %v760
      %v769 = vunpack.c.l.b16 %v761
      %v770 = vunpack.c.l.b16 %v762
      %v771 = vunpack.c.l.b16 %v763
      %v772 = vpack.c.b16 %v769, %v768
      %v773 = vpack.c.b16 %v771, %v770
      %776 = vmatprep.subr.bf16.mxu0 0
      %777 = vmatpush1.bf16.msra.mxu0 0
      %778 = vmatprep.subr.bf16.mxu0 0
      %779 = vmatpush1.bf16.msra.mxu0 0
      %780 = vmatprep.subr.bf16.mxu0 0
      %781 = vmatpush1.bf16.msra.mxu0 0
      %782 = vmatprep.subr.bf16.mxu0 0
      %783 = vmatpush1.bf16.msra.mxu0 0
      %784 = vmatprep.subr.bf16.mxu0 0
      %785 = vmatpush1.bf16.msra.mxu0 0
      %786 = vmatprep.subr.bf16.mxu0 0
      %787 = vmatpush1.bf16.msra.mxu0 0
      %788 = vmatprep.subr.bf16.mxu0 0
      %789 = vmatpush1.bf16.msra.mxu0 %v773
      %790 = vmatprep.subr.bf16.mxu0 0
      %791 = vmatpush1.bf16.msra.mxu0 %v772
      %792 = vmatprep.subr.bf16.mxu0 0
      %793 = vmatpush2.bf16.msra.mxu0 0
      %794 = vmatprep.subr.bf16.mxu0 0
      %795 = vmatpush2.bf16.msra.mxu0 0
      %796 = vmatprep.subr.bf16.mxu0 0
      %797 = vmatpush2.bf16.msra.mxu0 0
      %798 = vmatprep.subr.bf16.mxu0 0
      %799 = vmatpush2.bf16.msra.mxu0 0
      %800 = vmatprep.subr.bf16.mxu0 0
      %801 = vmatpush2.bf16.msra.mxu0 0
      %802 = vmatprep.subr.bf16.mxu0 0
      %803 = vmatpush2.bf16.msra.mxu0 0
      %804 = vmatprep.subr.bf16.mxu0 0
      %805 = vmatpush2.bf16.msra.mxu0 0
      %806 = vmatprep.subr.bf16.mxu0 0
      %807 = vmatpush2.bf16.msra.mxu0 0
      %808 = vmatprep.mubr.bf16.mxu0 0
      %809 = vmatmul.mubr.bf16.gmra.mxu0 %v651
      %v810 = vpop.f32.mrf.mxu0
      %v811 = vadd.f32 0.0, %v810
      %v812 = vpop.f32.mrf.mxu0
      %v813 = vpop.f32.mrf.mxu0
      %v814 = vadd.f32 0.0, %v813
      %v815 = vpop.f32.mrf.mxu0
      %816 = vdwg.mxu0
      %v819 = vrot.slane %v811, 2
      %v820 = vrot.slane %v814, 2
      %v821 = vsel %vm414, %v819, %v820
      %v823 = vadd.f32 %v758, %v821
      %v824 = vld [vmem:[%s2] sm:$0x1]
      %v826 = vlaneseq
      %v827 = vshrl.u32 %v826, 7
      %v828 = vsub.s32 0, %v827
      %v829 = vrot.slane %v824, %v828
      %v831 = vadd.f32 %v823, %v829
      %p832 = scmp.eq.s32.totalorder %s20, 0
      %p833 = scmp.eq.s32.totalorder %s21, 0
      %p834 = pnand %p832, %p833
      %p835 = pneg %p834
      // Predicated region
      $region33: #{depth_model_forward.17} parent=31 // pred_check
        _
      $region34: #{depth_model_forward.17} parent=31 // pred_check_branch
        %837 = sbr.rel (%p834) target = $region36
      $region35: #{depth_model_forward.17} parent=31 // pred_region
        %vm838 = vcmask 58368
        %839 = vst.msk [vmem:[%s4] sm:$0x3] %vm838, 0.0
      $region36: #{depth_model_forward.17} parent=31 // pred_fallthru
        _
      %v840 = vld [vmem:[%s4] sm:$0x1]
      %vm841 = vcmask 64512
      %v842 = vsel %vm841, %v831, 0.0
      %v843 = vrot.slane %v842, 4
      %v844 = vadd.f32 %v842, %v843
      %v845 = vrot.slane %v844, 2
      %v846 = vadd.f32 %v844, %v845
      %v847 = vrot.slane %v846, 1
      %v848 = vadd.f32 %v846, %v847
      %v849 = vadd.f32 %v840, %v848
      %vm850 = vcmask 57344
      %851 = vst.msk [vmem:[%s4] sm:$0x1] %vm850, %v849
      %v852 = vld [vmem:[%s4 + $0x1] sm:$0x1]
      %v853 = vmul.f32 %v831, %v831
      %v854 = vsel %vm841, %v853, 0.0
      %v855 = vrot.slane %v854, 4
      %v856 = vadd.f32 %v854, %v855
      %v857 = vrot.slane %v856, 2
      %v858 = vadd.f32 %v856, %v857
      %v859 = vrot.slane %v858, 1
      %v860 = vadd.f32 %v858, %v859
      %v861 = vadd.f32 %v852, %v860
      %862 = vst.msk [vmem:[%s4 + $0x1] sm:$0x1] %vm850, %v861
      %v863 = vpack.c.bf16 %v831, %v831
      %vm864 = vcmask 60416
      %865 = vst.msk [vmem:[%s215] sm:$0xf] %vm864, %v863
      %p866 = scmp.lt.s32.totalorder %s20, 1
      %s867 = scalar_select %p866, %s20, 1
      %p868 = scmp.lt.s32.totalorder %s21, 7
      %s869 = scalar_select %p868, %s21, 7
      %s870 = smul.addr %s867, 8
      %s871 = sadd.s32 %s869, %s870
      %s872 = smul.addr %s871, 4
      %s873 = scalar_lea.vmem %s3, %s872
      // Predicated region
      $region37: #{depth_model_forward.17} parent=31 // pred_check
        %p874 = pneg %p116
      $region38: #{depth_model_forward.17} parent=31 // pred_check_branch
        %876 = sbr.rel (%p874) target = $region40
      $region39: #{depth_model_forward.17} parent=31 // pred_region
        _
      $region40: #{depth_model_forward.17} parent=31 // pred_fallthru
        _
      // Predicated region
      $region41: #{depth_model_forward.17} parent=31 // pred_check
        %p877 = pneg %p137
      $region42: #{depth_model_forward.17} parent=31 // pred_check_branch
        %879 = sbr.rel (%p877) target = $region44
      $region43: #{depth_model_forward.17} parent=31 // pred_region
        _
      $region44: #{depth_model_forward.17} parent=31 // pred_fallthru
        _
      // Predicated region
      $region45: #{depth_model_forward.17} parent=31 // pred_check
        %p880 = pneg %p137
      $region46: #{depth_model_forward.17} parent=31 // pred_check_branch
        %882 = sbr.rel (%p880) target = $region48
      $region47: #{depth_model_forward.17} parent=31 // pred_region
        _
      $region48: #{depth_model_forward.17} parent=31 // pred_fallthru
        _
    $region32: #{depth_model_forward.17} parent=5 // pred_fallthru
      _
    %p883 = scmp.le.s32.totalorder 2, %s11
    // Predicated region
    $region49: #{depth_model_forward.17} parent=5 // pred_check
      %p884 = pneg %p883
    $region50: #{depth_model_forward.17} parent=5 // pred_check_branch
      %886 = sbr.rel (%p884) target = $region52
    $region51: #{depth_model_forward.17} parent=5 // pred_region
      %s887 = ssub.s32 %s11, 2
      // Predicated region
      $region53: #{depth_model_forward.17} parent=51 // pred_check
        %p888 = pneg %p122
      $region54: #{depth_model_forward.17} parent=51 // pred_check_branch
        %890 = sbr.rel (%p888) target = $region56
      $region55: #{depth_model_forward.17} parent=51 // pred_region
        %p891 = scmp.lt.s32.totalorder %s22, 1
        %s892 = scalar_select %p891, %s22, 1
        %p893 = scmp.lt.s32.totalorder %s23, 7
        %s894 = scalar_select %p893, %s23, 7
        %s895 = smul.addr %s892, 8
        %s896 = sadd.s32 %s894, %s895
        %s897 = smul.addr %s896, 4
        %s898 = scalar_lea.vmem %s3, %s897
      $region56: #{depth_model_forward.17} parent=51 // pred_fallthru
        _
    $region52: #{depth_model_forward.17} parent=5 // pred_fallthru
      _
  $region6: #{depth_model_forward.17} parent=0 // loop_footer
    %s15 = sadd.s32 1, %s11
  $region7: #{depth_model_forward.17} parent=0 // loop_footer_branch
    %10 = sbr.rel target = $region3
  $region8: #{depth_model_forward.17} parent=0 // loop_exit
    _

// kernel: depth_model_forward.19
$region0: #{depth_model_forward.19}
  #allocation0 [shape = 'u32[]', space=smem, size = 0x4, offset = 0x4, fixed_abs, tag = 'smem constant byte address 0x4 - core index']
  #allocation1 [shape = 'u32[144,128]{1,0:T(1,128)}', space=vmem, size = 0x12000, scoped, tag = 'internal scratch']
  %s0 = inlined_call_operand.vmem [shape: bf16[2,18,18,16], index: 0, kind: input, shape index: {}]
  %s1 = inlined_call_operand.vmem [shape: bf16[9,16,8], index: 1, kind: input, shape index: {}]
  %s2 = inlined_call_operand.vmem [shape: f32[1,8], index: 2, kind: input, shape index: {}]
  %s3 = inlined_call_operand.vmem [shape: f32[2,16,16,8], index: 3, kind: output, shape index: {}]
  %s4 = sld [smem:[#allocation0]]
  $region45: #{depth_model_forward.19} parent=0
    _
  %s6 = ssub.s32 1, %s4
  %s7 = scalar_select 0, %s6, %s4
  loop: start=0, step=1, limit=34
  $region2: #{depth_model_forward.19} parent=0 // loop_pre_header
    _
  $region3: #{depth_model_forward.19} parent=0 // loop_header
    %s9 = sphi 0, %s13
    %p10 = scmp.ge.s32.totalorder %s9, 34
    %s16 = sphi 0, %s28
    %s17 = sphi 0, %s24
    %s18 = sphi 0, %s16
    %s19 = sphi 0, %s17
    %s20 = sphi 0, %s18
    %s21 = sphi 0, %s19
    %s31 = sphi 0, %s33
    %s34 = sphi 0, %s31
    %s35 = sphi 0, %s34
    %s51 = sphi 0, %s35
    %s55 = sphi 0, %s55
    %s57 = sphi 0, %s55
    %s58 = sphi 0, %s57
    %s72 = sphi 0, %s58
    %s76 = sphi 0, %s76
    %s78 = sphi 0, %s76
    %s79 = sphi 0, %s78
    %s93 = sphi 0, %s79
    %s101 = sphi 0, %s103
    %s104 = sphi 0, %s101
    %s105 = sphi 0, %s104
    %s121 = sphi 0, %s105
  $region4: #{depth_model_forward.19} parent=0 // loop_header_branch
    %12 = sbr.rel (%p10) target = $region8
  $region5: #{depth_model_forward.19} parent=0 // loop_body
    %s14 = ssub.s32 %s9, 1
    %s15 = ssub.s32 %s9, 2
    %s22 = sadd.s32 1, %s17
    %p23 = scmp.ge.s32.totalorder %s22, 16
    %s24 = scalar_select %p23, 0, %s22
    %s25 = sadd.s32 1, %s16
    %s26 = scalar_select %p23, %s25, %s16
    %p27 = scmp.ge.s32.totalorder %s26, 2
    %s28 = scalar_select %p27, 0, %s26
    %s29 = ssub.s32 %s16, %s28
    %p30 = scmp.eq.s32.totalorder %s29, 0
    %s32 = sadd.s32 %s31, 1
    %s33 = scalar_select %p30, %s31, %s32
    %p36 = pneg %p30
    %p37 = scmp.eq.s32.totalorder %s9, 31
    %p38 = por %p36, %p37
    %p39 = scmp.ne.s32.totalorder %s31, %s34
    %p40 = scmp.eq.s32.totalorder %s9, 0
    %p41 = por %p39, %p40
    %p42 = scmp.ne.s32.totalorder %s31, %s34
    %p43 = scmp.eq.s32.totalorder %s14, 31
    %p44 = por %p42, %p43
    %p45 = scmp.ne.s32.totalorder %s34, %s35
    %p46 = scmp.eq.s32.totalorder %s14, 0
    %p47 = por %p45, %p46
    %p48 = scmp.ne.s32.totalorder %s34, %s35
    %p49 = scmp.eq.s32.totalorder %s15, 31
    %p50 = por %p48, %p49
    %p52 = scmp.ne.s32.totalorder %s35, %s51
    %p53 = scmp.eq.s32.totalorder %s15, 0
    %p54 = por %p52, %p53
    %s56 = sadd.s32 %s55, 1
    %p59 = scmp.eq.s32.totalorder %s9, 31
    %p60 = scmp.ne.s32.totalorder %s55, %s57
    %p61 = scmp.eq.s32.totalorder %s9, 0
    %p62 = por %p60, %p61
    %p63 = scmp.ne.s32.totalorder %s55, %s57
    %p64 = scmp.eq.s32.totalorder %s14, 31
    %p65 = por %p63, %p64
    %p66 = scmp.ne.s32.totalorder %s57, %s58
    %p67 = scmp.eq.s32.totalorder %s14, 0
    %p68 = por %p66, %p67
    %p69 = scmp.ne.s32.totalorder %s57, %s58
    %p70 = scmp.eq.s32.totalorder %s15, 31
    %p71 = por %p69, %p70
    %p73 = scmp.ne.s32.totalorder %s58, %s72
    %p74 = scmp.eq.s32.totalorder %s15, 0
    %p75 = por %p73, %p74
    %s77 = sadd.s32 %s76, 1
    %p80 = scmp.eq.s32.totalorder %s9, 31
    %p81 = scmp.ne.s32.totalorder %s76, %s78
    %p82 = scmp.eq.s32.totalorder %s9, 0
    %p83 = por %p81, %p82
    %p84 = scmp.ne.s32.totalorder %s76, %s78
    %p85 = scmp.eq.s32.totalorder %s14, 31
    %p86 = por %p84, %p85
    %p87 = scmp.ne.s32.totalorder %s78, %s79
    %p88 = scmp.eq.s32.totalorder %s14, 0
    %p89 = por %p87, %p88
    %p90 = scmp.ne.s32.totalorder %s78, %s79
    %p91 = scmp.eq.s32.totalorder %s15, 31
    %p92 = por %p90, %p91
    %p94 = scmp.ne.s32.totalorder %s79, %s93
    %p95 = scmp.eq.s32.totalorder %s15, 0
    %p96 = por %p94, %p95
    %s97 = ssub.s32 %s16, %s28
    %s98 = ssub.s32 %s17, %s24
    %s99 = sor.u32 %s97, %s98
    %p100 = scmp.eq.s32.totalorder %s99, 0
    %s102 = sadd.s32 %s101, 1
    %s103 = scalar_select %p100, %s101, %s102
    %p106 = pneg %p100
    %p107 = scmp.eq.s32.totalorder %s9, 31
    %p108 = por %p106, %p107
    %p109 = scmp.ne.s32.totalorder %s101, %s104
    %p110 = scmp.eq.s32.totalorder %s9, 0
    %p111 = por %p109, %p110
    %p112 = scmp.ne.s32.totalorder %s101, %s104
    %p113 = scmp.eq.s32.totalorder %s14, 31
    %p114 = por %p112, %p113
    %p115 = scmp.ne.s32.totalorder %s104, %s105
    %p116 = scmp.eq.s32.totalorder %s14, 0
    %p117 = por %p115, %p116
    %p118 = scmp.ne.s32.totalorder %s104, %s105
    %p119 = scmp.eq.s32.totalorder %s15, 31
    %p120 = por %p118, %p119
    %p122 = scmp.ne.s32.totalorder %s105, %s121
    %p123 = scmp.eq.s32.totalorder %s15, 0
    %p124 = por %p122, %p123
    %p125 = scmp.le.s32.totalorder 1, %s9
    %p126 = scmp.lt.s32.totalorder %s9, 33
    %p127 = pnand %p125, %p126
    %p128 = pneg %p127
    // Predicated region
    $region9: #{depth_model_forward.19} parent=5 // pred_check
      _
    $region10: #{depth_model_forward.19} parent=5 // pred_check_branch
      %130 = sbr.rel (%p127) target = $region12
    $region11: #{depth_model_forward.19} parent=5 // pred_region
      %s131 = ssub.s32 %s9, 1
      // Predicated region
      $region13: #{depth_model_forward.19} parent=11 // pred_check
        %p132 = pneg %p68
      $region14: #{depth_model_forward.19} parent=11 // pred_check_branch
        %134 = sbr.rel (%p132) target = $region16
      $region15: #{depth_model_forward.19} parent=11 // pred_region
        _
      $region16: #{depth_model_forward.19} parent=11 // pred_fallthru
        _
      // Predicated region
      $region17: #{depth_model_forward.19} parent=11 // pred_check
        %p135 = pneg %p89
      $region18: #{depth_model_forward.19} parent=11 // pred_check_branch
        %137 = sbr.rel (%p135) target = $region20
      $region19: #{depth_model_forward.19} parent=11 // pred_region
        _
      $region20: #{depth_model_forward.19} parent=11 // pred_fallthru
        _
    $region12: #{depth_model_forward.19} parent=5 // pred_fallthru
      _
    %p138 = scmp.lt.s32.totalorder %s9, 32
    // Predicated region
    $region21: #{depth_model_forward.19} parent=5 // pred_check
      %p139 = pneg %p138
    $region22: #{depth_model_forward.19} parent=5 // pred_check_branch
      %141 = sbr.rel (%p139) target = $region24
    $region23: #{depth_model_forward.19} parent=5 // pred_region
      // Predicated region
      $region25: #{depth_model_forward.19} parent=23 // pred_check
        %p142 = pneg %p41
      $region26: #{depth_model_forward.19} parent=23 // pred_check_branch
        %144 = sbr.rel (%p142) target = $region28
      $region27: #{depth_model_forward.19} parent=23 // pred_region
        %p145 = scmp.lt.s32.totalorder %s16, 1
        %s146 = scalar_select %p145, %s16, 1
        %s147 = smul.addr %s146, 54
        %s148 = smul.addr %s147, 4
        %s149 = scalar_lea.vmem %s0, %s148
      $region28: #{depth_model_forward.19} parent=23 // pred_fallthru
        _
    $region24: #{depth_model_forward.19} parent=5 // pred_fallthru
      _
    %p150 = scmp.le.s32.totalorder 1, %s9
    %p151 = scmp.lt.s32.totalorder %s9, 33
    %p152 = pnand %p150, %p151
    %p153 = pneg %p152
    // Predicated region
    $region29: #{depth_model_forward.19} parent=5 // pred_check
      _
    $region30: #{depth_model_forward.19} parent=5 // pred_check_branch
      %155 = sbr.rel (%p152) target = $region32
    $region31: #{depth_model_forward.19} parent=5 // pred_region
      %s156 = ssub.s32 %s9, 1
      %p157 = scmp.lt.s32.totalorder %s18, 1
      %s158 = scalar_select %p157, %s18, 1
      %s159 = smul.addr %s158, 54
      %s160 = smul.addr %s159, 4
      %s161 = scalar_lea.vmem %s0, %s160
      %p162 = pneg %p47
      %p163 = pneg %p44
      %p164 = pneg %p68
      %p165 = pneg %p65
      %p166 = pneg %p89
      %p167 = pneg %p86
      %p168 = pneg %p117
      %p169 = pneg %p114
      %p170 = scmp.lt.s32.totalorder %s18, 1
      %s171 = scalar_select %p170, %s18, 1
      %p172 = scmp.lt.s32.totalorder %s19, 15
      %s173 = scalar_select %p172, %s19, 15
      %s174 = smul.addr %s173, 2
      %s175 = smul.addr %s171, 32
      %s176 = sadd.s32 %s174, %s175
      %s177 = smul.addr %s176, 8
      %s178 = scalar_lea.vmem %s3, %s177
      %p179 = scmp.lt.s32.totalorder %s18, 1
      %s180 = scalar_select %p179, %s18, 1
      %s181 = smul.addr %s180, 54
      %s182 = smul.addr %s181, 4
      %s183 = scalar_lea.vmem %s0, %s182
      %p184 = scmp.lt.s32.totalorder %s18, 1
      %s185 = scalar_select %p184, %s18, 1
      %p186 = scmp.lt.s32.totalorder %s19, 15
      %s187 = scalar_select %p186, %s19, 15
      %s188 = smul.addr %s187, 2
      %s189 = smul.addr %s185, 32
      %s190 = sadd.s32 %s188, %s189
      %s191 = smul.addr %s190, 8
      %s192 = scalar_lea.vmem %s3, %s191
      %s194 = smul.u32 %s19, 3
      %s195 = smul.addr %s194, 4
      %s196 = scalar_lea.vmem %s183, %s195
      %v197 = vld [vmem:[%s196] sm:$0xf]
      %v198 = vld [vmem:[%s196 + $0x4] sm:$0xf]
      %v199 = vld [vmem:[%s196 + $0x8] sm:$0x1]
      %v200 = vld [vmem:[%s1] sm:$0xf]
      %v201 = vld [vmem:[%s1 + $0x4] sm:$0xf]
      %v205 = vunpack.c.l.b16 %v197
      %v206 = vunpack.c.l.b16 %v198
      %v207 = vunpack.c.l.b16 %v199
      %v208 = vpack.c.b16 %v206, %v205
      %v209 = vpack.c.b16 %v207, %v207
      %v212 = vunpack.c.l.b16 %v200
      %v213 = vunpack.c.l.b16 %v201
      %v214 = vpack.c.b16 %v213, %v212
      %vm216 = vcmask 130048
      %v218 = vsel %vm216, %v208, 0
      %v221 = vsel %vm216, %v209, 0
      %223 = vmatprep.subr.bf16.mxu0 0
      %224 = vmatpush1.bf16.msra.mxu0 0
      %225 = vmatprep.subr.bf16.mxu0 0
      %226 = vmatpush1.bf16.msra.mxu0 0
      %227 = vmatprep.subr.bf16.mxu0 0
      %228 = vmatpush1.bf16.msra.mxu0 0
      %229 = vmatprep.subr.bf16.mxu0 0
      %230 = vmatpush1.bf16.msra.mxu0 0
      %231 = vmatprep.subr.bf16.mxu0 0
      %232 = vmatpush1.bf16.msra.mxu0 0
      %233 = vmatprep.subr.bf16.mxu0 0
      %234 = vmatpush1.bf16.msra.mxu0 0
      %235 = vmatprep.subr.bf16.mxu0 0
      %236 = vmatpush1.bf16.msra.mxu0 0
      %237 = vmatprep.subr.bf16.mxu0 0
      %238 = vmatpush1.bf16.msra.mxu0 %v214
      %239 = vmatprep.subr.bf16.mxu0 0
      %240 = vmatpush2.bf16.msra.mxu0 0
      %241 = vmatprep.subr.bf16.mxu0 0
      %242 = vmatpush2.bf16.msra.mxu0 0
      %243 = vmatprep.subr.bf16.mxu0 0
      %244 = vmatpush2.bf16.msra.mxu0 0
      %245 = vmatprep.subr.bf16.mxu0 0
      %246 = vmatpush2.bf16.msra.mxu0 0
      %247 = vmatprep.subr.bf16.mxu0 0
      %248 = vmatpush2.bf16.msra.mxu0 0
      %249 = vmatprep.subr.bf16.mxu0 0
      %250 = vmatpush2.bf16.msra.mxu0 0
      %251 = vmatprep.subr.bf16.mxu0 0
      %252 = vmatpush2.bf16.msra.mxu0 0
      %253 = vmatprep.subr.bf16.mxu0 0
      %254 = vmatpush2.bf16.msra.mxu0 0
      %255 = vmatprep.mubr.bf16.mxu0 0
      %256 = vmatmul.mubr.bf16.gmra.mxu0 %v218
      %v257 = vpop.f32.mrf.mxu0
      %v258 = vadd.f32 0.0, %v257
      %v259 = vpop.f32.mrf.mxu0
      %v260 = vpop.f32.mrf.mxu0
      %v261 = vadd.f32 0.0, %v260
      %v262 = vpop.f32.mrf.mxu0
      %263 = vmatprep.mubr.bf16.mxu0 0
      %264 = vmatmul.mubr.bf16.gmra.mxu0 %v221
      %v265 = vpop.f32.mrf.mxu0
      %v266 = vpop.f32.mrf.mxu0
      %v267 = vpop.f32.mrf.mxu0
      %v268 = vpop.f32.mrf.mxu0
      %269 = vdwg.mxu0
      %v270 = vadd.f32 %v258, 0.0
      %v271 = vadd.f32 %v261, 0.0
      %s272 = scalar_lea.vmem %s1, 8
      %v273 = vld [vmem:[%s272] sm:$0xf]
      %v274 = vld [vmem:[%s272 + $0x4] sm:$0xf]
      %v277 = vunpack.c.l.b16 %v273
      %v278 = vunpack.c.l.b16 %v274
      %v279 = vpack.c.b16 %v278, %v277
      %281 = vmatprep.subr.bf16.mxu0 0
      %282 = vmatpush1.bf16.msra.mxu0 0
      %283 = vmatprep.subr.bf16.mxu0 0
      %284 = vmatpush1.bf16.msra.mxu0 0
      %285 = vmatprep.subr.bf16.mxu0 0
      %286 = vmatpush1.bf16.msra.mxu0 0
      %287 = vmatprep.subr.bf16.mxu0 0
      %288 = vmatpush1.bf16.msra.mxu0 0
      %289 = vmatprep.subr.bf16.mxu0 0
      %290 = vmatpush1.bf16.msra.mxu0 0
      %291 = vmatprep.subr.bf16.mxu0 0
      %292 = vmatpush1.bf16.msra.mxu0 0
      %293 = vmatprep.subr.bf16.mxu0 0
      %294 = vmatpush1.bf16.msra.mxu0 0
      %295 = vmatprep.subr.bf16.mxu0 0
      %296 = vmatpush1.bf16.msra.mxu0 %v279
      %297 = vmatprep.subr.bf16.mxu0 0
      %298 = vmatpush2.bf16.msra.mxu0 0
      %299 = vmatprep.subr.bf16.mxu0 0
      %300 = vmatpush2.bf16.msra.mxu0 0
      %301 = vmatprep.subr.bf16.mxu0 0
      %302 = vmatpush2.bf16.msra.mxu0 0
      %303 = vmatprep.subr.bf16.mxu0 0
      %304 = vmatpush2.bf16.msra.mxu0 0
      %305 = vmatprep.subr.bf16.mxu0 0
      %306 = vmatpush2.bf16.msra.mxu0 0
      %307 = vmatprep.subr.bf16.mxu0 0
      %308 = vmatpush2.bf16.msra.mxu0 0
      %309 = vmatprep.subr.bf16.mxu0 0
      %310 = vmatpush2.bf16.msra.mxu0 0
      %311 = vmatprep.subr.bf16.mxu0 0
      %312 = vmatpush2.bf16.msra.mxu0 0
      %313 = vmatprep.mubr.bf16.mxu0 0
      %314 = vmatmul.mubr.bf16.gmra.mxu0 %v218
      %v315 = vpop.f32.mrf.mxu0
      %v316 = vadd.f32 0.0, %v315
      %v317 = vpop.f32.mrf.mxu0
      %v318 = vpop.f32.mrf.mxu0
      %v319 = vadd.f32 0.0, %v318
      %v320 = vpop.f32.mrf.mxu0
      %321 = vmatprep.mubr.bf16.mxu0 0
      %322 = vmatmul.mubr.bf16.gmra.mxu0 %v221
      %v323 = vpop.f32.mrf.mxu0
      %v324 = vadd.f32 0.0, %v323
      %v325 = vpop.f32.mrf.mxu0
      %v326 = vpop.f32.mrf.mxu0
      %v327 = vpop.f32.mrf.mxu0
      %328 = vdwg.mxu0
      %vm332 = vcmask 1046528
      %v333 = vrot.slane %v316, 1
      %v334 = vrot.slane %v319, 1
      %v335 = vsel %vm332, %v333, %v334
      %v336 = vrot.slane %v324, 1
      %v337 = vsel %vm332, %v334, %v336
      %v340 = vadd.f32 %v270, %v335
      %v341 = vadd.f32 %v271, %v337
      %s342 = scalar_lea.vmem %s1, 16
      %v343 = vld [vmem:[%s342] sm:$0xf]
      %v344 = vld [vmem:[%s342 + $0x4] sm:$0xf]
      %v347 = vunpack.c.l.b16 %v343
      %v348 = vunpack.c.l.b16 %v344
      %v349 = vpack.c.b16 %v348, %v347
      %351 = vmatprep.subr.bf16.mxu0 0
      %352 = vmatpush1.bf16.msra.mxu0 0
      %353 = vmatprep.subr.bf16.mxu0 0
      %354 = vmatpush1.bf16.msra.mxu0 0
      %355 = vmatprep.subr.bf16.mxu0 0
      %356 = vmatpush1.bf16.msra.mxu0 0
      %357 = vmatprep.subr.bf16.mxu0 0
      %358 = vmatpush1.bf16.msra.mxu0 0
      %359 = vmatprep.subr.bf16.mxu0 0
      %360 = vmatpush1.bf16.msra.mxu0 0
      %361 = vmatprep.subr.bf16.mxu0 0
      %362 = vmatpush1.bf16.msra.mxu0 0
      %363 = vmatprep.subr.bf16.mxu0 0
      %364 = vmatpush1.bf16.msra.mxu0 0
      %365 = vmatprep.subr.bf16.mxu0 0
      %366 = vmatpush1.bf16.msra.mxu0 %v349
      %367 = vmatprep.subr.bf16.mxu0 0
      %368 = vmatpush2.bf16.msra.mxu0 0
      %369 = vmatprep.subr.bf16.mxu0 0
      %370 = vmatpush2.bf16.msra.mxu0 0
      %371 = vmatprep.subr.bf16.mxu0 0
      %372 = vmatpush2.bf16.msra.mxu0 0
      %373 = vmatprep.subr.bf16.mxu0 0
      %374 = vmatpush2.bf16.msra.mxu0 0
      %375 = vmatprep.subr.bf16.mxu0 0
      %376 = vmatpush2.bf16.msra.mxu0 0
      %377 = vmatprep.subr.bf16.mxu0 0
      %378 = vmatpush2.bf16.msra.mxu0 0
      %379 = vmatprep.subr.bf16.mxu0 0
      %380 = vmatpush2.bf16.msra.mxu0 0
      %381 = vmatprep.subr.bf16.mxu0 0
      %382 = vmatpush2.bf16.msra.mxu0 0
      %383 = vmatprep.mubr.bf16.mxu0 0
      %384 = vmatmul.mubr.bf16.gmra.mxu0 %v218
      %v385 = vpop.f32.mrf.mxu0
      %v386 = vadd.f32 0.0, %v385
      %v387 = vpop.f32.mrf.mxu0
      %v388 = vpop.f32.mrf.mxu0
      %v389 = vadd.f32 0.0, %v388
      %v390 = vpop.f32.mrf.mxu0
      %391 = vmatprep.mubr.bf16.mxu0 0
      %392 = vmatmul.mubr.bf16.gmra.mxu0 %v221
      %v393 = vpop.f32.mrf.mxu0
      %v394 = vadd.f32 0.0, %v393
      %v395 = vpop.f32.mrf.mxu0
      %v396 = vpop.f32.mrf.mxu0
      %v397 = vpop.f32.mrf.mxu0
      %398 = vdwg.mxu0
      %vm402 = vcmask 1045504
      %v403 = vrot.slane %v386, 2
      %v404 = vrot.slane %v389, 2
      %v405 = vsel %vm402, %v403, %v404
      %v406 = vrot.slane %v394, 2
      %v407 = vsel %vm402, %v404, %v406
      %v410 = vadd.f32 %v340, %v405
      %v411 = vadd.f32 %v341, %v407
      %s412 = sadd.s32 %s19, 1
      %s413 = smul.u32 %s412, 3
      %s414 = smul.addr %s413, 4
      %s415 = scalar_lea.vmem %s183, %s414
      %v416 = vld [vmem:[%s415] sm:$0xf]
      %v417 = vld [vmem:[%s415 + $0x4] sm:$0xf]
      %v418 = vld [vmem:[%s415 + $0x8] sm:$0x1]
      %s419 = scalar_lea.vmem %s1, 24
      %v420 = vld [vmem:[%s419] sm:$0xf]
      %v421 = vld [vmem:[%s419 + $0x4] sm:$0xf]
      %v425 = vunpack.c.l.b16 %v416
      %v426 = vunpack.c.l.b16 %v417
      %v427 = vunpack.c.l.b16 %v418
      %v428 = vpack.c.b16 %v426, %v425
      %v429 = vpack.c.b16 %v427, %v427
      %v432 = vunpack.c.l.b16 %v420
      %v433 = vunpack.c.l.b16 %v421
      %v434 = vpack.c.b16 %v433, %v432
      %v437 = vsel %vm216, %v428, 0
      %v440 = vsel %vm216, %v429, 0
      %442 = vmatprep.subr.bf16.mxu0 0
      %443 = vmatpush1.bf16.msra.mxu0 0
      %444 = vmatprep.subr.bf16.mxu0 0
      %445 = vmatpush1.bf16.msra.mxu0 0
      %446 = vmatprep.subr.bf16.mxu0 0
      %447 = vmatpush1.bf16.msra.mxu0 0
      %448 = vmatprep.subr.bf16.mxu0 0
      %449 = vmatpush1.bf16.msra.mxu0 0
      %450 = vmatprep.subr.bf16.mxu0 0
      %451 = vmatpush1.bf16.msra.mxu0 0
      %452 = vmatprep.subr.bf16.mxu0 0
      %453 = vmatpush1.bf16.msra.mxu0 0
      %454 = vmatprep.subr.bf16.mxu0 0
      %455 = vmatpush1.bf16.msra.mxu0 0
      %456 = vmatprep.subr.bf16.mxu0 0
      %457 = vmatpush1.bf16.msra.mxu0 %v434
      %458 = vmatprep.subr.bf16.mxu0 0
      %459 = vmatpush2.bf16.msra.mxu0 0
      %460 = vmatprep.subr.bf16.mxu0 0
      %461 = vmatpush2.bf16.msra.mxu0 0
      %462 = vmatprep.subr.bf16.mxu0 0
      %463 = vmatpush2.bf16.msra.mxu0 0
      %464 = vmatprep.subr.bf16.mxu0 0
      %465 = vmatpush2.bf16.msra.mxu0 0
      %466 = vmatprep.subr.bf16.mxu0 0
      %467 = vmatpush2.bf16.msra.mxu0 0
      %468 = vmatprep.subr.bf16.mxu0 0
      %469 = vmatpush2.bf16.msra.mxu0 0
      %470 = vmatprep.subr.bf16.mxu0 0
      %471 = vmatpush2.bf16.msra.mxu0 0
      %472 = vmatprep.subr.bf16.mxu0 0
      %473 = vmatpush2.bf16.msra.mxu0 0
      %474 = vmatprep.mubr.bf16.mxu0 0
      %475 = vmatmul.mubr.bf16.gmra.mxu0 %v437
      %v476 = vpop.f32.mrf.mxu0
      %v477 = vadd.f32 0.0, %v476
      %v478 = vpop.f32.mrf.mxu0
      %v479 = vpop.f32.mrf.mxu0
      %v480 = vadd.f32 0.0, %v479
      %v481 = vpop.f32.mrf.mxu0
      %482 = vmatprep.mubr.bf16.mxu0 0
      %483 = vmatmul.mubr.bf16.gmra.mxu0 %v440
      %v484 = vpop.f32.mrf.mxu0
      %v485 = vpop.f32.mrf.mxu0
      %v486 = vpop.f32.mrf.mxu0
      %v487 = vpop.f32.mrf.mxu0
      %488 = vdwg.mxu0
      %v489 = vadd.f32 %v410, %v477
      %v490 = vadd.f32 %v411, %v480
      %s491 = scalar_lea.vmem %s1, 32
      %v492 = vld [vmem:[%s491] sm:$0xf]
      %v493 = vld [vmem:[%s491 + $0x4] sm:$0xf]
      %v496 = vunpack.c.l.b16 %v492
      %v497 = vunpack.c.l.b16 %v493
      %v498 = vpack.c.b16 %v497, %v496
      %500 = vmatprep.subr.bf16.mxu0 0
      %501 = vmatpush1.bf16.msra.mxu0 0
      %502 = vmatprep.subr.bf16.mxu0 0
      %503 = vmatpush1.bf16.msra.mxu0 0
      %504 = vmatprep.subr.bf16.mxu0 0
      %505 = vmatpush1.bf16.msra.mxu0 0
      %506 = vmatprep.subr.bf16.mxu0 0
      %507 = vmatpush1.bf16.msra.mxu0 0
      %508 = vmatprep.subr.bf16.mxu0 0
      %509 = vmatpush1.bf16.msra.mxu0 0
      %510 = vmatprep.subr.bf16.mxu0 0
      %511 = vmatpush1.bf16.msra.mxu0 0
      %512 = vmatprep.subr.bf16.mxu0 0
      %513 = vmatpush1.bf16.msra.mxu0 0
      %514 = vmatprep.subr.bf16.mxu0 0
      %515 = vmatpush1.bf16.msra.mxu0 %v498
      %516 = vmatprep.subr.bf16.mxu0 0
      %517 = vmatpush2.bf16.msra.mxu0 0
      %518 = vmatprep.subr.bf16.mxu0 0
      %519 = vmatpush2.bf16.msra.mxu0 0
      %520 = vmatprep.subr.bf16.mxu0 0
      %521 = vmatpush2.bf16.msra.mxu0 0
      %522 = vmatprep.subr.bf16.mxu0 0
      %523 = vmatpush2.bf16.msra.mxu0 0
      %524 = vmatprep.subr.bf16.mxu0 0
      %525 = vmatpush2.bf16.msra.mxu0 0
      %526 = vmatprep.subr.bf16.mxu0 0
      %527 = vmatpush2.bf16.msra.mxu0 0
      %528 = vmatprep.subr.bf16.mxu0 0
      %529 = vmatpush2.bf16.msra.mxu0 0
      %530 = vmatprep.subr.bf16.mxu0 0
      %531 = vmatpush2.bf16.msra.mxu0 0
      %532 = vmatprep.mubr.bf16.mxu0 0
      %533 = vmatmul.mubr.bf16.gmra.mxu0 %v437
      %v534 = vpop.f32.mrf.mxu0
      %v535 = vadd.f32 0.0, %v534
      %v536 = vpop.f32.mrf.mxu0
      %v537 = vpop.f32.mrf.mxu0
      %v538 = vadd.f32 0.0, %v537
      %v539 = vpop.f32.mrf.mxu0
      %540 = vmatprep.mubr.bf16.mxu0 0
      %541 = vmatmul.mubr.bf16.gmra.mxu0 %v440
      %v542 = vpop.f32.mrf.mxu0
      %v543 = vadd.f32 0.0, %v542
      %v544 = vpop.f32.mrf.mxu0
      %v545 = vpop.f32.mrf.mxu0
      %v546 = vpop.f32.mrf.mxu0
      %547 = vdwg.mxu0
      %v551 = vrot.slane %v535, 1
      %v552 = vrot.slane %v538, 1
      %v553 = vsel %vm332, %v551, %v552
      %v554 = vrot.slane %v543, 1
      %v555 = vsel %vm332, %v552, %v554
      %v558 = vadd.f32 %v489, %v553
      %v559 = vadd.f32 %v490, %v555
      %s560 = scalar_lea.vmem %s1, 40
      %v561 = vld [vmem:[%s560] sm:$0xf]
      %v562 = vld [vmem:[%s560 + $0x4] sm:$0xf]
      %v565 = vunpack.c.l.b16 %v561
      %v566 = vunpack.c.l.b16 %v562
      %v567 = vpack.c.b16 %v566, %v565
      %569 = vmatprep.subr.bf16.mxu0 0
      %570 = vmatpush1.bf16.msra.mxu0 0
      %571 = vmatprep.subr.bf16.mxu0 0
      %572 = vmatpush1.bf16.msra.mxu0 0
      %573 = vmatprep.subr.bf16.mxu0 0
      %574 = vmatpush1.bf16.msra.mxu0 0
      %575 = vmatprep.subr.bf16.mxu0 0
      %576 = vmatpush1.bf16.msra.mxu0 0
      %577 = vmatprep.subr.bf16.mxu0 0
      %578 = vmatpush1.bf16.msra.mxu0 0
      %579 = vmatprep.subr.bf16.mxu0 0
      %580 = vmatpush1.bf16.msra.mxu0 0
      %581 = vmatprep.subr.bf16.mxu0 0
      %582 = vmatpush1.bf16.msra.mxu0 0
      %583 = vmatprep.subr.bf16.mxu0 0
      %584 = vmatpush1.bf16.msra.mxu0 %v567
      %585 = vmatprep.subr.bf16.mxu0 0
      %586 = vmatpush2.bf16.msra.mxu0 0
      %587 = vmatprep.subr.bf16.mxu0 0
      %588 = vmatpush2.bf16.msra.mxu0 0
      %589 = vmatprep.subr.bf16.mxu0 0
      %590 = vmatpush2.bf16.msra.mxu0 0
      %591 = vmatprep.subr.bf16.mxu0 0
      %592 = vmatpush2.bf16.msra.mxu0 0
      %593 = vmatprep.subr.bf16.mxu0 0
      %594 = vmatpush2.bf16.msra.mxu0 0
      %595 = vmatprep.subr.bf16.mxu0 0
      %596 = vmatpush2.bf16.msra.mxu0 0
      %597 = vmatprep.subr.bf16.mxu0 0
      %598 = vmatpush2.bf16.msra.mxu0 0
      %599 = vmatprep.subr.bf16.mxu0 0
      %600 = vmatpush2.bf16.msra.mxu0 0
      %601 = vmatprep.mubr.bf16.mxu0 0
      %602 = vmatmul.mubr.bf16.gmra.mxu0 %v437
      %v603 = vpop.f32.mrf.mxu0
      %v604 = vadd.f32 0.0, %v603
      %v605 = vpop.f32.mrf.mxu0
      %v606 = vpop.f32.mrf.mxu0
      %v607 = vadd.f32 0.0, %v606
      %v608 = vpop.f32.mrf.mxu0
      %609 = vmatprep.mubr.bf16.mxu0 0
      %610 = vmatmul.mubr.bf16.gmra.mxu0 %v440
      %v611 = vpop.f32.mrf.mxu0
      %v612 = vadd.f32 0.0, %v611
      %v613 = vpop.f32.mrf.mxu0
      %v614 = vpop.f32.mrf.mxu0
      %v615 = vpop.f32.mrf.mxu0
      %616 = vdwg.mxu0
      %v620 = vrot.slane %v604, 2
      %v621 = vrot.slane %v607, 2
      %v622 = vsel %vm402, %v620, %v621
      %v623 = vrot.slane %v612, 2
      %v624 = vsel %vm402, %v621, %v623
      %v627 = vadd.f32 %v558, %v622
      %v628 = vadd.f32 %v559, %v624
      %s629 = sadd.s32 %s19, 2
      %s630 = smul.u32 %s629, 3
      %s631 = smul.addr %s630, 4
      %s632 = scalar_lea.vmem %s183, %s631
      %v633 = vld [vmem:[%s632] sm:$0xf]
      %v634 = vld [vmem:[%s632 + $0x4] sm:$0xf]
      %v635 = vld [vmem:[%s632 + $0x8] sm:$0x1]
      %s636 = scalar_lea.vmem %s1, 48
      %v637 = vld [vmem:[%s636] sm:$0xf]
      %v638 = vld [vmem:[%s636 + $0x4] sm:$0xf]
      %v642 = vunpack.c.l.b16 %v633
      %v643 = vunpack.c.l.b16 %v634
      %v644 = vunpack.c.l.b16 %v635
      %v645 = vpack.c.b16 %v643, %v642
      %v646 = vpack.c.b16 %v644, %v644
      %v649 = vunpack.c.l.b16 %v637
      %v650 = vunpack.c.l.b16 %v638
      %v651 = vpack.c.b16 %v650, %v649
      %v654 = vsel %vm216, %v645, 0
      %v657 = vsel %vm216, %v646, 0
      %659 = vmatprep.subr.bf16.mxu0 0
      %660 = vmatpush1.bf16.msra.mxu0 0
      %661 = vmatprep.subr.bf16.mxu0 0
      %662 = vmatpush1.bf16.msra.mxu0 0
      %663 = vmatprep.subr.bf16.mxu0 0
      %664 = vmatpush1.bf16.msra.mxu0 0
      %665 = vmatprep.subr.bf16.mxu0 0
      %666 = vmatpush1.bf16.msra.mxu0 0
      %667 = vmatprep.subr.bf16.mxu0 0
      %668 = vmatpush1.bf16.msra.mxu0 0
      %669 = vmatprep.subr.bf16.mxu0 0
      %670 = vmatpush1.bf16.msra.mxu0 0
      %671 = vmatprep.subr.bf16.mxu0 0
      %672 = vmatpush1.bf16.msra.mxu0 0
      %673 = vmatprep.subr.bf16.mxu0 0
      %674 = vmatpush1.bf16.msra.mxu0 %v651
      %675 = vmatprep.subr.bf16.mxu0 0
      %676 = vmatpush2.bf16.msra.mxu0 0
      %677 = vmatprep.subr.bf16.mxu0 0
      %678 = vmatpush2.bf16.msra.mxu0 0
      %679 = vmatprep.subr.bf16.mxu0 0
      %680 = vmatpush2.bf16.msra.mxu0 0
      %681 = vmatprep.subr.bf16.mxu0 0
      %682 = vmatpush2.bf16.msra.mxu0 0
      %683 = vmatprep.subr.bf16.mxu0 0
      %684 = vmatpush2.bf16.msra.mxu0 0
      %685 = vmatprep.subr.bf16.mxu0 0
      %686 = vmatpush2.bf16.msra.mxu0 0
      %687 = vmatprep.subr.bf16.mxu0 0
      %688 = vmatpush2.bf16.msra.mxu0 0
      %689 = vmatprep.subr.bf16.mxu0 0
      %690 = vmatpush2.bf16.msra.mxu0 0
      %691 = vmatprep.mubr.bf16.mxu0 0
      %692 = vmatmul.mubr.bf16.gmra.mxu0 %v654
      %v693 = vpop.f32.mrf.mxu0
      %v694 = vadd.f32 0.0, %v693
      %v695 = vpop.f32.mrf.mxu0
      %v696 = vpop.f32.mrf.mxu0
      %v697 = vadd.f32 0.0, %v696
      %v698 = vpop.f32.mrf.mxu0
      %699 = vmatprep.mubr.bf16.mxu0 0
      %700 = vmatmul.mubr.bf16.gmra.mxu0 %v657
      %v701 = vpop.f32.mrf.mxu0
      %v702 = vpop.f32.mrf.mxu0
      %v703 = vpop.f32.mrf.mxu0
      %v704 = vpop.f32.mrf.mxu0
      %705 = vdwg.mxu0
      %v706 = vadd.f32 %v627, %v694
      %v707 = vadd.f32 %v628, %v697
      %s708 = scalar_lea.vmem %s1, 56
      %v709 = vld [vmem:[%s708] sm:$0xf]
      %v710 = vld [vmem:[%s708 + $0x4] sm:$0xf]
      %v713 = vunpack.c.l.b16 %v709
      %v714 = vunpack.c.l.b16 %v710
      %v715 = vpack.c.b16 %v714, %v713
      %717 = vmatprep.subr.bf16.mxu0 0
      %718 = vmatpush1.bf16.msra.mxu0 0
      %719 = vmatprep.subr.bf16.mxu0 0
      %720 = vmatpush1.bf16.msra.mxu0 0
      %721 = vmatprep.subr.bf16.mxu0 0
      %722 = vmatpush1.bf16.msra.mxu0 0
      %723 = vmatprep.subr.bf16.mxu0 0
      %724 = vmatpush1.bf16.msra.mxu0 0
      %725 = vmatprep.subr.bf16.mxu0 0
      %726 = vmatpush1.bf16.msra.mxu0 0
      %727 = vmatprep.subr.bf16.mxu0 0
      %728 = vmatpush1.bf16.msra.mxu0 0
      %729 = vmatprep.subr.bf16.mxu0 0
      %730 = vmatpush1.bf16.msra.mxu0 0
      %731 = vmatprep.subr.bf16.mxu0 0
      %732 = vmatpush1.bf16.msra.mxu0 %v715
      %733 = vmatprep.subr.bf16.mxu0 0
      %734 = vmatpush2.bf16.msra.mxu0 0
      %735 = vmatprep.subr.bf16.mxu0 0
      %736 = vmatpush2.bf16.msra.mxu0 0
      %737 = vmatprep.subr.bf16.mxu0 0
      %738 = vmatpush2.bf16.msra.mxu0 0
      %739 = vmatprep.subr.bf16.mxu0 0
      %740 = vmatpush2.bf16.msra.mxu0 0
      %741 = vmatprep.subr.bf16.mxu0 0
      %742 = vmatpush2.bf16.msra.mxu0 0
      %743 = vmatprep.subr.bf16.mxu0 0
      %744 = vmatpush2.bf16.msra.mxu0 0
      %745 = vmatprep.subr.bf16.mxu0 0
      %746 = vmatpush2.bf16.msra.mxu0 0
      %747 = vmatprep.subr.bf16.mxu0 0
      %748 = vmatpush2.bf16.msra.mxu0 0
      %749 = vmatprep.mubr.bf16.mxu0 0
      %750 = vmatmul.mubr.bf16.gmra.mxu0 %v654
      %v751 = vpop.f32.mrf.mxu0
      %v752 = vadd.f32 0.0, %v751
      %v753 = vpop.f32.mrf.mxu0
      %v754 = vpop.f32.mrf.mxu0
      %v755 = vadd.f32 0.0, %v754
      %v756 = vpop.f32.mrf.mxu0
      %757 = vmatprep.mubr.bf16.mxu0 0
      %758 = vmatmul.mubr.bf16.gmra.mxu0 %v657
      %v759 = vpop.f32.mrf.mxu0
      %v760 = vadd.f32 0.0, %v759
      %v761 = vpop.f32.mrf.mxu0
      %v762 = vpop.f32.mrf.mxu0
      %v763 = vpop.f32.mrf.mxu0
      %764 = vdwg.mxu0
      %v768 = vrot.slane %v752, 1
      %v769 = vrot.slane %v755, 1
      %v770 = vsel %vm332, %v768, %v769
      %v771 = vrot.slane %v760, 1
      %v772 = vsel %vm332, %v769, %v771
      %v775 = vadd.f32 %v706, %v770
      %v776 = vadd.f32 %v707, %v772
      %s777 = scalar_lea.vmem %s1, 64
      %v778 = vld [vmem:[%s777] sm:$0xf]
      %v779 = vld [vmem:[%s777 + $0x4] sm:$0xf]
      %v782 = vunpack.c.l.b16 %v778
      %v783 = vunpack.c.l.b16 %v779
      %v784 = vpack.c.b16 %v783, %v782
      %786 = vmatprep.subr.bf16.mxu0 0
      %787 = vmatpush1.bf16.msra.mxu0 0
      %788 = vmatprep.subr.bf16.mxu0 0
      %789 = vmatpush1.bf16.msra.mxu0 0
      %790 = vmatprep.subr.bf16.mxu0 0
      %791 = vmatpush1.bf16.msra.mxu0 0
      %792 = vmatprep.subr.bf16.mxu0 0
      %793 = vmatpush1.bf16.msra.mxu0 0
      %794 = vmatprep.subr.bf16.mxu0 0
      %795 = vmatpush1.bf16.msra.mxu0 0
      %796 = vmatprep.subr.bf16.mxu0 0
      %797 = vmatpush1.bf16.msra.mxu0 0
      %798 = vmatprep.subr.bf16.mxu0 0
      %799 = vmatpush1.bf16.msra.mxu0 0
      %800 = vmatprep.subr.bf16.mxu0 0
      %801 = vmatpush1.bf16.msra.mxu0 %v784
      %802 = vmatprep.subr.bf16.mxu0 0
      %803 = vmatpush2.bf16.msra.mxu0 0
      %804 = vmatprep.subr.bf16.mxu0 0
      %805 = vmatpush2.bf16.msra.mxu0 0
      %806 = vmatprep.subr.bf16.mxu0 0
      %807 = vmatpush2.bf16.msra.mxu0 0
      %808 = vmatprep.subr.bf16.mxu0 0
      %809 = vmatpush2.bf16.msra.mxu0 0
      %810 = vmatprep.subr.bf16.mxu0 0
      %811 = vmatpush2.bf16.msra.mxu0 0
      %812 = vmatprep.subr.bf16.mxu0 0
      %813 = vmatpush2.bf16.msra.mxu0 0
      %814 = vmatprep.subr.bf16.mxu0 0
      %815 = vmatpush2.bf16.msra.mxu0 0
      %816 = vmatprep.subr.bf16.mxu0 0
      %817 = vmatpush2.bf16.msra.mxu0 0
      %818 = vmatprep.mubr.bf16.mxu0 0
      %819 = vmatmul.mubr.bf16.gmra.mxu0 %v654
      %v820 = vpop.f32.mrf.mxu0
      %v821 = vadd.f32 0.0, %v820
      %v822 = vpop.f32.mrf.mxu0
      %v823 = vpop.f32.mrf.mxu0
      %v824 = vadd.f32 0.0, %v823
      %v825 = vpop.f32.mrf.mxu0
      %826 = vmatprep.mubr.bf16.mxu0 0
      %827 = vmatmul.mubr.bf16.gmra.mxu0 %v657
      %v828 = vpop.f32.mrf.mxu0
      %v829 = vadd.f32 0.0, %v828
      %v830 = vpop.f32.mrf.mxu0
      %v831 = vpop.f32.mrf.mxu0
      %v832 = vpop.f32.mrf.mxu0
      %833 = vdwg.mxu0
      %v837 = vrot.slane %v821, 2
      %v838 = vrot.slane %v824, 2
      %v839 = vsel %vm402, %v837, %v838
      %v840 = vrot.slane %v829, 2
      %v841 = vsel %vm402, %v838, %v840
      %v844 = vadd.f32 %v775, %v839
      %v845 = vadd.f32 %v776, %v841
      %v846 = vld [vmem:[%s2] sm:$0x1]
      %v848 = vlaneseq
      %v849 = vshrl.u32 %v848, 7
      %v850 = vsub.s32 0, %v849
      %v851 = vrot.slane %v846, %v850
      %v853 = vadd.f32 %v844, %v851
      %v854 = vadd.f32 %v845, %v851
      %v855 = vtanh.pop %v853
      %v856 = vtanh.pop %v854
      %vm857 = vcmask 64512
      %858 = vst.msk [vmem:[%s192] sm:$0xff] %vm857, %v855
      %859 = vst.msk [vmem:[%s192 + $0x8] sm:$0xff] %vm857, %v856
      %p860 = scmp.lt.s32.totalorder %s18, 1
      %s861 = scalar_select %p860, %s18, 1
      %p862 = scmp.lt.s32.totalorder %s19, 15
      %s863 = scalar_select %p862, %s19, 15
      %s864 = smul.addr %s863, 2
      %s865 = smul.addr %s861, 32
      %s866 = sadd.s32 %s864, %s865
      %s867 = smul.addr %s866, 8
      %s868 = scalar_lea.vmem %s3, %s867
      // Predicated region
      $region33: #{depth_model_forward.19} parent=31 // pred_check
        %p869 = pneg %p114
      $region34: #{depth_model_forward.19} parent=31 // pred_check_branch
        %871 = sbr.rel (%p869) target = $region36
      $region35: #{depth_model_forward.19} parent=31 // pred_region
        _
      $region36: #{depth_model_forward.19} parent=31 // pred_fallthru
        _
    $region32: #{depth_model_forward.19} parent=5 // pred_fallthru
      _
    %p872 = scmp.le.s32.totalorder 2, %s9
    // Predicated region
    $region37: #{depth_model_forward.19} parent=5 // pred_check
      %p873 = pneg %p872
    $region38: #{depth_model_forward.19} parent=5 // pred_check_branch
      %875 = sbr.rel (%p873) target = $region40
    $region39: #{depth_model_forward.19} parent=5 // pred_region
      %s876 = ssub.s32 %s9, 2
      // Predicated region
      $region41: #{depth_model_forward.19} parent=39 // pred_check
        %p877 = pneg %p120
      $region42: #{depth_model_forward.19} parent=39 // pred_check_branch
        %879 = sbr.rel (%p877) target = $region44
      $region43: #{depth_model_forward.19} parent=39 // pred_region
        %p880 = scmp.lt.s32.totalorder %s20, 1
        %s881 = scalar_select %p880, %s20, 1
        %p882 = scmp.lt.s32.totalorder %s21, 15
        %s883 = scalar_select %p882, %s21, 15
        %s884 = smul.addr %s883, 2
        %s885 = smul.addr %s881, 32
        %s886 = sadd.s32 %s884, %s885
        %s887 = smul.addr %s886, 8
        %s888 = scalar_lea.vmem %s3, %s887
      $region44: #{depth_model_forward.19} parent=39 // pred_fallthru
        _
    $region40: #{depth_model_forward.19} parent=5 // pred_fallthru
      _
  $region6: #{depth_model_forward.19} parent=0 // loop_footer
    %s13 = sadd.s32 1, %s9
  $region7: #{depth_model_forward.19} parent=0 // loop_footer_branch
    %8 = sbr.rel target = $region3
  $region8: #{depth_model_forward.19} parent=0 // loop_exit
    _

</llo_original>
